<compile_context>
chip_gen: v6e
topology: v6e:2x2x1
jax: 0.10.0
libtpu: 0.0.40
codegen_flags: <defaults>
</compile_context>

<pallas_src>
import math
from functools import partial

import jax
import jax.numpy as jnp
from jax.experimental import pallas as pl
from jax.experimental.pallas import tpu as pltpu

LN_EPS = 1e-6

DATASET_WEIGHTS = {
    'iemocap': [0.4, 0.3, 0.3],
    'smg': [0.5, 0.5],
    'imigue': [0.5, 0.5],
}

MODALITY_CFG = {
    # mirrors EmotionBindModel._create_modality_trunks / heads / postprocessors
    'vision': dict(num_blocks=4, num_heads=4, pre_ln=True, add_bias_kv=False,
                   logit_scale=1.0),
    'text': dict(num_blocks=2, num_heads=4, pre_ln=False, add_bias_kv=False,
                 logit_scale=min(1.0 / 0.07, 100.0)),   # LearnableLogitScaling init
    'audio': dict(num_blocks=2, num_heads=4, pre_ln=False, add_bias_kv=True,
                  logit_scale=20.0),                    # fixed logit_scale_init=20
    'faces': dict(num_blocks=4, num_heads=4, pre_ln=False, add_bias_kv=True,
                  logit_scale=1.0),
}


# --------------------------- in-kernel helpers ---------------------------

def _layernorm(x, w, b):
    mu = jnp.mean(x, axis=-1, keepdims=True)
    var = jnp.mean((x - mu) ** 2, axis=-1, keepdims=True)
    return (x - mu) * jax.lax.rsqrt(var + LN_EPS) * w + b


def _gelu(x):
    # TODO(synk): PyTorch nn.GELU default is the exact erf form; tanh approximation
    # is used here for a Mosaic-safe elementwise lowering.
    c = math.sqrt(2.0 / math.pi)
    return 0.5 * x * (1.0 + jnp.tanh(c * (x + 0.044715 * x * x * x)))


# --------------------------- fused trunk kernel ---------------------------

def _trunk_kernel(x_ref, plw, plb,
                  ln1w, ln1b, wqkv, bqkv, bias_k, bias_v, wo, bo,
                  ln2w, ln2b, w1, b1, w2, b2,
                  hlnw, hlnb, hw,
                  o_ref,
                  act, attn_scr, k_scr, v_scr,
                  *, num_heads, use_bias_kv, use_pre_ln, logit_scale, tok_idx):
    blk = pl.program_id(1)
    nblk = pl.num_programs(1)

    TB, L, D = act.shape
    H = num_heads
    hd = D // H
    Lkv = L + 1 if use_bias_kv else L          # K/V length incl. optional bias token
    Lkp = k_scr.shape[1]                       # padded to a multiple of 8 sublanes
    need_mask = use_bias_kv and (Lkp > Lkv)

    # ---- first block step: load input (+ optional pre-transformer LayerNorm) ----
    @pl.when(blk == 0)
    def _():
        x0 = x_ref[...]
        if use_pre_ln:
            x0 = _layernorm(x0, plw[...], plb[...])
        act[...] = x0
        if need_mask:
            # zero padded K/V rows once; they are masked before the softmax
            k_scr[...] = jnp.zeros_like(k_scr)
            v_scr[...] = jnp.zeros_like(v_scr)

    x = act[...]                               # (TB, L, D) f32, resident in VMEM

    # ---- MultiheadAttention (bias=True, optional add_bias_kv), pre-LN ----
    xn = _layernorm(x, ln1w[0], ln1b[0])
    # batch folded into matmul rows; 1/sqrt(head_dim) pre-folded into Q columns
    qkv = jnp.dot(xn.reshape(TB * L, D).astype(jnp.bfloat16), wqkv[0],
                  preferred_element_type=jnp.float32) + bqkv[0]
    q3 = qkv[:, 0 * D:1 * D].reshape(TB, L, D)
    k3 = qkv[:, 1 * D:2 * D].reshape(TB, L, D)
    v3 = qkv[:, 2 * D:3 * D].reshape(TB, L, D)

    if use_bias_kv:
        # K/V go through an 8-sublane-aligned scratch (no ragged concatenate)
        k_scr[:, 0:L, :] = k3
        v_scr[:, 0:L, :] = v3
        k_scr[:, L:L + 1, :] = jnp.broadcast_to(bias_k[0], (TB, 1, D))
        v_scr[:, L:L + 1, :] = jnp.broadcast_to(bias_v[0], (TB, 1, D))
        kk = k_scr[...].astype(jnp.bfloat16)
        vv = v_scr[...].astype(jnp.bfloat16)
    else:
        kk = k3.astype(jnp.bfloat16)
        vv = v3.astype(jnp.bfloat16)
    qb = q3.astype(jnp.bfloat16)

    if need_mask:
        kidx = jax.lax.broadcasted_iota(jnp.int32, (1, 1, Lkp), 2)
        neg = jnp.where(kidx < Lkv, 0.0, -1e30).astype(jnp.float32)
    else:
        neg = None

    # static unroll over heads; each head's P@V lands at a static column offset of
    # a VMEM scratch (no concatenate, bounded live ranges).
    for h in range(H):
        sl = slice(h * hd, (h + 1) * hd)
        s = jnp.einsum('bqd,bkd->bqk', qb[:, :, sl], kk[:, :, sl],
                       preferred_element_type=jnp.float32)
        if neg is not None:
            s = s + neg
        m = jnp.max(s, axis=-1, keepdims=True)
        e = jnp.exp(s - m)
        p = e * pl.reciprocal(jnp.sum(e, axis=-1, keepdims=True), approx=True)
        attn_scr[:, :, sl] = jnp.einsum('bqk,bkd->bqd', p.astype(jnp.bfloat16),
                                        vv[:, :, sl],
                                        preferred_element_type=jnp.float32)

    attn = jnp.dot(attn_scr[...].reshape(TB * L, D).astype(jnp.bfloat16), wo[0],
                   preferred_element_type=jnp.float32) + bo[0]
    x = x + attn.reshape(TB, L, D)

    # ---- MLP (Linear -> GELU -> Linear), pre-LN ----
    xn2 = _layernorm(x, ln2w[0], ln2b[0])
    hmid = _gelu(jnp.dot(xn2.reshape(TB * L, D).astype(jnp.bfloat16), w1[0],
                         preferred_element_type=jnp.float32) + b1[0])
    y = jnp.dot(hmid.astype(jnp.bfloat16), w2[0],
                preferred_element_type=jnp.float32) + b2[0]
    x = x + y.reshape(TB, L, D)
    act[...] = x

    # ---- last block step: head (LN -> Linear no-bias) + L2 normalize + logit scale ----
    @pl.when(blk == nblk - 1)
    def _():
        tok = x[:, tok_idx, :]                                   # (TB, D)
        tn = _layernorm(tok, hlnw[...], hlnb[...])
        yo = jnp.dot(tn.astype(jnp.bfloat16), hw[...],
                     preferred_element_type=jnp.float32)
        nsq = jnp.sum(yo * yo, axis=-1, keepdims=True)           # F.normalize(p=2,eps=1e-12)
        o_ref[...] = yo * jax.lax.rsqrt(jnp.maximum(nsq, 1e-24)) * logit_scale


# --------------------------- pallas_call wrapper ---------------------------

def fused_trunk(x, tp, *, num_heads, use_bias_kv, use_pre_ln, logit_scale, tok_idx):
    B, L, D = x.shape
    NB = tp['wqkv'].shape[0]
    out_dim = tp['head_w'].shape[1]

    TB = B                                   # fold the whole batch into the matmul rows
    num_b_tiles = B // TB
    Lkv = L + (1 if use_bias_kv else 0)
    Lkp = ((Lkv + 7) // 8) * 8               # 8-sublane-aligned K/V length

    def const_spec(arr):
        nd = arr.ndim
        return pl.BlockSpec(arr.shape, lambda bi, blk: (0,) * nd)

    def block_spec(arr):
        nd = arr.ndim
        return pl.BlockSpec((1,) + arr.shape[1:],
                            lambda bi, blk: (blk,) + (0,) * (nd - 1))

    per_block = (tp['ln1_w'], tp['ln1_b'], tp['wqkv'], tp['bqkv'],
                 tp['bias_k'], tp['bias_v'], tp['wo'], tp['bo'],
                 tp['ln2_w'], tp['ln2_b'], tp['w1'], tp['b1'], tp['w2'], tp['b2'])

    in_specs = ([pl.BlockSpec((TB, L, D), lambda bi, blk: (bi, 0, 0)),
                 const_spec(tp['pre_ln_w']), const_spec(tp['pre_ln_b'])]
                + [block_spec(w) for w in per_block]
                + [const_spec(tp['head_ln_w']), const_spec(tp['head_ln_b']),
                   const_spec(tp['head_w'])])

    kernel = partial(_trunk_kernel, num_heads=num_heads, use_bias_kv=use_bias_kv,
                     use_pre_ln=use_pre_ln, logit_scale=float(logit_scale),
                     tok_idx=int(tok_idx))

    return pl.pallas_call(
        kernel,
        out_shape=jax.ShapeDtypeStruct((B, out_dim), jnp.float32),
        grid=(num_b_tiles, NB),
        in_specs=in_specs,
        out_specs=pl.BlockSpec((TB, out_dim), lambda bi, blk: (bi, 0)),
        scratch_shapes=[
            pltpu.VMEM((TB, L, D), jnp.float32),     # resident activations (carried)
            pltpu.VMEM((TB, L, D), jnp.float32),     # attention output (per-head writes)
            pltpu.VMEM((TB, Lkp, D), jnp.float32),   # padded K (incl. bias_k token)
            pltpu.VMEM((TB, Lkp, D), jnp.float32),   # padded V (incl. bias_v token)
        ],
        compiler_params=pltpu.CompilerParams(
            dimension_semantics=("parallel", "arbitrary"),
            vmem_limit_bytes=64 * 1024 * 1024),
    )(x, tp['pre_ln_w'], tp['pre_ln_b'], *per_block,
      tp['head_ln_w'], tp['head_ln_b'], tp['head_w'])


# --------------------------- parameters ---------------------------

def _normal(key, shape, std=0.02):
    return std * jax.random.normal(key, shape, dtype=jnp.float32)


def init_trunk_params(key, cfg, D, out_dim):
    NB = cfg['num_blocks']
    hidden = 4 * D
    hd = D // cfg['num_heads']
    qscale = 1.0 / math.sqrt(hd)
    ks = jax.random.split(key, 7)

    wqkv = _normal(ks[0], (NB, D, 3 * D))                 # in_proj_weight.T (q,k,v cols)
    bqkv = jnp.zeros((NB, 1, 3 * D), jnp.float32)
    # fold the 1/sqrt(head_dim) attention scale into the Q projection (weights + bias)
    wqkv = wqkv.at[:, :, :D].multiply(qscale)
    bqkv = bqkv.at[:, :, :D].multiply(qscale)

    return dict(
        pre_ln_w=jnp.ones((1, D), jnp.float32),
        pre_ln_b=jnp.zeros((1, D), jnp.float32),
        ln1_w=jnp.ones((NB, 1, D), jnp.float32),
        ln1_b=jnp.zeros((NB, 1, D), jnp.float32),
        wqkv=wqkv.astype(jnp.bfloat16),
        bqkv=bqkv,
        bias_k=_normal(ks[1], (NB, 1, D)),                # add_bias_kv params
        bias_v=_normal(ks[2], (NB, 1, D)),
        wo=_normal(ks[3], (NB, D, D)).astype(jnp.bfloat16),     # out_proj.weight.T
        bo=jnp.zeros((NB, 1, D), jnp.float32),
        ln2_w=jnp.ones((NB, 1, D), jnp.float32),
        ln2_b=jnp.zeros((NB, 1, D), jnp.float32),
        w1=_normal(ks[4], (NB, D, hidden)).astype(jnp.bfloat16),
        b1=jnp.zeros((NB, 1, hidden), jnp.float32),
        w2=_normal(ks[5], (NB, hidden, D)).astype(jnp.bfloat16),
        b2=jnp.zeros((NB, 1, D), jnp.float32),
        head_ln_w=jnp.ones((1, D), jnp.float32),
        head_ln_b=jnp.zeros((1, D), jnp.float32),
        head_w=_normal(ks[6], (D, out_dim)).astype(jnp.bfloat16),  # Linear(D,out).weight.T
    )


def init_params(key, modalities, D, out_dim):
    params = {'modalities': {}}
    for name in modalities:
        key, k_m = jax.random.split(key)
        params['modalities'][name] = init_trunk_params(k_m, MODALITY_CFG[name], D, out_dim)
    key, k_vad = jax.random.split(key)
    # TODO(synk): ExactInvertibleVADProjection loads W from a .pt file; deterministic
    # random init of the same (out_embed_dim, 3) shape is used instead.
    params['vad_w'] = _normal(k_vad, (out_dim, 3), std=1.0 / math.sqrt(out_dim))
    return params


# --------------------------- forward ---------------------------

def emotionbind_forward(inputs, params, dataset_name):
    outputs = {}
    for name, x in inputs.items():
        if x is None:
            continue
        cfg = MODALITY_CFG[name]
        tp = params['modalities'][name]
        # TODO(synk): the ndim>=5 reduce_list branch of the reference forward is unused
        # for pre-embedded (B, L, D) inputs and is not replicated here.
        if name == 'text':
            tok_idx = max(x.shape[1] - 1, 0)   # SelectEOSAndProject (fixed EOS index L-1)
        else:
            tok_idx = 0                        # SelectElement(index=0)
        outputs[name] = fused_trunk(
            x, tp, num_heads=cfg['num_heads'], use_bias_kv=cfg['add_bias_kv'],
            use_pre_ln=cfg['pre_ln'], logit_scale=cfg['logit_scale'], tok_idx=tok_idx)

    # eval-mode tail (tiny): VAD inverse projection + dataset-weighted sum in plain XLA.
    wts = jnp.asarray(DATASET_WEIGHTS[dataset_name], dtype=jnp.float32)
    stacked = jnp.stack([outputs[k] for k in outputs], axis=0)           # (M, B, out)
    vad = jnp.clip(jnp.einsum('mbd,dk->mbk', stacked, params['vad_w']), -1.0, 1.0)
    vad_pred = jnp.sum(vad * wts[:, None, None], axis=0)                 # (B, 3)
    return outputs, vad_pred


# --------------------------- demo ---------------------------

if __name__ == "__main__":
    B, L, D, OUT = 2, 8, 32, 32
    modalities = ('vision', 'text', 'audio')   # 'iemocap' -> 3 dataset weights

    key = jax.random.PRNGKey(0)
    key, kp, kv, kt, ka = jax.random.split(key, 5)
    params = init_params(kp, modalities, D, OUT)
    inputs = {
        'vision': jax.random.normal(kv, (B, L, D), dtype=jnp.float32),
        'text': jax.random.normal(kt, (B, L, D), dtype=jnp.float32),
        'audio': jax.random.normal(ka, (B, L, D), dtype=jnp.float32),
    }

    outputs, vad_pred = emotionbind_forward(inputs, params, 'iemocap')
    for v in outputs.values():
        jax.block_until_ready(v)
    jax.block_until_ready(vad_pred)
    print("KERNEL_OK")
</pallas_src>

<mosaic_0001>
module attributes {stable_mosaic.version = 11 : i64} {
  func.func @_trunk_kernel(%arg0: i32, %arg1: i32, %arg2: memref<2x8x32xf32, #tpu.memory_space<vmem>>, %arg3: memref<1x32xf32, #tpu.memory_space<vmem>>, %arg4: memref<1x32xf32, #tpu.memory_space<vmem>>, %arg5: memref<1x1x32xf32, #tpu.memory_space<vmem>>, %arg6: memref<1x1x32xf32, #tpu.memory_space<vmem>>, %arg7: memref<1x32x96xbf16, #tpu.memory_space<vmem>>, %arg8: memref<1x1x96xf32, #tpu.memory_space<vmem>>, %arg9: memref<1x1x32xf32, #tpu.memory_space<vmem>>, %arg10: memref<1x1x32xf32, #tpu.memory_space<vmem>>, %arg11: memref<1x32x32xbf16, #tpu.memory_space<vmem>>, %arg12: memref<1x1x32xf32, #tpu.memory_space<vmem>>, %arg13: memref<1x1x32xf32, #tpu.memory_space<vmem>>, %arg14: memref<1x1x32xf32, #tpu.memory_space<vmem>>, %arg15: memref<1x32x128xbf16, #tpu.memory_space<vmem>>, %arg16: memref<1x1x128xf32, #tpu.memory_space<vmem>>, %arg17: memref<1x128x32xbf16, #tpu.memory_space<vmem>>, %arg18: memref<1x1x32xf32, #tpu.memory_space<vmem>>, %arg19: memref<1x32xf32, #tpu.memory_space<vmem>>, %arg20: memref<1x32xf32, #tpu.memory_space<vmem>>, %arg21: memref<32x32xbf16, #tpu.memory_space<vmem>>, %arg22: memref<2x32xf32, #tpu.memory_space<vmem>>, %arg23: memref<2x8x32xf32, #tpu.memory_space<vmem>>, %arg24: memref<2x8x32xf32, #tpu.memory_space<vmem>>, %arg25: memref<2x8x32xf32, #tpu.memory_space<vmem>>, %arg26: memref<2x8x32xf32, #tpu.memory_space<vmem>>) attributes {dimension_semantics = [#tpu.dimension_semantics<parallel>, #tpu.dimension_semantics<arbitrary>], iteration_bounds = array<i64: 1, 4>, scalar_prefetch = 0 : i64, scratch_operands = 4 : i64, tpu.core_type = #tpu.core_type<tc>, window_params = [{transform_indices = @transform_0, window_bounds = array<i64: 2, 8, 32>}, {pipeline_mode = #tpu.pipeline_mode<synchronous>, transform_indices = @transform_1, window_bounds = array<i64: 1, 32>}, {pipeline_mode = #tpu.pipeline_mode<synchronous>, transform_indices = @transform_2, window_bounds = array<i64: 1, 32>}, {transform_indices = @transform_3, window_bounds = array<i64: 1, 1, 32>}, {transform_indices = @transform_4, window_bounds = array<i64: 1, 1, 32>}, {transform_indices = @transform_5, window_bounds = array<i64: 1, 32, 96>}, {transform_indices = @transform_6, window_bounds = array<i64: 1, 1, 96>}, {transform_indices = @transform_7, window_bounds = array<i64: 1, 1, 32>}, {transform_indices = @transform_8, window_bounds = array<i64: 1, 1, 32>}, {transform_indices = @transform_9, window_bounds = array<i64: 1, 32, 32>}, {transform_indices = @transform_10, window_bounds = array<i64: 1, 1, 32>}, {transform_indices = @transform_11, window_bounds = array<i64: 1, 1, 32>}, {transform_indices = @transform_12, window_bounds = array<i64: 1, 1, 32>}, {transform_indices = @transform_13, window_bounds = array<i64: 1, 32, 128>}, {transform_indices = @transform_14, window_bounds = array<i64: 1, 1, 128>}, {transform_indices = @transform_15, window_bounds = array<i64: 1, 128, 32>}, {transform_indices = @transform_16, window_bounds = array<i64: 1, 1, 32>}, {pipeline_mode = #tpu.pipeline_mode<synchronous>, transform_indices = @transform_17, window_bounds = array<i64: 1, 32>}, {pipeline_mode = #tpu.pipeline_mode<synchronous>, transform_indices = @transform_18, window_bounds = array<i64: 1, 32>}, {pipeline_mode = #tpu.pipeline_mode<synchronous>, transform_indices = @transform_19, window_bounds = array<i64: 32, 32>}, {transform_indices = @transform_20, window_bounds = array<i64: 2, 32>}]} {
    %c0_i32 = arith.constant 0 : i32
    %0 = arith.cmpi eq, %arg1, %c0_i32 : i32
    %1 = arith.extui %0 : i1 to i32
    %c0_i32_0 = arith.constant 0 : i32
    %2 = arith.cmpi ne, %1, %c0_i32_0 : i32
    scf.if %2 {
      %c0_88 = arith.constant 0 : index
      %c0_89 = arith.constant 0 : index
      %c0_90 = arith.constant 0 : index
      %194 = vector.load %arg2[%c0_88, %c0_89, %c0_90] : memref<2x8x32xf32, #tpu.memory_space<vmem>>, vector<2x8x32xf32>
      %c0_91 = arith.constant 0 : index
      %c0_92 = arith.constant 0 : index
      %195 = vector.load %arg3[%c0_91, %c0_92] : memref<1x32xf32, #tpu.memory_space<vmem>>, vector<1x32xf32>
      %c0_93 = arith.constant 0 : index
      %c0_94 = arith.constant 0 : index
      %196 = vector.load %arg4[%c0_93, %c0_94] : memref<1x32xf32, #tpu.memory_space<vmem>>, vector<1x32xf32>
      %cst_95 = arith.constant dense<0.000000e+00> : vector<2x8xf32>
      %197 = vector.multi_reduction <add>, %194, %cst_95 [2] : vector<2x8x32xf32> to vector<2x8xf32>
      %198 = vector.shape_cast %197 : vector<2x8xf32> to vector<2x8x1xf32>
      %cst_96 = arith.constant 3.200000e+01 : f32
      %199 = vector.broadcast %cst_96 : f32 to vector<2x8x1xf32>
      %200 = arith.divf %198, %199 : vector<2x8x1xf32>
      %201 = vector.broadcast %200 : vector<2x8x1xf32> to vector<2x8x32xf32>
      %202 = arith.subf %194, %201 : vector<2x8x32xf32>
      %203 = arith.mulf %202, %202 : vector<2x8x32xf32>
      %cst_97 = arith.constant dense<0.000000e+00> : vector<2x8xf32>
      %204 = vector.multi_reduction <add>, %203, %cst_97 [2] : vector<2x8x32xf32> to vector<2x8xf32>
      %205 = vector.shape_cast %204 : vector<2x8xf32> to vector<2x8x1xf32>
      %cst_98 = arith.constant 3.200000e+01 : f32
      %206 = vector.broadcast %cst_98 : f32 to vector<2x8x1xf32>
      %207 = arith.divf %205, %206 : vector<2x8x1xf32>
      %208 = vector.broadcast %200 : vector<2x8x1xf32> to vector<2x8x32xf32>
      %209 = arith.subf %194, %208 : vector<2x8x32xf32>
      %cst_99 = arith.constant 9.99999997E-7 : f32
      %210 = vector.broadcast %cst_99 : f32 to vector<2x8x1xf32>
      %211 = arith.addf %207, %210 : vector<2x8x1xf32>
      %212 = math.rsqrt %211 : vector<2x8x1xf32>
      %213 = vector.broadcast %212 : vector<2x8x1xf32> to vector<2x8x32xf32>
      %214 = arith.mulf %209, %213 : vector<2x8x32xf32>
      %215 = vector.shape_cast %195 : vector<1x32xf32> to vector<1x1x32xf32>
      %216 = vector.broadcast %215 : vector<1x1x32xf32> to vector<2x8x32xf32>
      %217 = arith.mulf %214, %216 : vector<2x8x32xf32>
      %218 = vector.shape_cast %196 : vector<1x32xf32> to vector<1x1x32xf32>
      %219 = vector.broadcast %218 : vector<1x1x32xf32> to vector<2x8x32xf32>
      %220 = arith.addf %217, %219 : vector<2x8x32xf32>
      %c0_100 = arith.constant 0 : index
      %c0_101 = arith.constant 0 : index
      %c0_102 = arith.constant 0 : index
      %221 = vector.load %arg23[%c0_100, %c0_101, %c0_102] : memref<2x8x32xf32, #tpu.memory_space<vmem>>, vector<2x8x32xf32>
      tpu.vector_store %arg23[%c0_100, %c0_101, %c0_102], %220 {strides = array<i32>} : memref<2x8x32xf32, #tpu.memory_space<vmem>>, vector<2x8x32xf32>,
    } else {
    }
    %c0 = arith.constant 0 : index
    %c0_1 = arith.constant 0 : index
    %c0_2 = arith.constant 0 : index
    %3 = vector.load %arg23[%c0, %c0_1, %c0_2] : memref<2x8x32xf32, #tpu.memory_space<vmem>>, vector<2x8x32xf32>
    %c0_3 = arith.constant 0 : index
    %c0_4 = arith.constant 0 : index
    %c0_5 = arith.constant 0 : index
    %4 = vector.load %arg5[%c0_3, %c0_4, %c0_5] : memref<1x1x32xf32, #tpu.memory_space<vmem>>, vector<1x1x32xf32>
    %5 = vector.shape_cast %4 : vector<1x1x32xf32> to vector<1x32xf32>
    %c0_6 = arith.constant 0 : index
    %c0_7 = arith.constant 0 : index
    %c0_8 = arith.constant 0 : index
    %6 = vector.load %arg6[%c0_6, %c0_7, %c0_8] : memref<1x1x32xf32, #tpu.memory_space<vmem>>, vector<1x1x32xf32>
    %7 = vector.shape_cast %6 : vector<1x1x32xf32> to vector<1x32xf32>
    %cst = arith.constant dense<0.000000e+00> : vector<2x8xf32>
    %8 = vector.multi_reduction <add>, %3, %cst [2] : vector<2x8x32xf32> to vector<2x8xf32>
    %9 = vector.shape_cast %8 : vector<2x8xf32> to vector<2x8x1xf32>
    %cst_9 = arith.constant 3.200000e+01 : f32
    %10 = vector.broadcast %cst_9 : f32 to vector<2x8x1xf32>
    %11 = arith.divf %9, %10 : vector<2x8x1xf32>
    %12 = vector.broadcast %11 : vector<2x8x1xf32> to vector<2x8x32xf32>
    %13 = arith.subf %3, %12 : vector<2x8x32xf32>
    %14 = arith.mulf %13, %13 : vector<2x8x32xf32>
    %cst_10 = arith.constant dense<0.000000e+00> : vector<2x8xf32>
    %15 = vector.multi_reduction <add>, %14, %cst_10 [2] : vector<2x8x32xf32> to vector<2x8xf32>
    %16 = vector.shape_cast %15 : vector<2x8xf32> to vector<2x8x1xf32>
    %cst_11 = arith.constant 3.200000e+01 : f32
    %17 = vector.broadcast %cst_11 : f32 to vector<2x8x1xf32>
    %18 = arith.divf %16, %17 : vector<2x8x1xf32>
    %19 = vector.broadcast %11 : vector<2x8x1xf32> to vector<2x8x32xf32>
    %20 = arith.subf %3, %19 : vector<2x8x32xf32>
    %cst_12 = arith.constant 9.99999997E-7 : f32
    %21 = vector.broadcast %cst_12 : f32 to vector<2x8x1xf32>
    %22 = arith.addf %18, %21 : vector<2x8x1xf32>
    %23 = math.rsqrt %22 : vector<2x8x1xf32>
    %24 = vector.broadcast %23 : vector<2x8x1xf32> to vector<2x8x32xf32>
    %25 = arith.mulf %20, %24 : vector<2x8x32xf32>
    %26 = vector.shape_cast %5 : vector<1x32xf32> to vector<1x1x32xf32>
    %27 = vector.broadcast %26 : vector<1x1x32xf32> to vector<2x8x32xf32>
    %28 = arith.mulf %25, %27 : vector<2x8x32xf32>
    %29 = vector.shape_cast %7 : vector<1x32xf32> to vector<1x1x32xf32>
    %30 = vector.broadcast %29 : vector<1x1x32xf32> to vector<2x8x32xf32>
    %31 = arith.addf %28, %30 : vector<2x8x32xf32>
    %32 = vector.shape_cast %31 : vector<2x8x32xf32> to vector<16x32xf32>
    %33 = arith.truncf %32 : vector<16x32xf32> to vector<16x32xbf16>
    %c0_13 = arith.constant 0 : index
    %c0_14 = arith.constant 0 : index
    %c0_15 = arith.constant 0 : index
    %34 = vector.load %arg7[%c0_13, %c0_14, %c0_15] : memref<1x32x96xbf16, #tpu.memory_space<vmem>>, vector<1x32x96xbf16>
    %35 = vector.shape_cast %34 : vector<1x32x96xbf16> to vector<32x96xbf16>
    %cst_16 = arith.constant dense<0.000000e+00> : vector<16x96xf32>
    %36 = tpu.matmul %33, %35, %cst_16 {dimension_numbers = #tpu.dot_dimension_numbers<[1], [0], [0], [1], [0, 0, 1, 1], [], []>} : vector<16x32xbf16>, vector<32x96xbf16>, vector<16x96xf32> -> vector<16x96xf32>
    %c0_17 = arith.constant 0 : index
    %c0_18 = arith.constant 0 : index
    %c0_19 = arith.constant 0 : index
    %37 = vector.load %arg8[%c0_17, %c0_18, %c0_19] : memref<1x1x96xf32, #tpu.memory_space<vmem>>, vector<1x1x96xf32>
    %38 = vector.shape_cast %37 : vector<1x1x96xf32> to vector<1x96xf32>
    %39 = vector.broadcast %38 : vector<1x96xf32> to vector<16x96xf32>
    %40 = arith.addf %36, %39 : vector<16x96xf32>
    %41 = vector.extract_strided_slice %40 {offsets = [0, 0], sizes = [16, 32], strides = [1, 1]} : vector<16x96xf32> to vector<16x32xf32>
    %42 = vector.shape_cast %41 : vector<16x32xf32> to vector<2x8x32xf32>
    %43 = vector.extract_strided_slice %40 {offsets = [0, 32], sizes = [16, 32], strides = [1, 1]} : vector<16x96xf32> to vector<16x32xf32>
    %44 = vector.shape_cast %43 : vector<16x32xf32> to vector<2x8x32xf32>
    %45 = vector.extract_strided_slice %40 {offsets = [0, 64], sizes = [16, 32], strides = [1, 1]} : vector<16x96xf32> to vector<16x32xf32>
    %46 = vector.shape_cast %45 : vector<16x32xf32> to vector<2x8x32xf32>
    %47 = arith.truncf %44 : vector<2x8x32xf32> to vector<2x8x32xbf16>
    %48 = arith.truncf %46 : vector<2x8x32xf32> to vector<2x8x32xbf16>
    %49 = arith.truncf %42 : vector<2x8x32xf32> to vector<2x8x32xbf16>
    %50 = vector.extract_strided_slice %49 {offsets = [0, 0, 0], sizes = [2, 8, 8], strides = [1, 1, 1]} : vector<2x8x32xbf16> to vector<2x8x8xbf16>
    %51 = vector.extract_strided_slice %47 {offsets = [0, 0, 0], sizes = [2, 8, 8], strides = [1, 1, 1]} : vector<2x8x32xbf16> to vector<2x8x8xbf16>
    "tpu.trace_start"() <{level = 10 : i32, message = "bqd,bkd->bqk"}> : () -> ()
    %cst_20 = arith.constant dense<0.000000e+00> : vector<2x8x8xf32>
    %52 = tpu.matmul %50, %51, %cst_20 {dimension_numbers = #tpu.dot_dimension_numbers<[2], [2], [1], [1], [0, 0, 0, 1, 1, 1], [0], [0]>} : vector<2x8x8xbf16>, vector<2x8x8xbf16>, vector<2x8x8xf32> -> vector<2x8x8xf32>
    "tpu.trace_stop"() : () -> ()
    %cst_21 = arith.constant dense<0xFF800000> : vector<2x8xf32>
    %53 = vector.multi_reduction <maximumf>, %52, %cst_21 [2] : vector<2x8x8xf32> to vector<2x8xf32>
    %54 = vector.shape_cast %53 : vector<2x8xf32> to vector<2x8x1xf32>
    %55 = vector.broadcast %54 : vector<2x8x1xf32> to vector<2x8x8xf32>
    %56 = arith.subf %52, %55 : vector<2x8x8xf32>
    %57 = math.exp %56 : vector<2x8x8xf32>
    %cst_22 = arith.constant dense<0.000000e+00> : vector<2x8xf32>
    %58 = vector.multi_reduction <add>, %57, %cst_22 [2] : vector<2x8x8xf32> to vector<2x8xf32>
    %59 = vector.shape_cast %58 : vector<2x8xf32> to vector<2x8x1xf32>
    %60 = tpu.reciprocal %59 {approx = true} : vector<2x8x1xf32> -> vector<2x8x1xf32>
    %61 = vector.broadcast %60 : vector<2x8x1xf32> to vector<2x8x8xf32>
    %62 = arith.mulf %57, %61 : vector<2x8x8xf32>
    %63 = arith.truncf %62 : vector<2x8x8xf32> to vector<2x8x8xbf16>
    %64 = vector.extract_strided_slice %48 {offsets = [0, 0, 0], sizes = [2, 8, 8], strides = [1, 1, 1]} : vector<2x8x32xbf16> to vector<2x8x8xbf16>
    "tpu.trace_start"() <{level = 10 : i32, message = "bqk,bkd->bqd"}> : () -> ()
    %cst_23 = arith.constant dense<0.000000e+00> : vector<2x8x8xf32>
    %65 = tpu.matmul %63, %64, %cst_23 {dimension_numbers = #tpu.dot_dimension_numbers<[2], [1], [1], [2], [0, 0, 0, 1, 1, 2], [0], [0]>} : vector<2x8x8xbf16>, vector<2x8x8xbf16>, vector<2x8x8xf32> -> vector<2x8x8xf32>
    "tpu.trace_stop"() : () -> ()
    %c0_24 = arith.constant 0 : index
    %c0_25 = arith.constant 0 : index
    %c0_26 = arith.constant 0 : index
    %66 = vector.load %arg24[%c0_24, %c0_25, %c0_26] : memref<2x8x32xf32, #tpu.memory_space<vmem>>, vector<2x8x8xf32>
    tpu.vector_store %arg24[%c0_24, %c0_25, %c0_26], %65 {strides = array<i32>} : memref<2x8x32xf32, #tpu.memory_space<vmem>>, vector<2x8x8xf32>,
    %67 = vector.extract_strided_slice %49 {offsets = [0, 0, 8], sizes = [2, 8, 8], strides = [1, 1, 1]} : vector<2x8x32xbf16> to vector<2x8x8xbf16>
    %68 = vector.extract_strided_slice %47 {offsets = [0, 0, 8], sizes = [2, 8, 8], strides = [1, 1, 1]} : vector<2x8x32xbf16> to vector<2x8x8xbf16>
    "tpu.trace_start"() <{level = 10 : i32, message = "bqd,bkd->bqk"}> : () -> ()
    %cst_27 = arith.constant dense<0.000000e+00> : vector<2x8x8xf32>
    %69 = tpu.matmul %67, %68, %cst_27 {dimension_numbers = #tpu.dot_dimension_numbers<[2], [2], [1], [1], [0, 0, 0, 1, 1, 1], [0], [0]>} : vector<2x8x8xbf16>, vector<2x8x8xbf16>, vector<2x8x8xf32> -> vector<2x8x8xf32>
    "tpu.trace_stop"() : () -> ()
    %cst_28 = arith.constant dense<0xFF800000> : vector<2x8xf32>
    %70 = vector.multi_reduction <maximumf>, %69, %cst_28 [2] : vector<2x8x8xf32> to vector<2x8xf32>
    %71 = vector.shape_cast %70 : vector<2x8xf32> to vector<2x8x1xf32>
    %72 = vector.broadcast %71 : vector<2x8x1xf32> to vector<2x8x8xf32>
    %73 = arith.subf %69, %72 : vector<2x8x8xf32>
    %74 = math.exp %73 : vector<2x8x8xf32>
    %cst_29 = arith.constant dense<0.000000e+00> : vector<2x8xf32>
    %75 = vector.multi_reduction <add>, %74, %cst_29 [2] : vector<2x8x8xf32> to vector<2x8xf32>
    %76 = vector.shape_cast %75 : vector<2x8xf32> to vector<2x8x1xf32>
    %77 = tpu.reciprocal %76 {approx = true} : vector<2x8x1xf32> -> vector<2x8x1xf32>
    %78 = vector.broadcast %77 : vector<2x8x1xf32> to vector<2x8x8xf32>
    %79 = arith.mulf %74, %78 : vector<2x8x8xf32>
    %80 = arith.truncf %79 : vector<2x8x8xf32> to vector<2x8x8xbf16>
    %81 = vector.extract_strided_slice %48 {offsets = [0, 0, 8], sizes = [2, 8, 8], strides = [1, 1, 1]} : vector<2x8x32xbf16> to vector<2x8x8xbf16>
    "tpu.trace_start"() <{level = 10 : i32, message = "bqk,bkd->bqd"}> : () -> ()
    %cst_30 = arith.constant dense<0.000000e+00> : vector<2x8x8xf32>
    %82 = tpu.matmul %80, %81, %cst_30 {dimension_numbers = #tpu.dot_dimension_numbers<[2], [1], [1], [2], [0, 0, 0, 1, 1, 2], [0], [0]>} : vector<2x8x8xbf16>, vector<2x8x8xbf16>, vector<2x8x8xf32> -> vector<2x8x8xf32>
    "tpu.trace_stop"() : () -> ()
    %c0_31 = arith.constant 0 : index
    %c0_32 = arith.constant 0 : index
    %c8 = arith.constant 8 : index
    %83 = vector.load %arg24[%c0_31, %c0_32, %c8] : memref<2x8x32xf32, #tpu.memory_space<vmem>>, vector<2x8x8xf32>
    tpu.vector_store %arg24[%c0_31, %c0_32, %c8], %82 {strides = array<i32>} : memref<2x8x32xf32, #tpu.memory_space<vmem>>, vector<2x8x8xf32>,
    %84 = vector.extract_strided_slice %49 {offsets = [0, 0, 16], sizes = [2, 8, 8], strides = [1, 1, 1]} : vector<2x8x32xbf16> to vector<2x8x8xbf16>
    %85 = vector.extract_strided_slice %47 {offsets = [0, 0, 16], sizes = [2, 8, 8], strides = [1, 1, 1]} : vector<2x8x32xbf16> to vector<2x8x8xbf16>
    "tpu.trace_start"() <{level = 10 : i32, message = "bqd,bkd->bqk"}> : () -> ()
    %cst_33 = arith.constant dense<0.000000e+00> : vector<2x8x8xf32>
    %86 = tpu.matmul %84, %85, %cst_33 {dimension_numbers = #tpu.dot_dimension_numbers<[2], [2], [1], [1], [0, 0, 0, 1, 1, 1], [0], [0]>} : vector<2x8x8xbf16>, vector<2x8x8xbf16>, vector<2x8x8xf32> -> vector<2x8x8xf32>
    "tpu.trace_stop"() : () -> ()
    %cst_34 = arith.constant dense<0xFF800000> : vector<2x8xf32>
    %87 = vector.multi_reduction <maximumf>, %86, %cst_34 [2] : vector<2x8x8xf32> to vector<2x8xf32>
    %88 = vector.shape_cast %87 : vector<2x8xf32> to vector<2x8x1xf32>
    %89 = vector.broadcast %88 : vector<2x8x1xf32> to vector<2x8x8xf32>
    %90 = arith.subf %86, %89 : vector<2x8x8xf32>
    %91 = math.exp %90 : vector<2x8x8xf32>
    %cst_35 = arith.constant dense<0.000000e+00> : vector<2x8xf32>
    %92 = vector.multi_reduction <add>, %91, %cst_35 [2] : vector<2x8x8xf32> to vector<2x8xf32>
    %93 = vector.shape_cast %92 : vector<2x8xf32> to vector<2x8x1xf32>
    %94 = tpu.reciprocal %93 {approx = true} : vector<2x8x1xf32> -> vector<2x8x1xf32>
    %95 = vector.broadcast %94 : vector<2x8x1xf32> to vector<2x8x8xf32>
    %96 = arith.mulf %91, %95 : vector<2x8x8xf32>
    %97 = arith.truncf %96 : vector<2x8x8xf32> to vector<2x8x8xbf16>
    %98 = vector.extract_strided_slice %48 {offsets = [0, 0, 16], sizes = [2, 8, 8], strides = [1, 1, 1]} : vector<2x8x32xbf16> to vector<2x8x8xbf16>
    "tpu.trace_start"() <{level = 10 : i32, message = "bqk,bkd->bqd"}> : () -> ()
    %cst_36 = arith.constant dense<0.000000e+00> : vector<2x8x8xf32>
    %99 = tpu.matmul %97, %98, %cst_36 {dimension_numbers = #tpu.dot_dimension_numbers<[2], [1], [1], [2], [0, 0, 0, 1, 1, 2], [0], [0]>} : vector<2x8x8xbf16>, vector<2x8x8xbf16>, vector<2x8x8xf32> -> vector<2x8x8xf32>
    "tpu.trace_stop"() : () -> ()
    %c0_37 = arith.constant 0 : index
    %c0_38 = arith.constant 0 : index
    %c16 = arith.constant 16 : index
    %100 = vector.load %arg24[%c0_37, %c0_38, %c16] : memref<2x8x32xf32, #tpu.memory_space<vmem>>, vector<2x8x8xf32>
    tpu.vector_store %arg24[%c0_37, %c0_38, %c16], %99 {strides = array<i32>} : memref<2x8x32xf32, #tpu.memory_space<vmem>>, vector<2x8x8xf32>,
    %101 = vector.extract_strided_slice %49 {offsets = [0, 0, 24], sizes = [2, 8, 8], strides = [1, 1, 1]} : vector<2x8x32xbf16> to vector<2x8x8xbf16>
    %102 = vector.extract_strided_slice %47 {offsets = [0, 0, 24], sizes = [2, 8, 8], strides = [1, 1, 1]} : vector<2x8x32xbf16> to vector<2x8x8xbf16>
    "tpu.trace_start"() <{level = 10 : i32, message = "bqd,bkd->bqk"}> : () -> ()
    %cst_39 = arith.constant dense<0.000000e+00> : vector<2x8x8xf32>
    %103 = tpu.matmul %101, %102, %cst_39 {dimension_numbers = #tpu.dot_dimension_numbers<[2], [2], [1], [1], [0, 0, 0, 1, 1, 1], [0], [0]>} : vector<2x8x8xbf16>, vector<2x8x8xbf16>, vector<2x8x8xf32> -> vector<2x8x8xf32>
    "tpu.trace_stop"() : () -> ()
    %cst_40 = arith.constant dense<0xFF800000> : vector<2x8xf32>
    %104 = vector.multi_reduction <maximumf>, %103, %cst_40 [2] : vector<2x8x8xf32> to vector<2x8xf32>
    %105 = vector.shape_cast %104 : vector<2x8xf32> to vector<2x8x1xf32>
    %106 = vector.broadcast %105 : vector<2x8x1xf32> to vector<2x8x8xf32>
    %107 = arith.subf %103, %106 : vector<2x8x8xf32>
    %108 = math.exp %107 : vector<2x8x8xf32>
    %cst_41 = arith.constant dense<0.000000e+00> : vector<2x8xf32>
    %109 = vector.multi_reduction <add>, %108, %cst_41 [2] : vector<2x8x8xf32> to vector<2x8xf32>
    %110 = vector.shape_cast %109 : vector<2x8xf32> to vector<2x8x1xf32>
    %111 = tpu.reciprocal %110 {approx = true} : vector<2x8x1xf32> -> vector<2x8x1xf32>
    %112 = vector.broadcast %111 : vector<2x8x1xf32> to vector<2x8x8xf32>
    %113 = arith.mulf %108, %112 : vector<2x8x8xf32>
    %114 = arith.truncf %113 : vector<2x8x8xf32> to vector<2x8x8xbf16>
    %115 = vector.extract_strided_slice %48 {offsets = [0, 0, 24], sizes = [2, 8, 8], strides = [1, 1, 1]} : vector<2x8x32xbf16> to vector<2x8x8xbf16>
    "tpu.trace_start"() <{level = 10 : i32, message = "bqk,bkd->bqd"}> : () -> ()
    %cst_42 = arith.constant dense<0.000000e+00> : vector<2x8x8xf32>
    %116 = tpu.matmul %114, %115, %cst_42 {dimension_numbers = #tpu.dot_dimension_numbers<[2], [1], [1], [2], [0, 0, 0, 1, 1, 2], [0], [0]>} : vector<2x8x8xbf16>, vector<2x8x8xbf16>, vector<2x8x8xf32> -> vector<2x8x8xf32>
    "tpu.trace_stop"() : () -> ()
    %c0_43 = arith.constant 0 : index
    %c0_44 = arith.constant 0 : index
    %c24 = arith.constant 24 : index
    %117 = vector.load %arg24[%c0_43, %c0_44, %c24] : memref<2x8x32xf32, #tpu.memory_space<vmem>>, vector<2x8x8xf32>
    tpu.vector_store %arg24[%c0_43, %c0_44, %c24], %116 {strides = array<i32>} : memref<2x8x32xf32, #tpu.memory_space<vmem>>, vector<2x8x8xf32>,
    %c0_45 = arith.constant 0 : index
    %c0_46 = arith.constant 0 : index
    %c0_47 = arith.constant 0 : index
    %118 = vector.load %arg24[%c0_45, %c0_46, %c0_47] : memref<2x8x32xf32, #tpu.memory_space<vmem>>, vector<2x8x32xf32>
    %119 = vector.shape_cast %118 : vector<2x8x32xf32> to vector<16x32xf32>
    %120 = arith.truncf %119 : vector<16x32xf32> to vector<16x32xbf16>
    %c0_48 = arith.constant 0 : index
    %c0_49 = arith.constant 0 : index
    %c0_50 = arith.constant 0 : index
    %121 = vector.load %arg11[%c0_48, %c0_49, %c0_50] : memref<1x32x32xbf16, #tpu.memory_space<vmem>>, vector<1x32x32xbf16>
    %122 = vector.shape_cast %121 : vector<1x32x32xbf16> to vector<32x32xbf16>
    %cst_51 = arith.constant dense<0.000000e+00> : vector<16x32xf32>
    %123 = tpu.matmul %120, %122, %cst_51 {dimension_numbers = #tpu.dot_dimension_numbers<[1], [0], [0], [1], [0, 0, 1, 1], [], []>} : vector<16x32xbf16>, vector<32x32xbf16>, vector<16x32xf32> -> vector<16x32xf32>
    %c0_52 = arith.constant 0 : index
    %c0_53 = arith.constant 0 : index
    %c0_54 = arith.constant 0 : index
    %124 = vector.load %arg12[%c0_52, %c0_53, %c0_54] : memref<1x1x32xf32, #tpu.memory_space<vmem>>, vector<1x1x32xf32>
    %125 = vector.shape_cast %124 : vector<1x1x32xf32> to vector<1x32xf32>
    %126 = vector.broadcast %125 : vector<1x32xf32> to vector<16x32xf32>
    %127 = arith.addf %123, %126 : vector<16x32xf32>
    %128 = vector.shape_cast %127 : vector<16x32xf32> to vector<2x8x32xf32>
    %129 = arith.addf %3, %128 : vector<2x8x32xf32>
    %c0_55 = arith.constant 0 : index
    %c0_56 = arith.constant 0 : index
    %c0_57 = arith.constant 0 : index
    %130 = vector.load %arg13[%c0_55, %c0_56, %c0_57] : memref<1x1x32xf32, #tpu.memory_space<vmem>>, vector<1x1x32xf32>
    %131 = vector.shape_cast %130 : vector<1x1x32xf32> to vector<1x32xf32>
    %c0_58 = arith.constant 0 : index
    %c0_59 = arith.constant 0 : index
    %c0_60 = arith.constant 0 : index
    %132 = vector.load %arg14[%c0_58, %c0_59, %c0_60] : memref<1x1x32xf32, #tpu.memory_space<vmem>>, vector<1x1x32xf32>
    %133 = vector.shape_cast %132 : vector<1x1x32xf32> to vector<1x32xf32>
    %cst_61 = arith.constant dense<0.000000e+00> : vector<2x8xf32>
    %134 = vector.multi_reduction <add>, %129, %cst_61 [2] : vector<2x8x32xf32> to vector<2x8xf32>
    %135 = vector.shape_cast %134 : vector<2x8xf32> to vector<2x8x1xf32>
    %cst_62 = arith.constant 3.200000e+01 : f32
    %136 = vector.broadcast %cst_62 : f32 to vector<2x8x1xf32>
    %137 = arith.divf %135, %136 : vector<2x8x1xf32>
    %138 = vector.broadcast %137 : vector<2x8x1xf32> to vector<2x8x32xf32>
    %139 = arith.subf %129, %138 : vector<2x8x32xf32>
    %140 = arith.mulf %139, %139 : vector<2x8x32xf32>
    %cst_63 = arith.constant dense<0.000000e+00> : vector<2x8xf32>
    %141 = vector.multi_reduction <add>, %140, %cst_63 [2] : vector<2x8x32xf32> to vector<2x8xf32>
    %142 = vector.shape_cast %141 : vector<2x8xf32> to vector<2x8x1xf32>
    %cst_64 = arith.constant 3.200000e+01 : f32
    %143 = vector.broadcast %cst_64 : f32 to vector<2x8x1xf32>
    %144 = arith.divf %142, %143 : vector<2x8x1xf32>
    %145 = vector.broadcast %137 : vector<2x8x1xf32> to vector<2x8x32xf32>
    %146 = arith.subf %129, %145 : vector<2x8x32xf32>
    %cst_65 = arith.constant 9.99999997E-7 : f32
    %147 = vector.broadcast %cst_65 : f32 to vector<2x8x1xf32>
    %148 = arith.addf %144, %147 : vector<2x8x1xf32>
    %149 = math.rsqrt %148 : vector<2x8x1xf32>
    %150 = vector.broadcast %149 : vector<2x8x1xf32> to vector<2x8x32xf32>
    %151 = arith.mulf %146, %150 : vector<2x8x32xf32>
    %152 = vector.shape_cast %131 : vector<1x32xf32> to vector<1x1x32xf32>
    %153 = vector.broadcast %152 : vector<1x1x32xf32> to vector<2x8x32xf32>
    %154 = arith.mulf %151, %153 : vector<2x8x32xf32>
    %155 = vector.shape_cast %133 : vector<1x32xf32> to vector<1x1x32xf32>
    %156 = vector.broadcast %155 : vector<1x1x32xf32> to vector<2x8x32xf32>
    %157 = arith.addf %154, %156 : vector<2x8x32xf32>
    %158 = vector.shape_cast %157 : vector<2x8x32xf32> to vector<16x32xf32>
    %159 = arith.truncf %158 : vector<16x32xf32> to vector<16x32xbf16>
    %c0_66 = arith.constant 0 : index
    %c0_67 = arith.constant 0 : index
    %c0_68 = arith.constant 0 : index
    %160 = vector.load %arg15[%c0_66, %c0_67, %c0_68] : memref<1x32x128xbf16, #tpu.memory_space<vmem>>, vector<1x32x128xbf16>
    %161 = vector.shape_cast %160 : vector<1x32x128xbf16> to vector<32x128xbf16>
    %cst_69 = arith.constant dense<0.000000e+00> : vector<16x128xf32>
    %162 = tpu.matmul %159, %161, %cst_69 {dimension_numbers = #tpu.dot_dimension_numbers<[1], [0], [0], [1], [0, 0, 1, 1], [], []>} : vector<16x32xbf16>, vector<32x128xbf16>, vector<16x128xf32> -> vector<16x128xf32>
    %c0_70 = arith.constant 0 : index
    %c0_71 = arith.constant 0 : index
    %c0_72 = arith.constant 0 : index
    %163 = vector.load %arg16[%c0_70, %c0_71, %c0_72] : memref<1x1x128xf32, #tpu.memory_space<vmem>>, vector<1x1x128xf32>
    %164 = vector.shape_cast %163 : vector<1x1x128xf32> to vector<1x128xf32>
    %165 = vector.broadcast %164 : vector<1x128xf32> to vector<16x128xf32>
    %166 = arith.addf %162, %165 : vector<16x128xf32>
    %cst_73 = arith.constant 5.000000e-01 : f32
    %167 = vector.broadcast %cst_73 : f32 to vector<16x128xf32>
    %168 = arith.mulf %167, %166 : vector<16x128xf32>
    %cst_74 = arith.constant 4.471500e-02 : f32
    %169 = vector.broadcast %cst_74 : f32 to vector<16x128xf32>
    %170 = arith.mulf %169, %166 : vector<16x128xf32>
    %171 = arith.mulf %170, %166 : vector<16x128xf32>
    %172 = arith.mulf %171, %166 : vector<16x128xf32>
    %173 = arith.addf %166, %172 : vector<16x128xf32>
    %cst_75 = arith.constant 0.797884583 : f32
    %174 = vector.broadcast %cst_75 : f32 to vector<16x128xf32>
    %175 = arith.mulf %174, %173 : vector<16x128xf32>
    %176 = math.tanh %175 : vector<16x128xf32>
    %cst_76 = arith.constant 1.000000e+00 : f32
    %177 = vector.broadcast %cst_76 : f32 to vector<16x128xf32>
    %178 = arith.addf %177, %176 : vector<16x128xf32>
    %179 = arith.mulf %168, %178 : vector<16x128xf32>
    %180 = arith.truncf %179 : vector<16x128xf32> to vector<16x128xbf16>
    %c0_77 = arith.constant 0 : index
    %c0_78 = arith.constant 0 : index
    %c0_79 = arith.constant 0 : index
    %181 = vector.load %arg17[%c0_77, %c0_78, %c0_79] : memref<1x128x32xbf16, #tpu.memory_space<vmem>>, vector<1x128x32xbf16>
    %182 = vector.shape_cast %181 : vector<1x128x32xbf16> to vector<128x32xbf16>
    %cst_80 = arith.constant dense<0.000000e+00> : vector<16x32xf32>
    %183 = tpu.matmul %180, %182, %cst_80 {dimension_numbers = #tpu.dot_dimension_numbers<[1], [0], [0], [1], [0, 0, 1, 1], [], []>} : vector<16x128xbf16>, vector<128x32xbf16>, vector<16x32xf32> -> vector<16x32xf32>
    %c0_81 = arith.constant 0 : index
    %c0_82 = arith.constant 0 : index
    %c0_83 = arith.constant 0 : index
    %184 = vector.load %arg18[%c0_81, %c0_82, %c0_83] : memref<1x1x32xf32, #tpu.memory_space<vmem>>, vector<1x1x32xf32>
    %185 = vector.shape_cast %184 : vector<1x1x32xf32> to vector<1x32xf32>
    %186 = vector.broadcast %185 : vector<1x32xf32> to vector<16x32xf32>
    %187 = arith.addf %183, %186 : vector<16x32xf32>
    %188 = vector.shape_cast %187 : vector<16x32xf32> to vector<2x8x32xf32>
    %189 = arith.addf %129, %188 : vector<2x8x32xf32>
    %c0_84 = arith.constant 0 : index
    %c0_85 = arith.constant 0 : index
    %c0_86 = arith.constant 0 : index
    %190 = vector.load %arg23[%c0_84, %c0_85, %c0_86] : memref<2x8x32xf32, #tpu.memory_space<vmem>>, vector<2x8x32xf32>
    tpu.vector_store %arg23[%c0_84, %c0_85, %c0_86], %189 {strides = array<i32>} : memref<2x8x32xf32, #tpu.memory_space<vmem>>, vector<2x8x32xf32>,
    %c3_i32 = arith.constant 3 : i32
    %191 = arith.cmpi eq, %arg1, %c3_i32 : i32
    %192 = arith.extui %191 : i1 to i32
    %c0_i32_87 = arith.constant 0 : i32
    %193 = arith.cmpi ne, %192, %c0_i32_87 : i32
    scf.if %193 {
      %194 = vector.extract_strided_slice %189 {offsets = [0, 0, 0], sizes = [2, 1, 32], strides = [1, 1, 1]} : vector<2x8x32xf32> to vector<2x1x32xf32>
      %195 = vector.shape_cast %194 : vector<2x1x32xf32> to vector<2x32xf32>
      %c0_88 = arith.constant 0 : index
      %c0_89 = arith.constant 0 : index
      %196 = vector.load %arg19[%c0_88, %c0_89] : memref<1x32xf32, #tpu.memory_space<vmem>>, vector<1x32xf32>
      %c0_90 = arith.constant 0 : index
      %c0_91 = arith.constant 0 : index
      %197 = vector.load %arg20[%c0_90, %c0_91] : memref<1x32xf32, #tpu.memory_space<vmem>>, vector<1x32xf32>
      %cst_92 = arith.constant dense<0.000000e+00> : vector<2xf32>
      %198 = vector.multi_reduction <add>, %195, %cst_92 [1] : vector<2x32xf32> to vector<2xf32>
      %199 = vector.shape_cast %198 : vector<2xf32> to vector<2x1xf32>
      %cst_93 = arith.constant 3.200000e+01 : f32
      %200 = vector.broadcast %cst_93 : f32 to vector<2x1xf32>
      %201 = arith.divf %199, %200 : vector<2x1xf32>
      %202 = vector.broadcast %201 : vector<2x1xf32> to vector<2x32xf32>
      %203 = arith.subf %195, %202 : vector<2x32xf32>
      %204 = arith.mulf %203, %203 : vector<2x32xf32>
      %cst_94 = arith.constant dense<0.000000e+00> : vector<2xf32>
      %205 = vector.multi_reduction <add>, %204, %cst_94 [1] : vector<2x32xf32> to vector<2xf32>
      %206 = vector.shape_cast %205 : vector<2xf32> to vector<2x1xf32>
      %cst_95 = arith.constant 3.200000e+01 : f32
      %207 = vector.broadcast %cst_95 : f32 to vector<2x1xf32>
      %208 = arith.divf %206, %207 : vector<2x1xf32>
      %209 = vector.broadcast %201 : vector<2x1xf32> to vector<2x32xf32>
      %210 = arith.subf %195, %209 : vector<2x32xf32>
      %cst_96 = arith.constant 9.99999997E-7 : f32
      %211 = vector.broadcast %cst_96 : f32 to vector<2x1xf32>
      %212 = arith.addf %208, %211 : vector<2x1xf32>
      %213 = math.rsqrt %212 : vector<2x1xf32>
      %214 = vector.broadcast %213 : vector<2x1xf32> to vector<2x32xf32>
      %215 = arith.mulf %210, %214 : vector<2x32xf32>
      %216 = vector.broadcast %196 : vector<1x32xf32> to vector<2x32xf32>
      %217 = arith.mulf %215, %216 : vector<2x32xf32>
      %218 = vector.broadcast %197 : vector<1x32xf32> to vector<2x32xf32>
      %219 = arith.addf %217, %218 : vector<2x32xf32>
      %220 = arith.truncf %219 : vector<2x32xf32> to vector<2x32xbf16>
      %c0_97 = arith.constant 0 : index
      %c0_98 = arith.constant 0 : index
      %221 = vector.load %arg21[%c0_97, %c0_98] : memref<32x32xbf16, #tpu.memory_space<vmem>>, vector<32x32xbf16>
      %cst_99 = arith.constant dense<0.000000e+00> : vector<2x32xf32>
      %222 = tpu.matmul %220, %221, %cst_99 {dimension_numbers = #tpu.dot_dimension_numbers<[1], [0], [0], [1], [0, 0, 1, 1], [], []>} : vector<2x32xbf16>, vector<32x32xbf16>, vector<2x32xf32> -> vector<2x32xf32>
      %223 = arith.mulf %222, %222 : vector<2x32xf32>
      %cst_100 = arith.constant dense<0.000000e+00> : vector<2xf32>
      %224 = vector.multi_reduction <add>, %223, %cst_100 [1] : vector<2x32xf32> to vector<2xf32>
      %225 = vector.shape_cast %224 : vector<2xf32> to vector<2x1xf32>
      %cst_101 = arith.constant 1.000000e-24 : f32
      %226 = vector.broadcast %cst_101 : f32 to vector<2x1xf32>
      %227 = arith.maximumf %225, %226 : vector<2x1xf32>
      %228 = math.rsqrt %227 : vector<2x1xf32>
      %229 = vector.broadcast %228 : vector<2x1xf32> to vector<2x32xf32>
      %230 = arith.mulf %222, %229 : vector<2x32xf32>
      %cst_102 = arith.constant 1.000000e+00 : f32
      %231 = vector.broadcast %cst_102 : f32 to vector<2x32xf32>
      %232 = arith.mulf %230, %231 : vector<2x32xf32>
      %c0_103 = arith.constant 0 : index
      %c0_104 = arith.constant 0 : index
      %233 = vector.load %arg22[%c0_103, %c0_104] : memref<2x32xf32, #tpu.memory_space<vmem>>, vector<2x32xf32>
      tpu.vector_store %arg22[%c0_103, %c0_104], %232 {strides = array<i32>} : memref<2x32xf32, #tpu.memory_space<vmem>>, vector<2x32xf32>,
    } else {
    }
    return
  }
  func.func @transform_0(%arg0: i32, %arg1: i32) -> (i32, i32, i32) {
    %c0_i32 = arith.constant 0 : i32
    %c0_i32_0 = arith.constant 0 : i32
    %c0_i32_1 = arith.constant 0 : i32
    return %arg0, %c0_i32, %c0_i32_0 : i32, i32, i32
  }
  func.func @transform_1(%arg0: i32, %arg1: i32) -> (i32, i32) {
    %c0_i32 = arith.constant 0 : i32
    %c0_i32_0 = arith.constant 0 : i32
    %c0_i32_1 = arith.constant 0 : i32
    return %c0_i32, %c0_i32_0 : i32, i32
  }
  func.func @transform_2(%arg0: i32, %arg1: i32) -> (i32, i32) {
    %c0_i32 = arith.constant 0 : i32
    %c0_i32_0 = arith.constant 0 : i32
    %c0_i32_1 = arith.constant 0 : i32
    return %c0_i32, %c0_i32_0 : i32, i32
  }
  func.func @transform_3(%arg0: i32, %arg1: i32) -> (i32, i32, i32) {
    %c0_i32 = arith.constant 0 : i32
    %c0_i32_0 = arith.constant 0 : i32
    %c0_i32_1 = arith.constant 0 : i32
    return %arg1, %c0_i32, %c0_i32_0 : i32, i32, i32
  }
  func.func @transform_4(%arg0: i32, %arg1: i32) -> (i32, i32, i32) {
    %c0_i32 = arith.constant 0 : i32
    %c0_i32_0 = arith.constant 0 : i32
    %c0_i32_1 = arith.constant 0 : i32
    return %arg1, %c0_i32, %c0_i32_0 : i32, i32, i32
  }
  func.func @transform_5(%arg0: i32, %arg1: i32) -> (i32, i32, i32) {
    %c0_i32 = arith.constant 0 : i32
    %c0_i32_0 = arith.constant 0 : i32
    %c0_i32_1 = arith.constant 0 : i32
    return %arg1, %c0_i32, %c0_i32_0 : i32, i32, i32
  }
  func.func @transform_6(%arg0: i32, %arg1: i32) -> (i32, i32, i32) {
    %c0_i32 = arith.constant 0 : i32
    %c0_i32_0 = arith.constant 0 : i32
    %c0_i32_1 = arith.constant 0 : i32
    return %arg1, %c0_i32, %c0_i32_0 : i32, i32, i32
  }
  func.func @transform_7(%arg0: i32, %arg1: i32) -> (i32, i32, i32) {
    %c0_i32 = arith.constant 0 : i32
    %c0_i32_0 = arith.constant 0 : i32
    %c0_i32_1 = arith.constant 0 : i32
    return %arg1, %c0_i32, %c0_i32_0 : i32, i32, i32
  }
  func.func @transform_8(%arg0: i32, %arg1: i32) -> (i32, i32, i32) {
    %c0_i32 = arith.constant 0 : i32
    %c0_i32_0 = arith.constant 0 : i32
    %c0_i32_1 = arith.constant 0 : i32
    return %arg1, %c0_i32, %c0_i32_0 : i32, i32, i32
  }
  func.func @transform_9(%arg0: i32, %arg1: i32) -> (i32, i32, i32) {
    %c0_i32 = arith.constant 0 : i32
    %c0_i32_0 = arith.constant 0 : i32
    %c0_i32_1 = arith.constant 0 : i32
    return %arg1, %c0_i32, %c0_i32_0 : i32, i32, i32
  }
  func.func @transform_10(%arg0: i32, %arg1: i32) -> (i32, i32, i32) {
    %c0_i32 = arith.constant 0 : i32
    %c0_i32_0 = arith.constant 0 : i32
    %c0_i32_1 = arith.constant 0 : i32
    return %arg1, %c0_i32, %c0_i32_0 : i32, i32, i32
  }
  func.func @transform_11(%arg0: i32, %arg1: i32) -> (i32, i32, i32) {
    %c0_i32 = arith.constant 0 : i32
    %c0_i32_0 = arith.constant 0 : i32
    %c0_i32_1 = arith.constant 0 : i32
    return %arg1, %c0_i32, %c0_i32_0 : i32, i32, i32
  }
  func.func @transform_12(%arg0: i32, %arg1: i32) -> (i32, i32, i32) {
    %c0_i32 = arith.constant 0 : i32
    %c0_i32_0 = arith.constant 0 : i32
    %c0_i32_1 = arith.constant 0 : i32
    return %arg1, %c0_i32, %c0_i32_0 : i32, i32, i32
  }
  func.func @transform_13(%arg0: i32, %arg1: i32) -> (i32, i32, i32) {
    %c0_i32 = arith.constant 0 : i32
    %c0_i32_0 = arith.constant 0 : i32
    %c0_i32_1 = arith.constant 0 : i32
    return %arg1, %c0_i32, %c0_i32_0 : i32, i32, i32
  }
  func.func @transform_14(%arg0: i32, %arg1: i32) -> (i32, i32, i32) {
    %c0_i32 = arith.constant 0 : i32
    %c0_i32_0 = arith.constant 0 : i32
    %c0_i32_1 = arith.constant 0 : i32
    return %arg1, %c0_i32, %c0_i32_0 : i32, i32, i32
  }
  func.func @transform_15(%arg0: i32, %arg1: i32) -> (i32, i32, i32) {
    %c0_i32 = arith.constant 0 : i32
    %c0_i32_0 = arith.constant 0 : i32
    %c0_i32_1 = arith.constant 0 : i32
    return %arg1, %c0_i32, %c0_i32_0 : i32, i32, i32
  }
  func.func @transform_16(%arg0: i32, %arg1: i32) -> (i32, i32, i32) {
    %c0_i32 = arith.constant 0 : i32
    %c0_i32_0 = arith.constant 0 : i32
    %c0_i32_1 = arith.constant 0 : i32
    return %arg1, %c0_i32, %c0_i32_0 : i32, i32, i32
  }
  func.func @transform_17(%arg0: i32, %arg1: i32) -> (i32, i32) {
    %c0_i32 = arith.constant 0 : i32
    %c0_i32_0 = arith.constant 0 : i32
    %c0_i32_1 = arith.constant 0 : i32
    return %c0_i32, %c0_i32_0 : i32, i32
  }
  func.func @transform_18(%arg0: i32, %arg1: i32) -> (i32, i32) {
    %c0_i32 = arith.constant 0 : i32
    %c0_i32_0 = arith.constant 0 : i32
    %c0_i32_1 = arith.constant 0 : i32
    return %c0_i32, %c0_i32_0 : i32, i32
  }
  func.func @transform_19(%arg0: i32, %arg1: i32) -> (i32, i32) {
    %c0_i32 = arith.constant 0 : i32
    %c0_i32_0 = arith.constant 0 : i32
    %c0_i32_1 = arith.constant 0 : i32
    return %c0_i32, %c0_i32_0 : i32, i32
  }
  func.func @transform_20(%arg0: i32, %arg1: i32) -> (i32, i32) {
    %c0_i32 = arith.constant 0 : i32
    %c0_i32_0 = arith.constant 0 : i32
    return %arg0, %c0_i32 : i32, i32
  }
}

</mosaic_0001>

<llo_original>
// kernel: tpu_custom_call.1
$region0: #{tpu_custom_call.1}
  #allocation0 [shape = 'u32[]', space=smem, size = 0x4, offset = 0x4, fixed_abs, tag = 'smem constant byte address 0x4 - core index']
  #allocation1 [shape = 'u32[144,128]{1,0:T(1,128)}', space=vmem, size = 0x12000, scoped, tag = 'internal scratch']
  #allocation2 [shape = 'f32[2,8,32]{2,1,0:T(8,128)}', space=vmem, size = 0x2000, scoped, tag = 'scratch operand']
  #allocation3 [shape = 'f32[2,8,32]{2,1,0:T(8,128)}', space=vmem, size = 0x2000, scoped, tag = 'scratch operand']
  #allocation4 [shape = 'f32[2,8,32]{2,1,0:T(8,128)}', space=vmem, size = 0x2000, scoped, tag = 'scratch operand']
  #allocation5 [shape = 'f32[2,8,32]{2,1,0:T(8,128)}', space=vmem, size = 0x2000, scoped, tag = 'scratch operand']
  %s0 = inlined_call_operand.vmem [shape: f32[2,8,32], index: 0, kind: input, shape index: {}]
  %s1 = inlined_call_operand.vmem [shape: f32[1,32], index: 1, kind: input, shape index: {}]
  %s2 = inlined_call_operand.vmem [shape: f32[1,32], index: 2, kind: input, shape index: {}]
  %s3 = inlined_call_operand.vmem [shape: f32[4,1,32], index: 3, kind: input, shape index: {}]
  %s4 = inlined_call_operand.vmem [shape: f32[4,1,32], index: 4, kind: input, shape index: {}]
  %s5 = inlined_call_operand.vmem [shape: bf16[4,32,96], index: 5, kind: input, shape index: {}]
  %s6 = inlined_call_operand.vmem [shape: f32[4,1,96], index: 6, kind: input, shape index: {}]
  %s7 = inlined_call_operand.vmem [shape: f32[4,1,32], index: 7, kind: input, shape index: {}]
  %s8 = inlined_call_operand.vmem [shape: f32[4,1,32], index: 8, kind: input, shape index: {}]
  %s9 = inlined_call_operand.vmem [shape: bf16[4,32,32], index: 9, kind: input, shape index: {}]
  %s10 = inlined_call_operand.vmem [shape: f32[4,1,32], index: 10, kind: input, shape index: {}]
  %s11 = inlined_call_operand.vmem [shape: f32[4,1,32], index: 11, kind: input, shape index: {}]
  %s12 = inlined_call_operand.vmem [shape: f32[4,1,32], index: 12, kind: input, shape index: {}]
  %s13 = inlined_call_operand.vmem [shape: bf16[4,32,128], index: 13, kind: input, shape index: {}]
  %s14 = inlined_call_operand.vmem [shape: f32[4,1,128], index: 14, kind: input, shape index: {}]
  %s15 = inlined_call_operand.vmem [shape: bf16[4,128,32], index: 15, kind: input, shape index: {}]
  %s16 = inlined_call_operand.vmem [shape: f32[4,1,32], index: 16, kind: input, shape index: {}]
  %s17 = inlined_call_operand.vmem [shape: f32[1,32], index: 17, kind: input, shape index: {}]
  %s18 = inlined_call_operand.vmem [shape: f32[1,32], index: 18, kind: input, shape index: {}]
  %s19 = inlined_call_operand.vmem [shape: bf16[32,32], index: 19, kind: input, shape index: {}]
  %s20 = inlined_call_operand.hbm [shape: f32[2,32], index: 20, kind: output, shape index: {}]
  %s21 = sld [smem:[#allocation0]]
  $region121: #{tpu_custom_call.1} parent=0
    _
  %s23 = ssub.s32 1, %s21
  %s24 = scalar_select 0, %s23, %s21
  $region1: #{tpu_custom_call.1} parent=0
    #allocation6 [shape = 'u8[1024]{0}', space=vmem, size = 0x400, scoped, tag = 'output window, operand 0, single buffered']
    #allocation7 [shape = 's32[2]{0}', space=sflag, size = 0x8, scoped, tag = 'scoped memory for tpu_custom_call.1']
    %25 = vsyncpa [#allocation7], 0
    loop: start=0, step=1, limit=6
    $region2: #{tpu_custom_call.1} parent=1 // loop_pre_header
      _
    $region3: #{tpu_custom_call.1} parent=1 // loop_header
      %s27 = sphi 0, %s31
      %p28 = scmp.ge.s32.totalorder %s27, 6
      %s34 = sphi 0, %s46
      %s35 = sphi 0, %s42
      %s36 = sphi 0, %s34
      %s37 = sphi 0, %s35
      %s38 = sphi 0, %s36
      %s39 = sphi 0, %s37
      %s49 = sphi 0, %s51
      %s52 = sphi 0, %s49
      %s53 = sphi 0, %s52
      %s69 = sphi 0, %s53
      %s73 = sphi 0, %s73
      %s75 = sphi 0, %s73
      %s76 = sphi 0, %s75
      %s90 = sphi 0, %s76
      %s94 = sphi 0, %s94
      %s96 = sphi 0, %s94
      %s97 = sphi 0, %s96
      %s111 = sphi 0, %s97
      %s117 = sphi 0, %s119
      %s120 = sphi 0, %s117
      %s121 = sphi 0, %s120
      %s137 = sphi 0, %s121
      %s143 = sphi 0, %s145
      %s146 = sphi 0, %s143
      %s147 = sphi 0, %s146
      %s163 = sphi 0, %s147
      %s169 = sphi 0, %s171
      %s172 = sphi 0, %s169
      %s173 = sphi 0, %s172
      %s189 = sphi 0, %s173
      %s195 = sphi 0, %s197
      %s198 = sphi 0, %s195
      %s199 = sphi 0, %s198
      %s215 = sphi 0, %s199
      %s221 = sphi 0, %s223
      %s224 = sphi 0, %s221
      %s225 = sphi 0, %s224
      %s241 = sphi 0, %s225
      %s247 = sphi 0, %s249
      %s250 = sphi 0, %s247
      %s251 = sphi 0, %s250
      %s267 = sphi 0, %s251
      %s273 = sphi 0, %s275
      %s276 = sphi 0, %s273
      %s277 = sphi 0, %s276
      %s293 = sphi 0, %s277
      %s299 = sphi 0, %s301
      %s302 = sphi 0, %s299
      %s303 = sphi 0, %s302
      %s319 = sphi 0, %s303
      %s325 = sphi 0, %s327
      %s328 = sphi 0, %s325
      %s329 = sphi 0, %s328
      %s345 = sphi 0, %s329
      %s351 = sphi 0, %s353
      %s354 = sphi 0, %s351
      %s355 = sphi 0, %s354
      %s371 = sphi 0, %s355
      %s377 = sphi 0, %s379
      %s380 = sphi 0, %s377
      %s381 = sphi 0, %s380
      %s397 = sphi 0, %s381
      %s403 = sphi 0, %s405
      %s406 = sphi 0, %s403
      %s407 = sphi 0, %s406
      %s423 = sphi 0, %s407
      %s429 = sphi 0, %s431
      %s432 = sphi 0, %s429
      %s433 = sphi 0, %s432
      %s449 = sphi 0, %s433
      %s455 = sphi 0, %s457
      %s458 = sphi 0, %s455
      %s459 = sphi 0, %s458
      %s475 = sphi 0, %s459
      %s479 = sphi 0, %s479
      %s481 = sphi 0, %s479
      %s482 = sphi 0, %s481
      %s496 = sphi 0, %s482
      %s500 = sphi 0, %s500
      %s502 = sphi 0, %s500
      %s503 = sphi 0, %s502
      %s517 = sphi 0, %s503
      %s521 = sphi 0, %s521
      %s523 = sphi 0, %s521
      %s524 = sphi 0, %s523
      %s538 = sphi 0, %s524
      %s544 = sphi 0, %s546
      %s547 = sphi 0, %s544
      %s548 = sphi 0, %s547
      %s564 = sphi 0, %s548
    $region4: #{tpu_custom_call.1} parent=1 // loop_header_branch
      %30 = sbr.rel (%p28) target = $region8
    $region5: #{tpu_custom_call.1} parent=1 // loop_body
      %s32 = ssub.s32 %s27, 1
      %s33 = ssub.s32 %s27, 2
      %s40 = sadd.s32 1, %s35
      %p41 = scmp.ge.s32.totalorder %s40, 4
      %s42 = scalar_select %p41, 0, %s40
      %s43 = sadd.s32 1, %s34
      %s44 = scalar_select %p41, %s43, %s34
      %p45 = scmp.ge.s32.totalorder %s44, 1
      %s46 = scalar_select %p45, 0, %s44
      %s47 = ssub.s32 %s34, %s46
      %p48 = scmp.eq.s32.totalorder %s47, 0
      %s50 = sadd.s32 %s49, 1
      %s51 = scalar_select %p48, %s49, %s50
      %p54 = pneg %p48
      %p55 = scmp.eq.s32.totalorder %s27, 3
      %p56 = por %p54, %p55
      %p57 = scmp.ne.s32.totalorder %s49, %s52
      %p58 = scmp.eq.s32.totalorder %s27, 0
      %p59 = por %p57, %p58
      %p60 = scmp.ne.s32.totalorder %s49, %s52
      %p61 = scmp.eq.s32.totalorder %s32, 3
      %p62 = por %p60, %p61
      %p63 = scmp.ne.s32.totalorder %s52, %s53
      %p64 = scmp.eq.s32.totalorder %s32, 0
      %p65 = por %p63, %p64
      %p66 = scmp.ne.s32.totalorder %s52, %s53
      %p67 = scmp.eq.s32.totalorder %s33, 3
      %p68 = por %p66, %p67
      %p70 = scmp.ne.s32.totalorder %s53, %s69
      %p71 = scmp.eq.s32.totalorder %s33, 0
      %p72 = por %p70, %p71
      %s74 = sadd.s32 %s73, 1
      %p77 = scmp.eq.s32.totalorder %s27, 3
      %p78 = scmp.ne.s32.totalorder %s73, %s75
      %p79 = scmp.eq.s32.totalorder %s27, 0
      %p80 = por %p78, %p79
      %p81 = scmp.ne.s32.totalorder %s73, %s75
      %p82 = scmp.eq.s32.totalorder %s32, 3
      %p83 = por %p81, %p82
      %p84 = scmp.ne.s32.totalorder %s75, %s76
      %p85 = scmp.eq.s32.totalorder %s32, 0
      %p86 = por %p84, %p85
      %p87 = scmp.ne.s32.totalorder %s75, %s76
      %p88 = scmp.eq.s32.totalorder %s33, 3
      %p89 = por %p87, %p88
      %p91 = scmp.ne.s32.totalorder %s76, %s90
      %p92 = scmp.eq.s32.totalorder %s33, 0
      %p93 = por %p91, %p92
      %s95 = sadd.s32 %s94, 1
      %p98 = scmp.eq.s32.totalorder %s27, 3
      %p99 = scmp.ne.s32.totalorder %s94, %s96
      %p100 = scmp.eq.s32.totalorder %s27, 0
      %p101 = por %p99, %p100
      %p102 = scmp.ne.s32.totalorder %s94, %s96
      %p103 = scmp.eq.s32.totalorder %s32, 3
      %p104 = por %p102, %p103
      %p105 = scmp.ne.s32.totalorder %s96, %s97
      %p106 = scmp.eq.s32.totalorder %s32, 0
      %p107 = por %p105, %p106
      %p108 = scmp.ne.s32.totalorder %s96, %s97
      %p109 = scmp.eq.s32.totalorder %s33, 3
      %p110 = por %p108, %p109
      %p112 = scmp.ne.s32.totalorder %s97, %s111
      %p113 = scmp.eq.s32.totalorder %s33, 0
      %p114 = por %p112, %p113
      %s115 = ssub.s32 %s35, %s42
      %p116 = scmp.eq.s32.totalorder %s115, 0
      %s118 = sadd.s32 %s117, 1
      %s119 = scalar_select %p116, %s117, %s118
      %p122 = pneg %p116
      %p123 = scmp.eq.s32.totalorder %s27, 3
      %p124 = por %p122, %p123
      %p125 = scmp.ne.s32.totalorder %s117, %s120
      %p126 = scmp.eq.s32.totalorder %s27, 0
      %p127 = por %p125, %p126
      %p128 = scmp.ne.s32.totalorder %s117, %s120
      %p129 = scmp.eq.s32.totalorder %s32, 3
      %p130 = por %p128, %p129
      %p131 = scmp.ne.s32.totalorder %s120, %s121
      %p132 = scmp.eq.s32.totalorder %s32, 0
      %p133 = por %p131, %p132
      %p134 = scmp.ne.s32.totalorder %s120, %s121
      %p135 = scmp.eq.s32.totalorder %s33, 3
      %p136 = por %p134, %p135
      %p138 = scmp.ne.s32.totalorder %s121, %s137
      %p139 = scmp.eq.s32.totalorder %s33, 0
      %p140 = por %p138, %p139
      %s141 = ssub.s32 %s35, %s42
      %p142 = scmp.eq.s32.totalorder %s141, 0
      %s144 = sadd.s32 %s143, 1
      %s145 = scalar_select %p142, %s143, %s144
      %p148 = pneg %p142
      %p149 = scmp.eq.s32.totalorder %s27, 3
      %p150 = por %p148, %p149
      %p151 = scmp.ne.s32.totalorder %s143, %s146
      %p152 = scmp.eq.s32.totalorder %s27, 0
      %p153 = por %p151, %p152
      %p154 = scmp.ne.s32.totalorder %s143, %s146
      %p155 = scmp.eq.s32.totalorder %s32, 3
      %p156 = por %p154, %p155
      %p157 = scmp.ne.s32.totalorder %s146, %s147
      %p158 = scmp.eq.s32.totalorder %s32, 0
      %p159 = por %p157, %p158
      %p160 = scmp.ne.s32.totalorder %s146, %s147
      %p161 = scmp.eq.s32.totalorder %s33, 3
      %p162 = por %p160, %p161
      %p164 = scmp.ne.s32.totalorder %s147, %s163
      %p165 = scmp.eq.s32.totalorder %s33, 0
      %p166 = por %p164, %p165
      %s167 = ssub.s32 %s35, %s42
      %p168 = scmp.eq.s32.totalorder %s167, 0
      %s170 = sadd.s32 %s169, 1
      %s171 = scalar_select %p168, %s169, %s170
      %p174 = pneg %p168
      %p175 = scmp.eq.s32.totalorder %s27, 3
      %p176 = por %p174, %p175
      %p177 = scmp.ne.s32.totalorder %s169, %s172
      %p178 = scmp.eq.s32.totalorder %s27, 0
      %p179 = por %p177, %p178
      %p180 = scmp.ne.s32.totalorder %s169, %s172
      %p181 = scmp.eq.s32.totalorder %s32, 3
      %p182 = por %p180, %p181
      %p183 = scmp.ne.s32.totalorder %s172, %s173
      %p184 = scmp.eq.s32.totalorder %s32, 0
      %p185 = por %p183, %p184
      %p186 = scmp.ne.s32.totalorder %s172, %s173
      %p187 = scmp.eq.s32.totalorder %s33, 3
      %p188 = por %p186, %p187
      %p190 = scmp.ne.s32.totalorder %s173, %s189
      %p191 = scmp.eq.s32.totalorder %s33, 0
      %p192 = por %p190, %p191
      %s193 = ssub.s32 %s35, %s42
      %p194 = scmp.eq.s32.totalorder %s193, 0
      %s196 = sadd.s32 %s195, 1
      %s197 = scalar_select %p194, %s195, %s196
      %p200 = pneg %p194
      %p201 = scmp.eq.s32.totalorder %s27, 3
      %p202 = por %p200, %p201
      %p203 = scmp.ne.s32.totalorder %s195, %s198
      %p204 = scmp.eq.s32.totalorder %s27, 0
      %p205 = por %p203, %p204
      %p206 = scmp.ne.s32.totalorder %s195, %s198
      %p207 = scmp.eq.s32.totalorder %s32, 3
      %p208 = por %p206, %p207
      %p209 = scmp.ne.s32.totalorder %s198, %s199
      %p210 = scmp.eq.s32.totalorder %s32, 0
      %p211 = por %p209, %p210
      %p212 = scmp.ne.s32.totalorder %s198, %s199
      %p213 = scmp.eq.s32.totalorder %s33, 3
      %p214 = por %p212, %p213
      %p216 = scmp.ne.s32.totalorder %s199, %s215
      %p217 = scmp.eq.s32.totalorder %s33, 0
      %p218 = por %p216, %p217
      %s219 = ssub.s32 %s35, %s42
      %p220 = scmp.eq.s32.totalorder %s219, 0
      %s222 = sadd.s32 %s221, 1
      %s223 = scalar_select %p220, %s221, %s222
      %p226 = pneg %p220
      %p227 = scmp.eq.s32.totalorder %s27, 3
      %p228 = por %p226, %p227
      %p229 = scmp.ne.s32.totalorder %s221, %s224
      %p230 = scmp.eq.s32.totalorder %s27, 0
      %p231 = por %p229, %p230
      %p232 = scmp.ne.s32.totalorder %s221, %s224
      %p233 = scmp.eq.s32.totalorder %s32, 3
      %p234 = por %p232, %p233
      %p235 = scmp.ne.s32.totalorder %s224, %s225
      %p236 = scmp.eq.s32.totalorder %s32, 0
      %p237 = por %p235, %p236
      %p238 = scmp.ne.s32.totalorder %s224, %s225
      %p239 = scmp.eq.s32.totalorder %s33, 3
      %p240 = por %p238, %p239
      %p242 = scmp.ne.s32.totalorder %s225, %s241
      %p243 = scmp.eq.s32.totalorder %s33, 0
      %p244 = por %p242, %p243
      %s245 = ssub.s32 %s35, %s42
      %p246 = scmp.eq.s32.totalorder %s245, 0
      %s248 = sadd.s32 %s247, 1
      %s249 = scalar_select %p246, %s247, %s248
      %p252 = pneg %p246
      %p253 = scmp.eq.s32.totalorder %s27, 3
      %p254 = por %p252, %p253
      %p255 = scmp.ne.s32.totalorder %s247, %s250
      %p256 = scmp.eq.s32.totalorder %s27, 0
      %p257 = por %p255, %p256
      %p258 = scmp.ne.s32.totalorder %s247, %s250
      %p259 = scmp.eq.s32.totalorder %s32, 3
      %p260 = por %p258, %p259
      %p261 = scmp.ne.s32.totalorder %s250, %s251
      %p262 = scmp.eq.s32.totalorder %s32, 0
      %p263 = por %p261, %p262
      %p264 = scmp.ne.s32.totalorder %s250, %s251
      %p265 = scmp.eq.s32.totalorder %s33, 3
      %p266 = por %p264, %p265
      %p268 = scmp.ne.s32.totalorder %s251, %s267
      %p269 = scmp.eq.s32.totalorder %s33, 0
      %p270 = por %p268, %p269
      %s271 = ssub.s32 %s35, %s42
      %p272 = scmp.eq.s32.totalorder %s271, 0
      %s274 = sadd.s32 %s273, 1
      %s275 = scalar_select %p272, %s273, %s274
      %p278 = pneg %p272
      %p279 = scmp.eq.s32.totalorder %s27, 3
      %p280 = por %p278, %p279
      %p281 = scmp.ne.s32.totalorder %s273, %s276
      %p282 = scmp.eq.s32.totalorder %s27, 0
      %p283 = por %p281, %p282
      %p284 = scmp.ne.s32.totalorder %s273, %s276
      %p285 = scmp.eq.s32.totalorder %s32, 3
      %p286 = por %p284, %p285
      %p287 = scmp.ne.s32.totalorder %s276, %s277
      %p288 = scmp.eq.s32.totalorder %s32, 0
      %p289 = por %p287, %p288
      %p290 = scmp.ne.s32.totalorder %s276, %s277
      %p291 = scmp.eq.s32.totalorder %s33, 3
      %p292 = por %p290, %p291
      %p294 = scmp.ne.s32.totalorder %s277, %s293
      %p295 = scmp.eq.s32.totalorder %s33, 0
      %p296 = por %p294, %p295
      %s297 = ssub.s32 %s35, %s42
      %p298 = scmp.eq.s32.totalorder %s297, 0
      %s300 = sadd.s32 %s299, 1
      %s301 = scalar_select %p298, %s299, %s300
      %p304 = pneg %p298
      %p305 = scmp.eq.s32.totalorder %s27, 3
      %p306 = por %p304, %p305
      %p307 = scmp.ne.s32.totalorder %s299, %s302
      %p308 = scmp.eq.s32.totalorder %s27, 0
      %p309 = por %p307, %p308
      %p310 = scmp.ne.s32.totalorder %s299, %s302
      %p311 = scmp.eq.s32.totalorder %s32, 3
      %p312 = por %p310, %p311
      %p313 = scmp.ne.s32.totalorder %s302, %s303
      %p314 = scmp.eq.s32.totalorder %s32, 0
      %p315 = por %p313, %p314
      %p316 = scmp.ne.s32.totalorder %s302, %s303
      %p317 = scmp.eq.s32.totalorder %s33, 3
      %p318 = por %p316, %p317
      %p320 = scmp.ne.s32.totalorder %s303, %s319
      %p321 = scmp.eq.s32.totalorder %s33, 0
      %p322 = por %p320, %p321
      %s323 = ssub.s32 %s35, %s42
      %p324 = scmp.eq.s32.totalorder %s323, 0
      %s326 = sadd.s32 %s325, 1
      %s327 = scalar_select %p324, %s325, %s326
      %p330 = pneg %p324
      %p331 = scmp.eq.s32.totalorder %s27, 3
      %p332 = por %p330, %p331
      %p333 = scmp.ne.s32.totalorder %s325, %s328
      %p334 = scmp.eq.s32.totalorder %s27, 0
      %p335 = por %p333, %p334
      %p336 = scmp.ne.s32.totalorder %s325, %s328
      %p337 = scmp.eq.s32.totalorder %s32, 3
      %p338 = por %p336, %p337
      %p339 = scmp.ne.s32.totalorder %s328, %s329
      %p340 = scmp.eq.s32.totalorder %s32, 0
      %p341 = por %p339, %p340
      %p342 = scmp.ne.s32.totalorder %s328, %s329
      %p343 = scmp.eq.s32.totalorder %s33, 3
      %p344 = por %p342, %p343
      %p346 = scmp.ne.s32.totalorder %s329, %s345
      %p347 = scmp.eq.s32.totalorder %s33, 0
      %p348 = por %p346, %p347
      %s349 = ssub.s32 %s35, %s42
      %p350 = scmp.eq.s32.totalorder %s349, 0
      %s352 = sadd.s32 %s351, 1
      %s353 = scalar_select %p350, %s351, %s352
      %p356 = pneg %p350
      %p357 = scmp.eq.s32.totalorder %s27, 3
      %p358 = por %p356, %p357
      %p359 = scmp.ne.s32.totalorder %s351, %s354
      %p360 = scmp.eq.s32.totalorder %s27, 0
      %p361 = por %p359, %p360
      %p362 = scmp.ne.s32.totalorder %s351, %s354
      %p363 = scmp.eq.s32.totalorder %s32, 3
      %p364 = por %p362, %p363
      %p365 = scmp.ne.s32.totalorder %s354, %s355
      %p366 = scmp.eq.s32.totalorder %s32, 0
      %p367 = por %p365, %p366
      %p368 = scmp.ne.s32.totalorder %s354, %s355
      %p369 = scmp.eq.s32.totalorder %s33, 3
      %p370 = por %p368, %p369
      %p372 = scmp.ne.s32.totalorder %s355, %s371
      %p373 = scmp.eq.s32.totalorder %s33, 0
      %p374 = por %p372, %p373
      %s375 = ssub.s32 %s35, %s42
      %p376 = scmp.eq.s32.totalorder %s375, 0
      %s378 = sadd.s32 %s377, 1
      %s379 = scalar_select %p376, %s377, %s378
      %p382 = pneg %p376
      %p383 = scmp.eq.s32.totalorder %s27, 3
      %p384 = por %p382, %p383
      %p385 = scmp.ne.s32.totalorder %s377, %s380
      %p386 = scmp.eq.s32.totalorder %s27, 0
      %p387 = por %p385, %p386
      %p388 = scmp.ne.s32.totalorder %s377, %s380
      %p389 = scmp.eq.s32.totalorder %s32, 3
      %p390 = por %p388, %p389
      %p391 = scmp.ne.s32.totalorder %s380, %s381
      %p392 = scmp.eq.s32.totalorder %s32, 0
      %p393 = por %p391, %p392
      %p394 = scmp.ne.s32.totalorder %s380, %s381
      %p395 = scmp.eq.s32.totalorder %s33, 3
      %p396 = por %p394, %p395
      %p398 = scmp.ne.s32.totalorder %s381, %s397
      %p399 = scmp.eq.s32.totalorder %s33, 0
      %p400 = por %p398, %p399
      %s401 = ssub.s32 %s35, %s42
      %p402 = scmp.eq.s32.totalorder %s401, 0
      %s404 = sadd.s32 %s403, 1
      %s405 = scalar_select %p402, %s403, %s404
      %p408 = pneg %p402
      %p409 = scmp.eq.s32.totalorder %s27, 3
      %p410 = por %p408, %p409
      %p411 = scmp.ne.s32.totalorder %s403, %s406
      %p412 = scmp.eq.s32.totalorder %s27, 0
      %p413 = por %p411, %p412
      %p414 = scmp.ne.s32.totalorder %s403, %s406
      %p415 = scmp.eq.s32.totalorder %s32, 3
      %p416 = por %p414, %p415
      %p417 = scmp.ne.s32.totalorder %s406, %s407
      %p418 = scmp.eq.s32.totalorder %s32, 0
      %p419 = por %p417, %p418
      %p420 = scmp.ne.s32.totalorder %s406, %s407
      %p421 = scmp.eq.s32.totalorder %s33, 3
      %p422 = por %p420, %p421
      %p424 = scmp.ne.s32.totalorder %s407, %s423
      %p425 = scmp.eq.s32.totalorder %s33, 0
      %p426 = por %p424, %p425
      %s427 = ssub.s32 %s35, %s42
      %p428 = scmp.eq.s32.totalorder %s427, 0
      %s430 = sadd.s32 %s429, 1
      %s431 = scalar_select %p428, %s429, %s430
      %p434 = pneg %p428
      %p435 = scmp.eq.s32.totalorder %s27, 3
      %p436 = por %p434, %p435
      %p437 = scmp.ne.s32.totalorder %s429, %s432
      %p438 = scmp.eq.s32.totalorder %s27, 0
      %p439 = por %p437, %p438
      %p440 = scmp.ne.s32.totalorder %s429, %s432
      %p441 = scmp.eq.s32.totalorder %s32, 3
      %p442 = por %p440, %p441
      %p443 = scmp.ne.s32.totalorder %s432, %s433
      %p444 = scmp.eq.s32.totalorder %s32, 0
      %p445 = por %p443, %p444
      %p446 = scmp.ne.s32.totalorder %s432, %s433
      %p447 = scmp.eq.s32.totalorder %s33, 3
      %p448 = por %p446, %p447
      %p450 = scmp.ne.s32.totalorder %s433, %s449
      %p451 = scmp.eq.s32.totalorder %s33, 0
      %p452 = por %p450, %p451
      %s453 = ssub.s32 %s35, %s42
      %p454 = scmp.eq.s32.totalorder %s453, 0
      %s456 = sadd.s32 %s455, 1
      %s457 = scalar_select %p454, %s455, %s456
      %p460 = pneg %p454
      %p461 = scmp.eq.s32.totalorder %s27, 3
      %p462 = por %p460, %p461
      %p463 = scmp.ne.s32.totalorder %s455, %s458
      %p464 = scmp.eq.s32.totalorder %s27, 0
      %p465 = por %p463, %p464
      %p466 = scmp.ne.s32.totalorder %s455, %s458
      %p467 = scmp.eq.s32.totalorder %s32, 3
      %p468 = por %p466, %p467
      %p469 = scmp.ne.s32.totalorder %s458, %s459
      %p470 = scmp.eq.s32.totalorder %s32, 0
      %p471 = por %p469, %p470
      %p472 = scmp.ne.s32.totalorder %s458, %s459
      %p473 = scmp.eq.s32.totalorder %s33, 3
      %p474 = por %p472, %p473
      %p476 = scmp.ne.s32.totalorder %s459, %s475
      %p477 = scmp.eq.s32.totalorder %s33, 0
      %p478 = por %p476, %p477
      %s480 = sadd.s32 %s479, 1
      %p483 = scmp.eq.s32.totalorder %s27, 3
      %p484 = scmp.ne.s32.totalorder %s479, %s481
      %p485 = scmp.eq.s32.totalorder %s27, 0
      %p486 = por %p484, %p485
      %p487 = scmp.ne.s32.totalorder %s479, %s481
      %p488 = scmp.eq.s32.totalorder %s32, 3
      %p489 = por %p487, %p488
      %p490 = scmp.ne.s32.totalorder %s481, %s482
      %p491 = scmp.eq.s32.totalorder %s32, 0
      %p492 = por %p490, %p491
      %p493 = scmp.ne.s32.totalorder %s481, %s482
      %p494 = scmp.eq.s32.totalorder %s33, 3
      %p495 = por %p493, %p494
      %p497 = scmp.ne.s32.totalorder %s482, %s496
      %p498 = scmp.eq.s32.totalorder %s33, 0
      %p499 = por %p497, %p498
      %s501 = sadd.s32 %s500, 1
      %p504 = scmp.eq.s32.totalorder %s27, 3
      %p505 = scmp.ne.s32.totalorder %s500, %s502
      %p506 = scmp.eq.s32.totalorder %s27, 0
      %p507 = por %p505, %p506
      %p508 = scmp.ne.s32.totalorder %s500, %s502
      %p509 = scmp.eq.s32.totalorder %s32, 3
      %p510 = por %p508, %p509
      %p511 = scmp.ne.s32.totalorder %s502, %s503
      %p512 = scmp.eq.s32.totalorder %s32, 0
      %p513 = por %p511, %p512
      %p514 = scmp.ne.s32.totalorder %s502, %s503
      %p515 = scmp.eq.s32.totalorder %s33, 3
      %p516 = por %p514, %p515
      %p518 = scmp.ne.s32.totalorder %s503, %s517
      %p519 = scmp.eq.s32.totalorder %s33, 0
      %p520 = por %p518, %p519
      %s522 = sadd.s32 %s521, 1
      %p525 = scmp.eq.s32.totalorder %s27, 3
      %p526 = scmp.ne.s32.totalorder %s521, %s523
      %p527 = scmp.eq.s32.totalorder %s27, 0
      %p528 = por %p526, %p527
      %p529 = scmp.ne.s32.totalorder %s521, %s523
      %p530 = scmp.eq.s32.totalorder %s32, 3
      %p531 = por %p529, %p530
      %p532 = scmp.ne.s32.totalorder %s523, %s524
      %p533 = scmp.eq.s32.totalorder %s32, 0
      %p534 = por %p532, %p533
      %p535 = scmp.ne.s32.totalorder %s523, %s524
      %p536 = scmp.eq.s32.totalorder %s33, 3
      %p537 = por %p535, %p536
      %p539 = scmp.ne.s32.totalorder %s524, %s538
      %p540 = scmp.eq.s32.totalorder %s33, 0
      %p541 = por %p539, %p540
      %s542 = ssub.s32 %s34, %s46
      %p543 = scmp.eq.s32.totalorder %s542, 0
      %s545 = sadd.s32 %s544, 1
      %s546 = scalar_select %p543, %s544, %s545
      %p549 = pneg %p543
      %p550 = scmp.eq.s32.totalorder %s27, 3
      %p551 = por %p549, %p550
      %p552 = scmp.ne.s32.totalorder %s544, %s547
      %p553 = scmp.eq.s32.totalorder %s27, 0
      %p554 = por %p552, %p553
      %p555 = scmp.ne.s32.totalorder %s544, %s547
      %p556 = scmp.eq.s32.totalorder %s32, 3
      %p557 = por %p555, %p556
      %p558 = scmp.ne.s32.totalorder %s547, %s548
      %p559 = scmp.eq.s32.totalorder %s32, 0
      %p560 = por %p558, %p559
      %p561 = scmp.ne.s32.totalorder %s547, %s548
      %p562 = scmp.eq.s32.totalorder %s33, 3
      %p563 = por %p561, %p562
      %p565 = scmp.ne.s32.totalorder %s548, %s564
      %p566 = scmp.eq.s32.totalorder %s33, 0
      %p567 = por %p565, %p566
      %p568 = scmp.le.s32.totalorder 1, %s27
      %p569 = scmp.lt.s32.totalorder %s27, 5
      %p570 = pnand %p568, %p569
      %p571 = pneg %p570
      // Predicated region
      $region9: #{tpu_custom_call.1} parent=5 // pred_check
        _
      $region10: #{tpu_custom_call.1} parent=5 // pred_check_branch
        %573 = sbr.rel (%p570) target = $region12
      $region11: #{tpu_custom_call.1} parent=5 // pred_region
        %s574 = ssub.s32 %s27, 1
        // Predicated region
        $region13: #{tpu_custom_call.1} parent=11 // pred_check
          %p575 = pneg %p65
        $region14: #{tpu_custom_call.1} parent=11 // pred_check_branch
          %577 = sbr.rel (%p575) target = $region16
        $region15: #{tpu_custom_call.1} parent=11 // pred_region
          %s578 = smul.u32 2, %s36
          %p579 = scmp.lt.s32.totalorder %s578, 1
          %s580 = scalar_select %p579, %s578, 1
          %s581 = smul.addr %s580, 8
          %s582 = scalar_lea.vmem %s0, %s581
          %s583 = smul.u32 2, %s36
        $region16: #{tpu_custom_call.1} parent=11 // pred_fallthru
          _
        // Predicated region
        $region17: #{tpu_custom_call.1} parent=11 // pred_check
          %p584 = pneg %p86
        $region18: #{tpu_custom_call.1} parent=11 // pred_check_branch
          %586 = sbr.rel (%p584) target = $region20
        $region19: #{tpu_custom_call.1} parent=11 // pred_region
          _
        $region20: #{tpu_custom_call.1} parent=11 // pred_fallthru
          _
        // Predicated region
        $region21: #{tpu_custom_call.1} parent=11 // pred_check
          %p587 = pneg %p107
        $region22: #{tpu_custom_call.1} parent=11 // pred_check_branch
          %589 = sbr.rel (%p587) target = $region24
        $region23: #{tpu_custom_call.1} parent=11 // pred_region
          _
        $region24: #{tpu_custom_call.1} parent=11 // pred_fallthru
          _
        // Predicated region
        $region25: #{tpu_custom_call.1} parent=11 // pred_check
          %p590 = pneg %p492
        $region26: #{tpu_custom_call.1} parent=11 // pred_check_branch
          %592 = sbr.rel (%p590) target = $region28
        $region27: #{tpu_custom_call.1} parent=11 // pred_region
          _
        $region28: #{tpu_custom_call.1} parent=11 // pred_fallthru
          _
        // Predicated region
        $region29: #{tpu_custom_call.1} parent=11 // pred_check
          %p593 = pneg %p513
        $region30: #{tpu_custom_call.1} parent=11 // pred_check_branch
          %595 = sbr.rel (%p593) target = $region32
        $region31: #{tpu_custom_call.1} parent=11 // pred_region
          _
        $region32: #{tpu_custom_call.1} parent=11 // pred_fallthru
          _
        // Predicated region
        $region33: #{tpu_custom_call.1} parent=11 // pred_check
          %p596 = pneg %p534
        $region34: #{tpu_custom_call.1} parent=11 // pred_check_branch
          %598 = sbr.rel (%p596) target = $region36
        $region35: #{tpu_custom_call.1} parent=11 // pred_region
          _
        $region36: #{tpu_custom_call.1} parent=11 // pred_fallthru
          _
      $region12: #{tpu_custom_call.1} parent=5 // pred_fallthru
        _
      %p599 = scmp.lt.s32.totalorder %s27, 4
      // Predicated region
      $region37: #{tpu_custom_call.1} parent=5 // pred_check
        %p600 = pneg %p599
      $region38: #{tpu_custom_call.1} parent=5 // pred_check_branch
        %602 = sbr.rel (%p600) target = $region40
      $region39: #{tpu_custom_call.1} parent=5 // pred_region
        // Predicated region
        $region41: #{tpu_custom_call.1} parent=39 // pred_check
          %p603 = pneg %p127
        $region42: #{tpu_custom_call.1} parent=39 // pred_check_branch
          %605 = sbr.rel (%p603) target = $region44
        $region43: #{tpu_custom_call.1} parent=39 // pred_region
          %p606 = scmp.lt.s32.totalorder %s35, 3
          %s607 = scalar_select %p606, %s35, 3
          %s608 = scalar_lea.vmem %s3, %s607
        $region44: #{tpu_custom_call.1} parent=39 // pred_fallthru
          _
        // Predicated region
        $region45: #{tpu_custom_call.1} parent=39 // pred_check
          %p609 = pneg %p153
        $region46: #{tpu_custom_call.1} parent=39 // pred_check_branch
          %611 = sbr.rel (%p609) target = $region48
        $region47: #{tpu_custom_call.1} parent=39 // pred_region
          %p612 = scmp.lt.s32.totalorder %s35, 3
          %s613 = scalar_select %p612, %s35, 3
          %s614 = scalar_lea.vmem %s4, %s613
        $region48: #{tpu_custom_call.1} parent=39 // pred_fallthru
          _
        // Predicated region
        $region49: #{tpu_custom_call.1} parent=39 // pred_check
          %p615 = pneg %p179
        $region50: #{tpu_custom_call.1} parent=39 // pred_check_branch
          %617 = sbr.rel (%p615) target = $region52
        $region51: #{tpu_custom_call.1} parent=39 // pred_region
          %p618 = scmp.lt.s32.totalorder %s35, 3
          %s619 = scalar_select %p618, %s35, 3
          %s620 = smul.addr %s619, 4
          %s621 = smul.addr %s620, 4
          %s622 = scalar_lea.vmem %s5, %s621
        $region52: #{tpu_custom_call.1} parent=39 // pred_fallthru
          _
        // Predicated region
        $region53: #{tpu_custom_call.1} parent=39 // pred_check
          %p623 = pneg %p205
        $region54: #{tpu_custom_call.1} parent=39 // pred_check_branch
          %625 = sbr.rel (%p623) target = $region56
        $region55: #{tpu_custom_call.1} parent=39 // pred_region
          %p626 = scmp.lt.s32.totalorder %s35, 3
          %s627 = scalar_select %p626, %s35, 3
          %s628 = scalar_lea.vmem %s6, %s627
        $region56: #{tpu_custom_call.1} parent=39 // pred_fallthru
          _
        // Predicated region
        $region57: #{tpu_custom_call.1} parent=39 // pred_check
          %p629 = pneg %p231
        $region58: #{tpu_custom_call.1} parent=39 // pred_check_branch
          %631 = sbr.rel (%p629) target = $region60
        $region59: #{tpu_custom_call.1} parent=39 // pred_region
          %p632 = scmp.lt.s32.totalorder %s35, 3
          %s633 = scalar_select %p632, %s35, 3
          %s634 = scalar_lea.vmem %s7, %s633
        $region60: #{tpu_custom_call.1} parent=39 // pred_fallthru
          _
        // Predicated region
        $region61: #{tpu_custom_call.1} parent=39 // pred_check
          %p635 = pneg %p257
        $region62: #{tpu_custom_call.1} parent=39 // pred_check_branch
          %637 = sbr.rel (%p635) target = $region64
        $region63: #{tpu_custom_call.1} parent=39 // pred_region
          %p638 = scmp.lt.s32.totalorder %s35, 3
          %s639 = scalar_select %p638, %s35, 3
          %s640 = scalar_lea.vmem %s8, %s639
        $region64: #{tpu_custom_call.1} parent=39 // pred_fallthru
          _
        // Predicated region
        $region65: #{tpu_custom_call.1} parent=39 // pred_check
          %p641 = pneg %p283
        $region66: #{tpu_custom_call.1} parent=39 // pred_check_branch
          %643 = sbr.rel (%p641) target = $region68
        $region67: #{tpu_custom_call.1} parent=39 // pred_region
          %p644 = scmp.lt.s32.totalorder %s35, 3
          %s645 = scalar_select %p644, %s35, 3
          %s646 = smul.addr %s645, 4
          %s647 = smul.addr %s646, 4
          %s648 = scalar_lea.vmem %s9, %s647
        $region68: #{tpu_custom_call.1} parent=39 // pred_fallthru
          _
        // Predicated region
        $region69: #{tpu_custom_call.1} parent=39 // pred_check
          %p649 = pneg %p309
        $region70: #{tpu_custom_call.1} parent=39 // pred_check_branch
          %651 = sbr.rel (%p649) target = $region72
        $region71: #{tpu_custom_call.1} parent=39 // pred_region
          %p652 = scmp.lt.s32.totalorder %s35, 3
          %s653 = scalar_select %p652, %s35, 3
          %s654 = scalar_lea.vmem %s10, %s653
        $region72: #{tpu_custom_call.1} parent=39 // pred_fallthru
          _
        // Predicated region
        $region73: #{tpu_custom_call.1} parent=39 // pred_check
          %p655 = pneg %p335
        $region74: #{tpu_custom_call.1} parent=39 // pred_check_branch
          %657 = sbr.rel (%p655) target = $region76
        $region75: #{tpu_custom_call.1} parent=39 // pred_region
          %p658 = scmp.lt.s32.totalorder %s35, 3
          %s659 = scalar_select %p658, %s35, 3
          %s660 = scalar_lea.vmem %s11, %s659
        $region76: #{tpu_custom_call.1} parent=39 // pred_fallthru
          _
        // Predicated region
        $region77: #{tpu_custom_call.1} parent=39 // pred_check
          %p661 = pneg %p361
        $region78: #{tpu_custom_call.1} parent=39 // pred_check_branch
          %663 = sbr.rel (%p661) target = $region80
        $region79: #{tpu_custom_call.1} parent=39 // pred_region
          %p664 = scmp.lt.s32.totalorder %s35, 3
          %s665 = scalar_select %p664, %s35, 3
          %s666 = scalar_lea.vmem %s12, %s665
        $region80: #{tpu_custom_call.1} parent=39 // pred_fallthru
          _
        // Predicated region
        $region81: #{tpu_custom_call.1} parent=39 // pred_check
          %p667 = pneg %p387
        $region82: #{tpu_custom_call.1} parent=39 // pred_check_branch
          %669 = sbr.rel (%p667) target = $region84
        $region83: #{tpu_custom_call.1} parent=39 // pred_region
          %p670 = scmp.lt.s32.totalorder %s35, 3
          %s671 = scalar_select %p670, %s35, 3
          %s672 = smul.addr %s671, 4
          %s673 = smul.addr %s672, 4
          %s674 = scalar_lea.vmem %s13, %s673
        $region84: #{tpu_custom_call.1} parent=39 // pred_fallthru
          _
        // Predicated region
        $region85: #{tpu_custom_call.1} parent=39 // pred_check
          %p675 = pneg %p413
        $region86: #{tpu_custom_call.1} parent=39 // pred_check_branch
          %677 = sbr.rel (%p675) target = $region88
        $region87: #{tpu_custom_call.1} parent=39 // pred_region
          %p678 = scmp.lt.s32.totalorder %s35, 3
          %s679 = scalar_select %p678, %s35, 3
          %s680 = scalar_lea.vmem %s14, %s679
        $region88: #{tpu_custom_call.1} parent=39 // pred_fallthru
          _
        // Predicated region
        $region89: #{tpu_custom_call.1} parent=39 // pred_check
          %p681 = pneg %p439
        $region90: #{tpu_custom_call.1} parent=39 // pred_check_branch
          %683 = sbr.rel (%p681) target = $region92
        $region91: #{tpu_custom_call.1} parent=39 // pred_region
          %p684 = scmp.lt.s32.totalorder %s35, 3
          %s685 = scalar_select %p684, %s35, 3
          %s686 = smul.addr %s685, 16
          %s687 = smul.addr %s686, 4
          %s688 = scalar_lea.vmem %s15, %s687
        $region92: #{tpu_custom_call.1} parent=39 // pred_fallthru
          _
        // Predicated region
        $region93: #{tpu_custom_call.1} parent=39 // pred_check
          %p689 = pneg %p465
        $region94: #{tpu_custom_call.1} parent=39 // pred_check_branch
          %691 = sbr.rel (%p689) target = $region96
        $region95: #{tpu_custom_call.1} parent=39 // pred_region
          %p692 = scmp.lt.s32.totalorder %s35, 3
          %s693 = scalar_select %p692, %s35, 3
          %s694 = scalar_lea.vmem %s16, %s693
        $region96: #{tpu_custom_call.1} parent=39 // pred_fallthru
          _
      $region40: #{tpu_custom_call.1} parent=5 // pred_fallthru
        _
      %p695 = scmp.le.s32.totalorder 1, %s27
      %p696 = scmp.lt.s32.totalorder %s27, 5
      %p697 = pnand %p695, %p696
      %p698 = pneg %p697
      // Predicated region
      $region97: #{tpu_custom_call.1} parent=5 // pred_check
        _
      $region98: #{tpu_custom_call.1} parent=5 // pred_check_branch
        %700 = sbr.rel (%p697) target = $region100
      $region99: #{tpu_custom_call.1} parent=5 // pred_region
        %s701 = ssub.s32 %s27, 1
        %s702 = smul.u32 2, %s36
        %p703 = scmp.lt.s32.totalorder %s702, 1
        %s704 = scalar_select %p703, %s702, 1
        %s705 = smul.addr %s704, 8
        %s706 = scalar_lea.vmem %s0, %s705
        %p707 = pneg %p65
        %p708 = pneg %p62
        %p709 = pneg %p86
        %p710 = pneg %p83
        %p711 = pneg %p107
        %p712 = pneg %p104
        %p713 = scmp.lt.s32.totalorder %s37, 3
        %s714 = scalar_select %p713, %s37, 3
        %s715 = scalar_lea.vmem %s3, %s714
        %p716 = pneg %p133
        %p717 = pneg %p130
        %p718 = scmp.lt.s32.totalorder %s37, 3
        %s719 = scalar_select %p718, %s37, 3
        %s720 = scalar_lea.vmem %s4, %s719
        %p721 = pneg %p159
        %p722 = pneg %p156
        %p723 = scmp.lt.s32.totalorder %s37, 3
        %s724 = scalar_select %p723, %s37, 3
        %s725 = smul.addr %s724, 4
        %s726 = smul.addr %s725, 4
        %s727 = scalar_lea.vmem %s5, %s726
        %p728 = pneg %p185
        %p729 = pneg %p182
        %p730 = scmp.lt.s32.totalorder %s37, 3
        %s731 = scalar_select %p730, %s37, 3
        %s732 = scalar_lea.vmem %s6, %s731
        %p733 = pneg %p211
        %p734 = pneg %p208
        %p735 = scmp.lt.s32.totalorder %s37, 3
        %s736 = scalar_select %p735, %s37, 3
        %s737 = scalar_lea.vmem %s7, %s736
        %p738 = pneg %p237
        %p739 = pneg %p234
        %p740 = scmp.lt.s32.totalorder %s37, 3
        %s741 = scalar_select %p740, %s37, 3
        %s742 = scalar_lea.vmem %s8, %s741
        %p743 = pneg %p263
        %p744 = pneg %p260
        %p745 = scmp.lt.s32.totalorder %s37, 3
        %s746 = scalar_select %p745, %s37, 3
        %s747 = smul.addr %s746, 4
        %s748 = smul.addr %s747, 4
        %s749 = scalar_lea.vmem %s9, %s748
        %p750 = pneg %p289
        %p751 = pneg %p286
        %p752 = scmp.lt.s32.totalorder %s37, 3
        %s753 = scalar_select %p752, %s37, 3
        %s754 = scalar_lea.vmem %s10, %s753
        %p755 = pneg %p315
        %p756 = pneg %p312
        %p757 = scmp.lt.s32.totalorder %s37, 3
        %s758 = scalar_select %p757, %s37, 3
        %s759 = scalar_lea.vmem %s11, %s758
        %p760 = pneg %p341
        %p761 = pneg %p338
        %p762 = scmp.lt.s32.totalorder %s37, 3
        %s763 = scalar_select %p762, %s37, 3
        %s764 = scalar_lea.vmem %s12, %s763
        %p765 = pneg %p367
        %p766 = pneg %p364
        %p767 = scmp.lt.s32.totalorder %s37, 3
        %s768 = scalar_select %p767, %s37, 3
        %s769 = smul.addr %s768, 4
        %s770 = smul.addr %s769, 4
        %s771 = scalar_lea.vmem %s13, %s770
        %p772 = pneg %p393
        %p773 = pneg %p390
        %p774 = scmp.lt.s32.totalorder %s37, 3
        %s775 = scalar_select %p774, %s37, 3
        %s776 = scalar_lea.vmem %s14, %s775
        %p777 = pneg %p419
        %p778 = pneg %p416
        %p779 = scmp.lt.s32.totalorder %s37, 3
        %s780 = scalar_select %p779, %s37, 3
        %s781 = smul.addr %s780, 16
        %s782 = smul.addr %s781, 4
        %s783 = scalar_lea.vmem %s15, %s782
        %p784 = pneg %p445
        %p785 = pneg %p442
        %p786 = scmp.lt.s32.totalorder %s37, 3
        %s787 = scalar_select %p786, %s37, 3
        %s788 = scalar_lea.vmem %s16, %s787
        %p789 = pneg %p471
        %p790 = pneg %p468
        %p791 = pneg %p492
        %p792 = pneg %p489
        %p793 = pneg %p513
        %p794 = pneg %p510
        %p795 = pneg %p534
        %p796 = pneg %p531
        %p797 = pneg %p560
        %p798 = pneg %p557
        %s799 = smul.u32 2, %s36
        %p800 = scmp.lt.s32.totalorder %s799, 1
        %s801 = scalar_select %p800, %s799, 1
        %s802 = smul.addr %s801, 8
        %s803 = scalar_lea.vmem %s0, %s802
        %s804 = smul.u32 2, %s36
        %p805 = scmp.lt.s32.totalorder %s37, 3
        %s806 = scalar_select %p805, %s37, 3
        %s807 = scalar_lea.vmem %s3, %s806
        %p808 = scmp.lt.s32.totalorder %s37, 3
        %s809 = scalar_select %p808, %s37, 3
        %s810 = scalar_lea.vmem %s4, %s809
        %p811 = scmp.lt.s32.totalorder %s37, 3
        %s812 = scalar_select %p811, %s37, 3
        %s813 = smul.addr %s812, 4
        %s814 = smul.addr %s813, 4
        %s815 = scalar_lea.vmem %s5, %s814
        %p816 = scmp.lt.s32.totalorder %s37, 3
        %s817 = scalar_select %p816, %s37, 3
        %s818 = scalar_lea.vmem %s6, %s817
        %p819 = scmp.lt.s32.totalorder %s37, 3
        %s820 = scalar_select %p819, %s37, 3
        %s821 = scalar_lea.vmem %s7, %s820
        %p822 = scmp.lt.s32.totalorder %s37, 3
        %s823 = scalar_select %p822, %s37, 3
        %s824 = scalar_lea.vmem %s8, %s823
        %p825 = scmp.lt.s32.totalorder %s37, 3
        %s826 = scalar_select %p825, %s37, 3
        %s827 = smul.addr %s826, 4
        %s828 = smul.addr %s827, 4
        %s829 = scalar_lea.vmem %s9, %s828
        %p830 = scmp.lt.s32.totalorder %s37, 3
        %s831 = scalar_select %p830, %s37, 3
        %s832 = scalar_lea.vmem %s10, %s831
        %p833 = scmp.lt.s32.totalorder %s37, 3
        %s834 = scalar_select %p833, %s37, 3
        %s835 = scalar_lea.vmem %s11, %s834
        %p836 = scmp.lt.s32.totalorder %s37, 3
        %s837 = scalar_select %p836, %s37, 3
        %s838 = scalar_lea.vmem %s12, %s837
        %p839 = scmp.lt.s32.totalorder %s37, 3
        %s840 = scalar_select %p839, %s37, 3
        %s841 = smul.addr %s840, 4
        %s842 = smul.addr %s841, 4
        %s843 = scalar_lea.vmem %s13, %s842
        %p844 = scmp.lt.s32.totalorder %s37, 3
        %s845 = scalar_select %p844, %s37, 3
        %s846 = scalar_lea.vmem %s14, %s845
        %p847 = scmp.lt.s32.totalorder %s37, 3
        %s848 = scalar_select %p847, %s37, 3
        %s849 = smul.addr %s848, 16
        %s850 = smul.addr %s849, 4
        %s851 = scalar_lea.vmem %s15, %s850
        %p852 = scmp.lt.s32.totalorder %s37, 3
        %s853 = scalar_select %p852, %s37, 3
        %s854 = scalar_lea.vmem %s16, %s853
        %p856 = scmp.eq.s32.totalorder %s37, 0
        // Predicated region
        $region101: #{tpu_custom_call.1} parent=99 // pred_check
          %p857 = pneg %p856
        $region102: #{tpu_custom_call.1} parent=99 // pred_check_branch
          %859 = sbr.rel (%p857) target = $region104
        $region103: #{tpu_custom_call.1} parent=99 // pred_region
          %v860 = vld [vmem:[%s803] sm:$0xff]
          %v861 = vld [vmem:[%s803 + $0x8] sm:$0xff]
          %v862 = vld [vmem:[%s1] sm:$0x1]
          %v863 = vld [vmem:[%s2] sm:$0x1]
          %vm864 = vcmask 261120
          %v865 = vsel %vm864, %v860, 0.0
          %866 = vadd.xlane.f32.xlu0 %v865
          %v867 = vpop.xlane.xlu0 %866
          %v868 = vsel %vm864, %v861, 0.0
          %869 = vadd.xlane.f32.xlu0 %v868
          %v870 = vpop.xlane.xlu0 %869
          %v871 = vrcp.pop 32.0
          %v872 = vmul.f32 %v867, %v871
          %v873 = vmul.f32 %v870, %v871
          %v874 = vsub.f32 %v860, %v872
          %v875 = vsub.f32 %v861, %v873
          %v876 = vmul.f32 %v874, %v874
          %v877 = vmul.f32 %v875, %v875
          %v878 = vsel %vm864, %v876, 0.0
          %879 = vadd.xlane.f32.xlu0 %v878
          %v880 = vpop.xlane.xlu0 %879
          %v881 = vsel %vm864, %v877, 0.0
          %882 = vadd.xlane.f32.xlu0 %v881
          %v883 = vpop.xlane.xlu0 %882
          %v884 = vmul.f32 %v880, %v871
          %v885 = vmul.f32 %v883, %v871
          %v886 = vadd.f32 %v884, 1e-06
          %v887 = vadd.f32 %v885, 1e-06
          %v888 = vrsqrt.pop %v886
          %v889 = vrsqrt.pop %v887
          %v890 = vmul.f32 %v874, %v888
          %v891 = vmul.f32 %v875, %v889
          %v893 = vlaneseq
          %v894 = vshrl.u32 %v893, 7
          %v895 = vsub.s32 0, %v894
          %v896 = vrot.slane %v862, %v895
          %v898 = vmul.f32 %v890, %v896
          %v899 = vmul.f32 %v891, %v896
          %v901 = vlaneseq
          %v902 = vshrl.u32 %v901, 7
          %v903 = vsub.s32 0, %v902
          %v904 = vrot.slane %v863, %v903
          %v906 = vadd.f32 %v898, %v904
          %v907 = vadd.f32 %v899, %v904
          %908 = vst.msk [vmem:[#allocation2] sm:$0xff] %vm864, %v906
          %909 = vst.msk [vmem:[#allocation2 + $0x8] sm:$0xff] %vm864, %v907
        $region104: #{tpu_custom_call.1} parent=99 // pred_fallthru
          _
        %v910 = vld [vmem:[#allocation2] sm:$0xff]
        %v911 = vld [vmem:[#allocation2 + $0x8] sm:$0xff]
        %v912 = vld [vmem:[%s807] sm:$0x1]
        %v913 = vld [vmem:[%s810] sm:$0x1]
        %vm914 = vcmask 261120
        %v915 = vsel %vm914, %v910, 0.0
        %916 = vadd.xlane.f32.xlu0 %v915
        %v917 = vpop.xlane.xlu0 %916
        %v918 = vsel %vm914, %v911, 0.0
        %919 = vadd.xlane.f32.xlu0 %v918
        %v920 = vpop.xlane.xlu0 %919
        %v921 = vrcp.pop 32.0
        %v922 = vmul.f32 %v917, %v921
        %v923 = vmul.f32 %v920, %v921
        %v924 = vsub.f32 %v910, %v922
        %v925 = vsub.f32 %v911, %v923
        %v926 = vmul.f32 %v924, %v924
        %v927 = vmul.f32 %v925, %v925
        %v928 = vsel %vm914, %v926, 0.0
        %929 = vadd.xlane.f32.xlu0 %v928
        %v930 = vpop.xlane.xlu0 %929
        %v931 = vsel %vm914, %v927, 0.0
        %932 = vadd.xlane.f32.xlu0 %v931
        %v933 = vpop.xlane.xlu0 %932
        %v934 = vmul.f32 %v930, %v921
        %v935 = vmul.f32 %v933, %v921
        %v936 = vadd.f32 %v934, 1e-06
        %v937 = vadd.f32 %v935, 1e-06
        %v938 = vrsqrt.pop %v936
        %v939 = vrsqrt.pop %v937
        %v940 = vmul.f32 %v924, %v938
        %v941 = vmul.f32 %v925, %v939
        %v943 = vlaneseq
        %v944 = vshrl.u32 %v943, 7
        %v945 = vsub.s32 0, %v944
        %v946 = vrot.slane %v912, %v945
        %v948 = vmul.f32 %v940, %v946
        %v949 = vmul.f32 %v941, %v946
        %v951 = vlaneseq
        %v952 = vshrl.u32 %v951, 7
        %v953 = vsub.s32 0, %v952
        %v954 = vrot.slane %v913, %v953
        %v956 = vadd.f32 %v948, %v954
        %v957 = vadd.f32 %v949, %v954
        %v958 = vpack.c.bf16 %v957, %v956
        %v959 = vld [vmem:[%s815] sm:$0xf]
        %v960 = vld [vmem:[%s815 + $0x4] sm:$0xf]
        %v961 = vld [vmem:[%s815 + $0x8] sm:$0xf]
        %v962 = vld [vmem:[%s815 + $0xc] sm:$0xf]
        %v963 = vld [vmem:[%s818] sm:$0x1]
        %v965 = vlaneseq
        %v966 = vshrl.u32 %v965, 7
        %v967 = vsub.s32 0, %v966
        %v968 = vrot.slane %v963, %v967
        %v974 = vunpack.c.l.b16 %v959
        %v975 = vunpack.c.l.b16 %v960
        %v976 = vunpack.c.l.b16 %v961
        %v977 = vunpack.c.l.b16 %v962
        %v978 = vpack.c.b16 %v975, %v974
        %v979 = vpack.c.b16 %v977, %v976
        %v983 = vsel %vm914, %v958, 0
        %985 = vmatprep.subr.bf16.mxu0 0
        %986 = vmatpush1.bf16.msra.mxu0 0
        %987 = vmatprep.subr.bf16.mxu0 0
        %988 = vmatpush1.bf16.msra.mxu0 0
        %989 = vmatprep.subr.bf16.mxu0 0
        %990 = vmatpush1.bf16.msra.mxu0 0
        %991 = vmatprep.subr.bf16.mxu0 0
        %992 = vmatpush1.bf16.msra.mxu0 0
        %993 = vmatprep.subr.bf16.mxu0 0
        %994 = vmatpush1.bf16.msra.mxu0 0
        %995 = vmatprep.subr.bf16.mxu0 0
        %996 = vmatpush1.bf16.msra.mxu0 0
        %997 = vmatprep.subr.bf16.mxu0 0
        %998 = vmatpush1.bf16.msra.mxu0 %v979
        %999 = vmatprep.subr.bf16.mxu0 0
        %1000 = vmatpush1.bf16.msra.mxu0 %v978
        %1001 = vmatprep.subr.bf16.mxu0 0
        %1002 = vmatpush2.bf16.msra.mxu0 0
        %1003 = vmatprep.subr.bf16.mxu0 0
        %1004 = vmatpush2.bf16.msra.mxu0 0
        %1005 = vmatprep.subr.bf16.mxu0 0
        %1006 = vmatpush2.bf16.msra.mxu0 0
        %1007 = vmatprep.subr.bf16.mxu0 0
        %1008 = vmatpush2.bf16.msra.mxu0 0
        %1009 = vmatprep.subr.bf16.mxu0 0
        %1010 = vmatpush2.bf16.msra.mxu0 0
        %1011 = vmatprep.subr.bf16.mxu0 0
        %1012 = vmatpush2.bf16.msra.mxu0 0
        %1013 = vmatprep.subr.bf16.mxu0 0
        %1014 = vmatpush2.bf16.msra.mxu0 0
        %1015 = vmatprep.subr.bf16.mxu0 0
        %1016 = vmatpush2.bf16.msra.mxu0 0
        %1017 = vmatprep.mubr.bf16.mxu0 0
        %1018 = vmatmul.mubr.bf16.gmra.mxu0 %v983
        %v1019 = vpop.f32.mrf.mxu0
        %v1020 = vadd.f32 %v968, %v1019
        %v1021 = vpop.f32.mrf.mxu0
        %v1022 = vpop.f32.mrf.mxu0
        %v1023 = vadd.f32 %v968, %v1022
        %v1024 = vpop.f32.mrf.mxu0
        %1025 = vdwg.mxu0
        %v1026 = vpack.c.bf16 %v1020, %v1020
        %v1027 = vpack.c.bf16 %v1023, %v1023
        %1029 = vrot.lane.b32.xlu0 %v1026, 96
        %v1030 = vpop.permute.xlu0 %1029
        %vm1031 = vcmask 64512
        %v1033 = vsel %vm1031, %v1026, 0
        %v1036 = vsel %vm1031, %v1030, 0
        %1038 = vmatprep.subr.bf16.mxu0 0
        %1039 = vmatpush1.bf16.xpose.msra.mxu0 0
        %1040 = vmatprep.subr.bf16.mxu0 0
        %1041 = vmatpush1.bf16.xpose.msra.mxu0 0
        %1042 = vmatprep.subr.bf16.mxu0 0
        %1043 = vmatpush1.bf16.xpose.msra.mxu0 0
        %1044 = vmatprep.subr.bf16.mxu0 0
        %1045 = vmatpush1.bf16.xpose.msra.mxu0 0
        %1046 = vmatprep.subr.bf16.mxu0 0
        %1047 = vmatpush1.bf16.xpose.msra.mxu0 0
        %1048 = vmatprep.subr.bf16.mxu0 0
        %1049 = vmatpush1.bf16.xpose.msra.mxu0 0
        %1050 = vmatprep.subr.bf16.mxu0 0
        %1051 = vmatpush1.bf16.xpose.msra.mxu0 0
        %1052 = vmatprep.subr.bf16.mxu0 0
        %1053 = vmatpush1.bf16.xpose.msra.mxu0 %v1036
        %1054 = vmatprep.subr.bf16.mxu0 0
        %1055 = vmatpush2.bf16.xpose.msra.mxu0 0
        %1056 = vmatprep.subr.bf16.mxu0 0
        %1057 = vmatpush2.bf16.xpose.msra.mxu0 0
        %1058 = vmatprep.subr.bf16.mxu0 0
        %1059 = vmatpush2.bf16.xpose.msra.mxu0 0
        %1060 = vmatprep.subr.bf16.mxu0 0
        %1061 = vmatpush2.bf16.xpose.msra.mxu0 0
        %1062 = vmatprep.subr.bf16.mxu0 0
        %1063 = vmatpush2.bf16.xpose.msra.mxu0 0
        %1064 = vmatprep.subr.bf16.mxu0 0
        %1065 = vmatpush2.bf16.xpose.msra.mxu0 0
        %1066 = vmatprep.subr.bf16.mxu0 0
        %1067 = vmatpush2.bf16.xpose.msra.mxu0 0
        %1068 = vmatprep.subr.bf16.mxu0 0
        %1069 = vmatpush2.bf16.xpose.msra.mxu0 0
        %1070 = vmatprep.mubr.bf16.mxu0 0
        %1071 = vmatmul.mubr.bf16.gmra.mxu0 %v1033
        %v1072 = vpop.f32.mrf.mxu0
        %v1073 = vadd.f32 0.0, %v1072
        %v1074 = vpop.f32.mrf.mxu0
        %v1075 = vpop.f32.mrf.mxu0
        %v1076 = vpop.f32.mrf.mxu0
        %1077 = vdwg.mxu0
        %1079 = vrot.lane.b32.xlu0 %v1027, 96
        %v1080 = vpop.permute.xlu0 %1079
        %v1082 = vsel %vm1031, %v1027, 0
        %v1085 = vsel %vm1031, %v1080, 0
        %1087 = vmatprep.subr.bf16.mxu0 0
        %1088 = vmatpush1.bf16.xpose.msra.mxu0 0
        %1089 = vmatprep.subr.bf16.mxu0 0
        %1090 = vmatpush1.bf16.xpose.msra.mxu0 0
        %1091 = vmatprep.subr.bf16.mxu0 0
        %1092 = vmatpush1.bf16.xpose.msra.mxu0 0
        %1093 = vmatprep.subr.bf16.mxu0 0
        %1094 = vmatpush1.bf16.xpose.msra.mxu0 0
        %1095 = vmatprep.subr.bf16.mxu0 0
        %1096 = vmatpush1.bf16.xpose.msra.mxu0 0
        %1097 = vmatprep.subr.bf16.mxu0 0
        %1098 = vmatpush1.bf16.xpose.msra.mxu0 0
        %1099 = vmatprep.subr.bf16.mxu0 0
        %1100 = vmatpush1.bf16.xpose.msra.mxu0 0
        %1101 = vmatprep.subr.bf16.mxu0 0
        %1102 = vmatpush1.bf16.xpose.msra.mxu0 %v1085
        %1103 = vmatprep.subr.bf16.mxu0 0
        %1104 = vmatpush2.bf16.xpose.msra.mxu0 0
        %1105 = vmatprep.subr.bf16.mxu0 0
        %1106 = vmatpush2.bf16.xpose.msra.mxu0 0
        %1107 = vmatprep.subr.bf16.mxu0 0
        %1108 = vmatpush2.bf16.xpose.msra.mxu0 0
        %1109 = vmatprep.subr.bf16.mxu0 0
        %1110 = vmatpush2.bf16.xpose.msra.mxu0 0
        %1111 = vmatprep.subr.bf16.mxu0 0
        %1112 = vmatpush2.bf16.xpose.msra.mxu0 0
        %1113 = vmatprep.subr.bf16.mxu0 0
        %1114 = vmatpush2.bf16.xpose.msra.mxu0 0
        %1115 = vmatprep.subr.bf16.mxu0 0
        %1116 = vmatpush2.bf16.xpose.msra.mxu0 0
        %1117 = vmatprep.subr.bf16.mxu0 0
        %1118 = vmatpush2.bf16.xpose.msra.mxu0 0
        %1119 = vmatprep.mubr.bf16.mxu0 0
        %1120 = vmatmul.mubr.bf16.gmra.mxu0 %v1082
        %v1121 = vpop.f32.mrf.mxu0
        %v1122 = vadd.f32 0.0, %v1121
        %v1123 = vpop.f32.mrf.mxu0
        %v1124 = vpop.f32.mrf.mxu0
        %v1125 = vpop.f32.mrf.mxu0
        %1126 = vdwg.mxu0
        %v1127 = vsel %vm1031, %v1073, -inf
        %1128 = vmax.xlane.f32.xlu0 %v1127
        %v1129 = vpop.xlane.xlu0 %1128
        %v1130 = vsel %vm1031, %v1122, -inf
        %1131 = vmax.xlane.f32.xlu0 %v1130
        %v1132 = vpop.xlane.xlu0 %1131
        %v1133 = vsub.f32 %v1073, %v1129
        %v1134 = vsub.f32 %v1122, %v1132
        %v1135 = vmul.f32 %v1133, 1.442695
        %v1136 = vpow.pop %v1135
        %v1137 = vmul.f32 %v1134, 1.442695
        %v1138 = vpow.pop %v1137
        %v1139 = vsel %vm1031, %v1136, 0.0
        %1140 = vadd.xlane.f32.xlu0 %v1139
        %v1141 = vpop.xlane.xlu0 %1140
        %v1142 = vsel %vm1031, %v1138, 0.0
        %1143 = vadd.xlane.f32.xlu0 %v1142
        %v1144 = vpop.xlane.xlu0 %1143
        %v1145 = vrcp.pop %v1141
        %v1146 = vrcp.pop %v1144
        %v1147 = vmul.f32 %v1136, %v1145
        %v1148 = vmul.f32 %v1138, %v1146
        %v1149 = vpack.c.bf16 %v1147, %v1147
        %v1150 = vpack.c.bf16 %v1148, %v1148
        %1151 = vrot.lane.b32.xlu0 %v1026, 64
        %v1152 = vpop.permute.xlu0 %1151
        %v1154 = vsel %vm1031, %v1149, 0
        %vm1156 = vcmask 1043456
        %v1158 = vsel %vm1156, %v1152, 0
        %1160 = vmatprep.subr.bf16.mxu0 0
        %1161 = vmatpush1.bf16.msra.mxu0 0
        %1162 = vmatprep.subr.bf16.mxu0 0
        %1163 = vmatpush1.bf16.msra.mxu0 0
        %1164 = vmatprep.subr.bf16.mxu0 0
        %1165 = vmatpush1.bf16.msra.mxu0 0
        %1166 = vmatprep.subr.bf16.mxu0 0
        %1167 = vmatpush1.bf16.msra.mxu0 0
        %1168 = vmatprep.subr.bf16.mxu0 0
        %1169 = vmatpush1.bf16.msra.mxu0 0
        %1170 = vmatprep.subr.bf16.mxu0 0
        %1171 = vmatpush1.bf16.msra.mxu0 0
        %1172 = vmatprep.subr.bf16.mxu0 0
        %1173 = vmatpush1.bf16.msra.mxu0 0
        %1174 = vmatprep.subr.bf16.mxu0 0
        %1175 = vmatpush1.bf16.msra.mxu0 %v1158
        %1176 = vmatprep.subr.bf16.mxu0 0
        %1177 = vmatpush2.bf16.msra.mxu0 0
        %1178 = vmatprep.subr.bf16.mxu0 0
        %1179 = vmatpush2.bf16.msra.mxu0 0
        %1180 = vmatprep.subr.bf16.mxu0 0
        %1181 = vmatpush2.bf16.msra.mxu0 0
        %1182 = vmatprep.subr.bf16.mxu0 0
        %1183 = vmatpush2.bf16.msra.mxu0 0
        %1184 = vmatprep.subr.bf16.mxu0 0
        %1185 = vmatpush2.bf16.msra.mxu0 0
        %1186 = vmatprep.subr.bf16.mxu0 0
        %1187 = vmatpush2.bf16.msra.mxu0 0
        %1188 = vmatprep.subr.bf16.mxu0 0
        %1189 = vmatpush2.bf16.msra.mxu0 0
        %1190 = vmatprep.subr.bf16.mxu0 0
        %1191 = vmatpush2.bf16.msra.mxu0 0
        %1192 = vmatprep.mubr.bf16.mxu0 0
        %1193 = vmatmul.mubr.bf16.gmra.mxu0 %v1154
        %v1194 = vpop.f32.mrf.mxu0
        %v1195 = vadd.f32 0.0, %v1194
        %v1196 = vpop.f32.mrf.mxu0
        %v1197 = vpop.f32.mrf.mxu0
        %v1198 = vpop.f32.mrf.mxu0
        %1199 = vdwg.mxu0
        %1200 = vrot.lane.b32.xlu0 %v1027, 64
        %v1201 = vpop.permute.xlu0 %1200
        %v1203 = vsel %vm1031, %v1150, 0
        %v1206 = vsel %vm1156, %v1201, 0
        %1208 = vmatprep.subr.bf16.mxu0 0
        %1209 = vmatpush1.bf16.msra.mxu0 0
        %1210 = vmatprep.subr.bf16.mxu0 0
        %1211 = vmatpush1.bf16.msra.mxu0 0
        %1212 = vmatprep.subr.bf16.mxu0 0
        %1213 = vmatpush1.bf16.msra.mxu0 0
        %1214 = vmatprep.subr.bf16.mxu0 0
        %1215 = vmatpush1.bf16.msra.mxu0 0
        %1216 = vmatprep.subr.bf16.mxu0 0
        %1217 = vmatpush1.bf16.msra.mxu0 0
        %1218 = vmatprep.subr.bf16.mxu0 0
        %1219 = vmatpush1.bf16.msra.mxu0 0
        %1220 = vmatprep.subr.bf16.mxu0 0
        %1221 = vmatpush1.bf16.msra.mxu0 0
        %1222 = vmatprep.subr.bf16.mxu0 0
        %1223 = vmatpush1.bf16.msra.mxu0 %v1206
        %1224 = vmatprep.subr.bf16.mxu0 0
        %1225 = vmatpush2.bf16.msra.mxu0 0
        %1226 = vmatprep.subr.bf16.mxu0 0
        %1227 = vmatpush2.bf16.msra.mxu0 0
        %1228 = vmatprep.subr.bf16.mxu0 0
        %1229 = vmatpush2.bf16.msra.mxu0 0
        %1230 = vmatprep.subr.bf16.mxu0 0
        %1231 = vmatpush2.bf16.msra.mxu0 0
        %1232 = vmatprep.subr.bf16.mxu0 0
        %1233 = vmatpush2.bf16.msra.mxu0 0
        %1234 = vmatprep.subr.bf16.mxu0 0
        %1235 = vmatpush2.bf16.msra.mxu0 0
        %1236 = vmatprep.subr.bf16.mxu0 0
        %1237 = vmatpush2.bf16.msra.mxu0 0
        %1238 = vmatprep.subr.bf16.mxu0 0
        %1239 = vmatpush2.bf16.msra.mxu0 0
        %1240 = vmatprep.mubr.bf16.mxu0 0
        %1241 = vmatmul.mubr.bf16.gmra.mxu0 %v1203
        %v1242 = vpop.f32.mrf.mxu0
        %v1243 = vadd.f32 0.0, %v1242
        %v1244 = vpop.f32.mrf.mxu0
        %v1245 = vpop.f32.mrf.mxu0
        %v1246 = vpop.f32.mrf.mxu0
        %1247 = vdwg.mxu0
        %1248 = vst.msk [vmem:[#allocation3] sm:$0xff] %vm1031, %v1195
        %1249 = vst.msk [vmem:[#allocation3 + $0x8] sm:$0xff] %vm1031, %v1243
        %1250 = vrot.lane.b32.xlu0 %v1026, 120
        %v1251 = vpop.permute.xlu0 %1250
        %1252 = vrot.lane.b32.xlu0 %v1026, 88
        %v1253 = vpop.permute.xlu0 %1252
        %v1255 = vsel %vm1031, %v1251, 0
        %v1258 = vsel %vm1031, %v1253, 0
        %1260 = vmatprep.subr.bf16.mxu0 0
        %1261 = vmatpush1.bf16.xpose.msra.mxu0 0
        %1262 = vmatprep.subr.bf16.mxu0 0
        %1263 = vmatpush1.bf16.xpose.msra.mxu0 0
        %1264 = vmatprep.subr.bf16.mxu0 0
        %1265 = vmatpush1.bf16.xpose.msra.mxu0 0
        %1266 = vmatprep.subr.bf16.mxu0 0
        %1267 = vmatpush1.bf16.xpose.msra.mxu0 0
        %1268 = vmatprep.subr.bf16.mxu0 0
        %1269 = vmatpush1.bf16.xpose.msra.mxu0 0
        %1270 = vmatprep.subr.bf16.mxu0 0
        %1271 = vmatpush1.bf16.xpose.msra.mxu0 0
        %1272 = vmatprep.subr.bf16.mxu0 0
        %1273 = vmatpush1.bf16.xpose.msra.mxu0 0
        %1274 = vmatprep.subr.bf16.mxu0 0
        %1275 = vmatpush1.bf16.xpose.msra.mxu0 %v1258
        %1276 = vmatprep.subr.bf16.mxu0 0
        %1277 = vmatpush2.bf16.xpose.msra.mxu0 0
        %1278 = vmatprep.subr.bf16.mxu0 0
        %1279 = vmatpush2.bf16.xpose.msra.mxu0 0
        %1280 = vmatprep.subr.bf16.mxu0 0
        %1281 = vmatpush2.bf16.xpose.msra.mxu0 0
        %1282 = vmatprep.subr.bf16.mxu0 0
        %1283 = vmatpush2.bf16.xpose.msra.mxu0 0
        %1284 = vmatprep.subr.bf16.mxu0 0
        %1285 = vmatpush2.bf16.xpose.msra.mxu0 0
        %1286 = vmatprep.subr.bf16.mxu0 0
        %1287 = vmatpush2.bf16.xpose.msra.mxu0 0
        %1288 = vmatprep.subr.bf16.mxu0 0
        %1289 = vmatpush2.bf16.xpose.msra.mxu0 0
        %1290 = vmatprep.subr.bf16.mxu0 0
        %1291 = vmatpush2.bf16.xpose.msra.mxu0 0
        %1292 = vmatprep.mubr.bf16.mxu0 0
        %1293 = vmatmul.mubr.bf16.gmra.mxu0 %v1255
        %v1294 = vpop.f32.mrf.mxu0
        %v1295 = vadd.f32 0.0, %v1294
        %v1296 = vpop.f32.mrf.mxu0
        %v1297 = vpop.f32.mrf.mxu0
        %v1298 = vpop.f32.mrf.mxu0
        %1299 = vdwg.mxu0
        %1300 = vrot.lane.b32.xlu0 %v1027, 120
        %v1301 = vpop.permute.xlu0 %1300
        %1302 = vrot.lane.b32.xlu0 %v1027, 88
        %v1303 = vpop.permute.xlu0 %1302
        %v1305 = vsel %vm1031, %v1301, 0
        %v1308 = vsel %vm1031, %v1303, 0
        %1310 = vmatprep.subr.bf16.mxu0 0
        %1311 = vmatpush1.bf16.xpose.msra.mxu0 0
        %1312 = vmatprep.subr.bf16.mxu0 0
        %1313 = vmatpush1.bf16.xpose.msra.mxu0 0
        %1314 = vmatprep.subr.bf16.mxu0 0
        %1315 = vmatpush1.bf16.xpose.msra.mxu0 0
        %1316 = vmatprep.subr.bf16.mxu0 0
        %1317 = vmatpush1.bf16.xpose.msra.mxu0 0
        %1318 = vmatprep.subr.bf16.mxu0 0
        %1319 = vmatpush1.bf16.xpose.msra.mxu0 0
        %1320 = vmatprep.subr.bf16.mxu0 0
        %1321 = vmatpush1.bf16.xpose.msra.mxu0 0
        %1322 = vmatprep.subr.bf16.mxu0 0
        %1323 = vmatpush1.bf16.xpose.msra.mxu0 0
        %1324 = vmatprep.subr.bf16.mxu0 0
        %1325 = vmatpush1.bf16.xpose.msra.mxu0 %v1308
        %1326 = vmatprep.subr.bf16.mxu0 0
        %1327 = vmatpush2.bf16.xpose.msra.mxu0 0
        %1328 = vmatprep.subr.bf16.mxu0 0
        %1329 = vmatpush2.bf16.xpose.msra.mxu0 0
        %1330 = vmatprep.subr.bf16.mxu0 0
        %1331 = vmatpush2.bf16.xpose.msra.mxu0 0
        %1332 = vmatprep.subr.bf16.mxu0 0
        %1333 = vmatpush2.bf16.xpose.msra.mxu0 0
        %1334 = vmatprep.subr.bf16.mxu0 0
        %1335 = vmatpush2.bf16.xpose.msra.mxu0 0
        %1336 = vmatprep.subr.bf16.mxu0 0
        %1337 = vmatpush2.bf16.xpose.msra.mxu0 0
        %1338 = vmatprep.subr.bf16.mxu0 0
        %1339 = vmatpush2.bf16.xpose.msra.mxu0 0
        %1340 = vmatprep.subr.bf16.mxu0 0
        %1341 = vmatpush2.bf16.xpose.msra.mxu0 0
        %1342 = vmatprep.mubr.bf16.mxu0 0
        %1343 = vmatmul.mubr.bf16.gmra.mxu0 %v1305
        %v1344 = vpop.f32.mrf.mxu0
        %v1345 = vadd.f32 0.0, %v1344
        %v1346 = vpop.f32.mrf.mxu0
        %v1347 = vpop.f32.mrf.mxu0
        %v1348 = vpop.f32.mrf.mxu0
        %1349 = vdwg.mxu0
        %v1350 = vsel %vm1031, %v1295, -inf
        %1351 = vmax.xlane.f32.xlu0 %v1350
        %v1352 = vpop.xlane.xlu0 %1351
        %v1353 = vsel %vm1031, %v1345, -inf
        %1354 = vmax.xlane.f32.xlu0 %v1353
        %v1355 = vpop.xlane.xlu0 %1354
        %v1356 = vsub.f32 %v1295, %v1352
        %v1357 = vsub.f32 %v1345, %v1355
        %v1358 = vmul.f32 %v1356, 1.442695
        %v1359 = vpow.pop %v1358
        %v1360 = vmul.f32 %v1357, 1.442695
        %v1361 = vpow.pop %v1360
        %v1362 = vsel %vm1031, %v1359, 0.0
        %1363 = vadd.xlane.f32.xlu0 %v1362
        %v1364 = vpop.xlane.xlu0 %1363
        %v1365 = vsel %vm1031, %v1361, 0.0
        %1366 = vadd.xlane.f32.xlu0 %v1365
        %v1367 = vpop.xlane.xlu0 %1366
        %v1368 = vrcp.pop %v1364
        %v1369 = vrcp.pop %v1367
        %v1370 = vmul.f32 %v1359, %v1368
        %v1371 = vmul.f32 %v1361, %v1369
        %v1372 = vpack.c.bf16 %v1370, %v1370
        %v1373 = vpack.c.bf16 %v1371, %v1371
        %1374 = vrot.lane.b32.xlu0 %v1026, 56
        %v1375 = vpop.permute.xlu0 %1374
        %v1377 = vsel %vm1031, %v1372, 0
        %v1380 = vsel %vm1156, %v1375, 0
        %1382 = vmatprep.subr.bf16.mxu0 0
        %1383 = vmatpush1.bf16.msra.mxu0 0
        %1384 = vmatprep.subr.bf16.mxu0 0
        %1385 = vmatpush1.bf16.msra.mxu0 0
        %1386 = vmatprep.subr.bf16.mxu0 0
        %1387 = vmatpush1.bf16.msra.mxu0 0
        %1388 = vmatprep.subr.bf16.mxu0 0
        %1389 = vmatpush1.bf16.msra.mxu0 0
        %1390 = vmatprep.subr.bf16.mxu0 0
        %1391 = vmatpush1.bf16.msra.mxu0 0
        %1392 = vmatprep.subr.bf16.mxu0 0
        %1393 = vmatpush1.bf16.msra.mxu0 0
        %1394 = vmatprep.subr.bf16.mxu0 0
        %1395 = vmatpush1.bf16.msra.mxu0 0
        %1396 = vmatprep.subr.bf16.mxu0 0
        %1397 = vmatpush1.bf16.msra.mxu0 %v1380
        %1398 = vmatprep.subr.bf16.mxu0 0
        %1399 = vmatpush2.bf16.msra.mxu0 0
        %1400 = vmatprep.subr.bf16.mxu0 0
        %1401 = vmatpush2.bf16.msra.mxu0 0
        %1402 = vmatprep.subr.bf16.mxu0 0
        %1403 = vmatpush2.bf16.msra.mxu0 0
        %1404 = vmatprep.subr.bf16.mxu0 0
        %1405 = vmatpush2.bf16.msra.mxu0 0
        %1406 = vmatprep.subr.bf16.mxu0 0
        %1407 = vmatpush2.bf16.msra.mxu0 0
        %1408 = vmatprep.subr.bf16.mxu0 0
        %1409 = vmatpush2.bf16.msra.mxu0 0
        %1410 = vmatprep.subr.bf16.mxu0 0
        %1411 = vmatpush2.bf16.msra.mxu0 0
        %1412 = vmatprep.subr.bf16.mxu0 0
        %1413 = vmatpush2.bf16.msra.mxu0 0
        %1414 = vmatprep.mubr.bf16.mxu0 0
        %1415 = vmatmul.mubr.bf16.gmra.mxu0 %v1377
        %v1416 = vpop.f32.mrf.mxu0
        %v1417 = vadd.f32 0.0, %v1416
        %v1418 = vpop.f32.mrf.mxu0
        %v1419 = vpop.f32.mrf.mxu0
        %v1420 = vpop.f32.mrf.mxu0
        %1421 = vdwg.mxu0
        %1422 = vrot.lane.b32.xlu0 %v1027, 56
        %v1423 = vpop.permute.xlu0 %1422
        %v1425 = vsel %vm1031, %v1373, 0
        %v1428 = vsel %vm1156, %v1423, 0
        %1430 = vmatprep.subr.bf16.mxu0 0
        %1431 = vmatpush1.bf16.msra.mxu0 0
        %1432 = vmatprep.subr.bf16.mxu0 0
        %1433 = vmatpush1.bf16.msra.mxu0 0
        %1434 = vmatprep.subr.bf16.mxu0 0
        %1435 = vmatpush1.bf16.msra.mxu0 0
        %1436 = vmatprep.subr.bf16.mxu0 0
        %1437 = vmatpush1.bf16.msra.mxu0 0
        %1438 = vmatprep.subr.bf16.mxu0 0
        %1439 = vmatpush1.bf16.msra.mxu0 0
        %1440 = vmatprep.subr.bf16.mxu0 0
        %1441 = vmatpush1.bf16.msra.mxu0 0
        %1442 = vmatprep.subr.bf16.mxu0 0
        %1443 = vmatpush1.bf16.msra.mxu0 0
        %1444 = vmatprep.subr.bf16.mxu0 0
        %1445 = vmatpush1.bf16.msra.mxu0 %v1428
        %1446 = vmatprep.subr.bf16.mxu0 0
        %1447 = vmatpush2.bf16.msra.mxu0 0
        %1448 = vmatprep.subr.bf16.mxu0 0
        %1449 = vmatpush2.bf16.msra.mxu0 0
        %1450 = vmatprep.subr.bf16.mxu0 0
        %1451 = vmatpush2.bf16.msra.mxu0 0
        %1452 = vmatprep.subr.bf16.mxu0 0
        %1453 = vmatpush2.bf16.msra.mxu0 0
        %1454 = vmatprep.subr.bf16.mxu0 0
        %1455 = vmatpush2.bf16.msra.mxu0 0
        %1456 = vmatprep.subr.bf16.mxu0 0
        %1457 = vmatpush2.bf16.msra.mxu0 0
        %1458 = vmatprep.subr.bf16.mxu0 0
        %1459 = vmatpush2.bf16.msra.mxu0 0
        %1460 = vmatprep.subr.bf16.mxu0 0
        %1461 = vmatpush2.bf16.msra.mxu0 0
        %1462 = vmatprep.mubr.bf16.mxu0 0
        %1463 = vmatmul.mubr.bf16.gmra.mxu0 %v1425
        %v1464 = vpop.f32.mrf.mxu0
        %v1465 = vadd.f32 0.0, %v1464
        %v1466 = vpop.f32.mrf.mxu0
        %v1467 = vpop.f32.mrf.mxu0
        %v1468 = vpop.f32.mrf.mxu0
        %1469 = vdwg.mxu0
        %1472 = vrot.lane.b32.xlu0 %v1417, 8
        %v1473 = vpop.permute.xlu0 %1472
        %1474 = vrot.lane.b32.xlu0 %v1465, 8
        %v1475 = vpop.permute.xlu0 %1474
        %vm1478 = vcmask 130112
        %1479 = vst.msk [vmem:[#allocation3] sm:$0xff] %vm1478, %v1473
        %1480 = vst.msk [vmem:[#allocation3 + $0x8] sm:$0xff] %vm1478, %v1475
        %1481 = vrot.lane.b32.xlu0 %v1026, 112
        %v1482 = vpop.permute.xlu0 %1481
        %1483 = vrot.lane.b32.xlu0 %v1026, 80
        %v1484 = vpop.permute.xlu0 %1483
        %v1486 = vsel %vm1031, %v1482, 0
        %v1489 = vsel %vm1031, %v1484, 0
        %1491 = vmatprep.subr.bf16.mxu0 0
        %1492 = vmatpush1.bf16.xpose.msra.mxu0 0
        %1493 = vmatprep.subr.bf16.mxu0 0
        %1494 = vmatpush1.bf16.xpose.msra.mxu0 0
        %1495 = vmatprep.subr.bf16.mxu0 0
        %1496 = vmatpush1.bf16.xpose.msra.mxu0 0
        %1497 = vmatprep.subr.bf16.mxu0 0
        %1498 = vmatpush1.bf16.xpose.msra.mxu0 0
        %1499 = vmatprep.subr.bf16.mxu0 0
        %1500 = vmatpush1.bf16.xpose.msra.mxu0 0
        %1501 = vmatprep.subr.bf16.mxu0 0
        %1502 = vmatpush1.bf16.xpose.msra.mxu0 0
        %1503 = vmatprep.subr.bf16.mxu0 0
        %1504 = vmatpush1.bf16.xpose.msra.mxu0 0
        %1505 = vmatprep.subr.bf16.mxu0 0
        %1506 = vmatpush1.bf16.xpose.msra.mxu0 %v1489
        %1507 = vmatprep.subr.bf16.mxu0 0
        %1508 = vmatpush2.bf16.xpose.msra.mxu0 0
        %1509 = vmatprep.subr.bf16.mxu0 0
        %1510 = vmatpush2.bf16.xpose.msra.mxu0 0
        %1511 = vmatprep.subr.bf16.mxu0 0
        %1512 = vmatpush2.bf16.xpose.msra.mxu0 0
        %1513 = vmatprep.subr.bf16.mxu0 0
        %1514 = vmatpush2.bf16.xpose.msra.mxu0 0
        %1515 = vmatprep.subr.bf16.mxu0 0
        %1516 = vmatpush2.bf16.xpose.msra.mxu0 0
        %1517 = vmatprep.subr.bf16.mxu0 0
        %1518 = vmatpush2.bf16.xpose.msra.mxu0 0
        %1519 = vmatprep.subr.bf16.mxu0 0
        %1520 = vmatpush2.bf16.xpose.msra.mxu0 0
        %1521 = vmatprep.subr.bf16.mxu0 0
        %1522 = vmatpush2.bf16.xpose.msra.mxu0 0
        %1523 = vmatprep.mubr.bf16.mxu0 0
        %1524 = vmatmul.mubr.bf16.gmra.mxu0 %v1486
        %v1525 = vpop.f32.mrf.mxu0
        %v1526 = vadd.f32 0.0, %v1525
        %v1527 = vpop.f32.mrf.mxu0
        %v1528 = vpop.f32.mrf.mxu0
        %v1529 = vpop.f32.mrf.mxu0
        %1530 = vdwg.mxu0
        %1531 = vrot.lane.b32.xlu0 %v1027, 112
        %v1532 = vpop.permute.xlu0 %1531
        %1533 = vrot.lane.b32.xlu0 %v1027, 80
        %v1534 = vpop.permute.xlu0 %1533
        %v1536 = vsel %vm1031, %v1532, 0
        %v1539 = vsel %vm1031, %v1534, 0
        %1541 = vmatprep.subr.bf16.mxu0 0
        %1542 = vmatpush1.bf16.xpose.msra.mxu0 0
        %1543 = vmatprep.subr.bf16.mxu0 0
        %1544 = vmatpush1.bf16.xpose.msra.mxu0 0
        %1545 = vmatprep.subr.bf16.mxu0 0
        %1546 = vmatpush1.bf16.xpose.msra.mxu0 0
        %1547 = vmatprep.subr.bf16.mxu0 0
        %1548 = vmatpush1.bf16.xpose.msra.mxu0 0
        %1549 = vmatprep.subr.bf16.mxu0 0
        %1550 = vmatpush1.bf16.xpose.msra.mxu0 0
        %1551 = vmatprep.subr.bf16.mxu0 0
        %1552 = vmatpush1.bf16.xpose.msra.mxu0 0
        %1553 = vmatprep.subr.bf16.mxu0 0
        %1554 = vmatpush1.bf16.xpose.msra.mxu0 0
        %1555 = vmatprep.subr.bf16.mxu0 0
        %1556 = vmatpush1.bf16.xpose.msra.mxu0 %v1539
        %1557 = vmatprep.subr.bf16.mxu0 0
        %1558 = vmatpush2.bf16.xpose.msra.mxu0 0
        %1559 = vmatprep.subr.bf16.mxu0 0
        %1560 = vmatpush2.bf16.xpose.msra.mxu0 0
        %1561 = vmatprep.subr.bf16.mxu0 0
        %1562 = vmatpush2.bf16.xpose.msra.mxu0 0
        %1563 = vmatprep.subr.bf16.mxu0 0
        %1564 = vmatpush2.bf16.xpose.msra.mxu0 0
        %1565 = vmatprep.subr.bf16.mxu0 0
        %1566 = vmatpush2.bf16.xpose.msra.mxu0 0
        %1567 = vmatprep.subr.bf16.mxu0 0
        %1568 = vmatpush2.bf16.xpose.msra.mxu0 0
        %1569 = vmatprep.subr.bf16.mxu0 0
        %1570 = vmatpush2.bf16.xpose.msra.mxu0 0
        %1571 = vmatprep.subr.bf16.mxu0 0
        %1572 = vmatpush2.bf16.xpose.msra.mxu0 0
        %1573 = vmatprep.mubr.bf16.mxu0 0
        %1574 = vmatmul.mubr.bf16.gmra.mxu0 %v1536
        %v1575 = vpop.f32.mrf.mxu0
        %v1576 = vadd.f32 0.0, %v1575
        %v1577 = vpop.f32.mrf.mxu0
        %v1578 = vpop.f32.mrf.mxu0
        %v1579 = vpop.f32.mrf.mxu0
        %1580 = vdwg.mxu0
        %v1581 = vsel %vm1031, %v1526, -inf
        %1582 = vmax.xlane.f32.xlu0 %v1581
        %v1583 = vpop.xlane.xlu0 %1582
        %v1584 = vsel %vm1031, %v1576, -inf
        %1585 = vmax.xlane.f32.xlu0 %v1584
        %v1586 = vpop.xlane.xlu0 %1585
        %v1587 = vsub.f32 %v1526, %v1583
        %v1588 = vsub.f32 %v1576, %v1586
        %v1589 = vmul.f32 %v1587, 1.442695
        %v1590 = vpow.pop %v1589
        %v1591 = vmul.f32 %v1588, 1.442695
        %v1592 = vpow.pop %v1591
        %v1593 = vsel %vm1031, %v1590, 0.0
        %1594 = vadd.xlane.f32.xlu0 %v1593
        %v1595 = vpop.xlane.xlu0 %1594
        %v1596 = vsel %vm1031, %v1592, 0.0
        %1597 = vadd.xlane.f32.xlu0 %v1596
        %v1598 = vpop.xlane.xlu0 %1597
        %v1599 = vrcp.pop %v1595
        %v1600 = vrcp.pop %v1598
        %v1601 = vmul.f32 %v1590, %v1599
        %v1602 = vmul.f32 %v1592, %v1600
        %v1603 = vpack.c.bf16 %v1601, %v1601
        %v1604 = vpack.c.bf16 %v1602, %v1602
        %1605 = vrot.lane.b32.xlu0 %v1026, 48
        %v1606 = vpop.permute.xlu0 %1605
        %v1608 = vsel %vm1031, %v1603, 0
        %v1611 = vsel %vm1156, %v1606, 0
        %1613 = vmatprep.subr.bf16.mxu0 0
        %1614 = vmatpush1.bf16.msra.mxu0 0
        %1615 = vmatprep.subr.bf16.mxu0 0
        %1616 = vmatpush1.bf16.msra.mxu0 0
        %1617 = vmatprep.subr.bf16.mxu0 0
        %1618 = vmatpush1.bf16.msra.mxu0 0
        %1619 = vmatprep.subr.bf16.mxu0 0
        %1620 = vmatpush1.bf16.msra.mxu0 0
        %1621 = vmatprep.subr.bf16.mxu0 0
        %1622 = vmatpush1.bf16.msra.mxu0 0
        %1623 = vmatprep.subr.bf16.mxu0 0
        %1624 = vmatpush1.bf16.msra.mxu0 0
        %1625 = vmatprep.subr.bf16.mxu0 0
        %1626 = vmatpush1.bf16.msra.mxu0 0
        %1627 = vmatprep.subr.bf16.mxu0 0
        %1628 = vmatpush1.bf16.msra.mxu0 %v1611
        %1629 = vmatprep.subr.bf16.mxu0 0
        %1630 = vmatpush2.bf16.msra.mxu0 0
        %1631 = vmatprep.subr.bf16.mxu0 0
        %1632 = vmatpush2.bf16.msra.mxu0 0
        %1633 = vmatprep.subr.bf16.mxu0 0
        %1634 = vmatpush2.bf16.msra.mxu0 0
        %1635 = vmatprep.subr.bf16.mxu0 0
        %1636 = vmatpush2.bf16.msra.mxu0 0
        %1637 = vmatprep.subr.bf16.mxu0 0
        %1638 = vmatpush2.bf16.msra.mxu0 0
        %1639 = vmatprep.subr.bf16.mxu0 0
        %1640 = vmatpush2.bf16.msra.mxu0 0
        %1641 = vmatprep.subr.bf16.mxu0 0
        %1642 = vmatpush2.bf16.msra.mxu0 0
        %1643 = vmatprep.subr.bf16.mxu0 0
        %1644 = vmatpush2.bf16.msra.mxu0 0
        %1645 = vmatprep.mubr.bf16.mxu0 0
        %1646 = vmatmul.mubr.bf16.gmra.mxu0 %v1608
        %v1647 = vpop.f32.mrf.mxu0
        %v1648 = vadd.f32 0.0, %v1647
        %v1649 = vpop.f32.mrf.mxu0
        %v1650 = vpop.f32.mrf.mxu0
        %v1651 = vpop.f32.mrf.mxu0
        %1652 = vdwg.mxu0
        %1653 = vrot.lane.b32.xlu0 %v1027, 48
        %v1654 = vpop.permute.xlu0 %1653
        %v1656 = vsel %vm1031, %v1604, 0
        %v1659 = vsel %vm1156, %v1654, 0
        %1661 = vmatprep.subr.bf16.mxu0 0
        %1662 = vmatpush1.bf16.msra.mxu0 0
        %1663 = vmatprep.subr.bf16.mxu0 0
        %1664 = vmatpush1.bf16.msra.mxu0 0
        %1665 = vmatprep.subr.bf16.mxu0 0
        %1666 = vmatpush1.bf16.msra.mxu0 0
        %1667 = vmatprep.subr.bf16.mxu0 0
        %1668 = vmatpush1.bf16.msra.mxu0 0
        %1669 = vmatprep.subr.bf16.mxu0 0
        %1670 = vmatpush1.bf16.msra.mxu0 0
        %1671 = vmatprep.subr.bf16.mxu0 0
        %1672 = vmatpush1.bf16.msra.mxu0 0
        %1673 = vmatprep.subr.bf16.mxu0 0
        %1674 = vmatpush1.bf16.msra.mxu0 0
        %1675 = vmatprep.subr.bf16.mxu0 0
        %1676 = vmatpush1.bf16.msra.mxu0 %v1659
        %1677 = vmatprep.subr.bf16.mxu0 0
        %1678 = vmatpush2.bf16.msra.mxu0 0
        %1679 = vmatprep.subr.bf16.mxu0 0
        %1680 = vmatpush2.bf16.msra.mxu0 0
        %1681 = vmatprep.subr.bf16.mxu0 0
        %1682 = vmatpush2.bf16.msra.mxu0 0
        %1683 = vmatprep.subr.bf16.mxu0 0
        %1684 = vmatpush2.bf16.msra.mxu0 0
        %1685 = vmatprep.subr.bf16.mxu0 0
        %1686 = vmatpush2.bf16.msra.mxu0 0
        %1687 = vmatprep.subr.bf16.mxu0 0
        %1688 = vmatpush2.bf16.msra.mxu0 0
        %1689 = vmatprep.subr.bf16.mxu0 0
        %1690 = vmatpush2.bf16.msra.mxu0 0
        %1691 = vmatprep.subr.bf16.mxu0 0
        %1692 = vmatpush2.bf16.msra.mxu0 0
        %1693 = vmatprep.mubr.bf16.mxu0 0
        %1694 = vmatmul.mubr.bf16.gmra.mxu0 %v1656
        %v1695 = vpop.f32.mrf.mxu0
        %v1696 = vadd.f32 0.0, %v1695
        %v1697 = vpop.f32.mrf.mxu0
        %v1698 = vpop.f32.mrf.mxu0
        %v1699 = vpop.f32.mrf.mxu0
        %1700 = vdwg.mxu0
        %1703 = vrot.lane.b32.xlu0 %v1648, 16
        %v1704 = vpop.permute.xlu0 %1703
        %1705 = vrot.lane.b32.xlu0 %v1696, 16
        %v1706 = vpop.permute.xlu0 %1705
        %vm1709 = vcmask 195712
        %1710 = vst.msk [vmem:[#allocation3] sm:$0xff] %vm1709, %v1704
        %1711 = vst.msk [vmem:[#allocation3 + $0x8] sm:$0xff] %vm1709, %v1706
        %1712 = vrot.lane.b32.xlu0 %v1026, 104
        %v1713 = vpop.permute.xlu0 %1712
        %1714 = vrot.lane.b32.xlu0 %v1026, 72
        %v1715 = vpop.permute.xlu0 %1714
        %v1717 = vsel %vm1031, %v1713, 0
        %v1720 = vsel %vm1031, %v1715, 0
        %1722 = vmatprep.subr.bf16.mxu0 0
        %1723 = vmatpush1.bf16.xpose.msra.mxu0 0
        %1724 = vmatprep.subr.bf16.mxu0 0
        %1725 = vmatpush1.bf16.xpose.msra.mxu0 0
        %1726 = vmatprep.subr.bf16.mxu0 0
        %1727 = vmatpush1.bf16.xpose.msra.mxu0 0
        %1728 = vmatprep.subr.bf16.mxu0 0
        %1729 = vmatpush1.bf16.xpose.msra.mxu0 0
        %1730 = vmatprep.subr.bf16.mxu0 0
        %1731 = vmatpush1.bf16.xpose.msra.mxu0 0
        %1732 = vmatprep.subr.bf16.mxu0 0
        %1733 = vmatpush1.bf16.xpose.msra.mxu0 0
        %1734 = vmatprep.subr.bf16.mxu0 0
        %1735 = vmatpush1.bf16.xpose.msra.mxu0 0
        %1736 = vmatprep.subr.bf16.mxu0 0
        %1737 = vmatpush1.bf16.xpose.msra.mxu0 %v1720
        %1738 = vmatprep.subr.bf16.mxu0 0
        %1739 = vmatpush2.bf16.xpose.msra.mxu0 0
        %1740 = vmatprep.subr.bf16.mxu0 0
        %1741 = vmatpush2.bf16.xpose.msra.mxu0 0
        %1742 = vmatprep.subr.bf16.mxu0 0
        %1743 = vmatpush2.bf16.xpose.msra.mxu0 0
        %1744 = vmatprep.subr.bf16.mxu0 0
        %1745 = vmatpush2.bf16.xpose.msra.mxu0 0
        %1746 = vmatprep.subr.bf16.mxu0 0
        %1747 = vmatpush2.bf16.xpose.msra.mxu0 0
        %1748 = vmatprep.subr.bf16.mxu0 0
        %1749 = vmatpush2.bf16.xpose.msra.mxu0 0
        %1750 = vmatprep.subr.bf16.mxu0 0
        %1751 = vmatpush2.bf16.xpose.msra.mxu0 0
        %1752 = vmatprep.subr.bf16.mxu0 0
        %1753 = vmatpush2.bf16.xpose.msra.mxu0 0
        %1754 = vmatprep.mubr.bf16.mxu0 0
        %1755 = vmatmul.mubr.bf16.gmra.mxu0 %v1717
        %v1756 = vpop.f32.mrf.mxu0
        %v1757 = vadd.f32 0.0, %v1756
        %v1758 = vpop.f32.mrf.mxu0
        %v1759 = vpop.f32.mrf.mxu0
        %v1760 = vpop.f32.mrf.mxu0
        %1761 = vdwg.mxu0
        %1762 = vrot.lane.b32.xlu0 %v1027, 104
        %v1763 = vpop.permute.xlu0 %1762
        %1764 = vrot.lane.b32.xlu0 %v1027, 72
        %v1765 = vpop.permute.xlu0 %1764
        %v1767 = vsel %vm1031, %v1763, 0
        %v1770 = vsel %vm1031, %v1765, 0
        %1772 = vmatprep.subr.bf16.mxu0 0
        %1773 = vmatpush1.bf16.xpose.msra.mxu0 0
        %1774 = vmatprep.subr.bf16.mxu0 0
        %1775 = vmatpush1.bf16.xpose.msra.mxu0 0
        %1776 = vmatprep.subr.bf16.mxu0 0
        %1777 = vmatpush1.bf16.xpose.msra.mxu0 0
        %1778 = vmatprep.subr.bf16.mxu0 0
        %1779 = vmatpush1.bf16.xpose.msra.mxu0 0
        %1780 = vmatprep.subr.bf16.mxu0 0
        %1781 = vmatpush1.bf16.xpose.msra.mxu0 0
        %1782 = vmatprep.subr.bf16.mxu0 0
        %1783 = vmatpush1.bf16.xpose.msra.mxu0 0
        %1784 = vmatprep.subr.bf16.mxu0 0
        %1785 = vmatpush1.bf16.xpose.msra.mxu0 0
        %1786 = vmatprep.subr.bf16.mxu0 0
        %1787 = vmatpush1.bf16.xpose.msra.mxu0 %v1770
        %1788 = vmatprep.subr.bf16.mxu0 0
        %1789 = vmatpush2.bf16.xpose.msra.mxu0 0
        %1790 = vmatprep.subr.bf16.mxu0 0
        %1791 = vmatpush2.bf16.xpose.msra.mxu0 0
        %1792 = vmatprep.subr.bf16.mxu0 0
        %1793 = vmatpush2.bf16.xpose.msra.mxu0 0
        %1794 = vmatprep.subr.bf16.mxu0 0
        %1795 = vmatpush2.bf16.xpose.msra.mxu0 0
        %1796 = vmatprep.subr.bf16.mxu0 0
        %1797 = vmatpush2.bf16.xpose.msra.mxu0 0
        %1798 = vmatprep.subr.bf16.mxu0 0
        %1799 = vmatpush2.bf16.xpose.msra.mxu0 0
        %1800 = vmatprep.subr.bf16.mxu0 0
        %1801 = vmatpush2.bf16.xpose.msra.mxu0 0
        %1802 = vmatprep.subr.bf16.mxu0 0
        %1803 = vmatpush2.bf16.xpose.msra.mxu0 0
        %1804 = vmatprep.mubr.bf16.mxu0 0
        %1805 = vmatmul.mubr.bf16.gmra.mxu0 %v1767
        %v1806 = vpop.f32.mrf.mxu0
        %v1807 = vadd.f32 0.0, %v1806
        %v1808 = vpop.f32.mrf.mxu0
        %v1809 = vpop.f32.mrf.mxu0
        %v1810 = vpop.f32.mrf.mxu0
        %1811 = vdwg.mxu0
        %v1812 = vsel %vm1031, %v1757, -inf
        %1813 = vmax.xlane.f32.xlu0 %v1812
        %v1814 = vpop.xlane.xlu0 %1813
        %v1815 = vsel %vm1031, %v1807, -inf
        %1816 = vmax.xlane.f32.xlu0 %v1815
        %v1817 = vpop.xlane.xlu0 %1816
        %v1818 = vsub.f32 %v1757, %v1814
        %v1819 = vsub.f32 %v1807, %v1817
        %v1820 = vmul.f32 %v1818, 1.442695
        %v1821 = vpow.pop %v1820
        %v1822 = vmul.f32 %v1819, 1.442695
        %v1823 = vpow.pop %v1822
        %v1824 = vsel %vm1031, %v1821, 0.0
        %1825 = vadd.xlane.f32.xlu0 %v1824
        %v1826 = vpop.xlane.xlu0 %1825
        %v1827 = vsel %vm1031, %v1823, 0.0
        %1828 = vadd.xlane.f32.xlu0 %v1827
        %v1829 = vpop.xlane.xlu0 %1828
        %v1830 = vrcp.pop %v1826
        %v1831 = vrcp.pop %v1829
        %v1832 = vmul.f32 %v1821, %v1830
        %v1833 = vmul.f32 %v1823, %v1831
        %v1834 = vpack.c.bf16 %v1832, %v1832
        %v1835 = vpack.c.bf16 %v1833, %v1833
        %1836 = vrot.lane.b32.xlu0 %v1026, 40
        %v1837 = vpop.permute.xlu0 %1836
        %v1839 = vsel %vm1031, %v1834, 0
        %v1842 = vsel %vm1156, %v1837, 0
        %1844 = vmatprep.subr.bf16.mxu0 0
        %1845 = vmatpush1.bf16.msra.mxu0 0
        %1846 = vmatprep.subr.bf16.mxu0 0
        %1847 = vmatpush1.bf16.msra.mxu0 0
        %1848 = vmatprep.subr.bf16.mxu0 0
        %1849 = vmatpush1.bf16.msra.mxu0 0
        %1850 = vmatprep.subr.bf16.mxu0 0
        %1851 = vmatpush1.bf16.msra.mxu0 0
        %1852 = vmatprep.subr.bf16.mxu0 0
        %1853 = vmatpush1.bf16.msra.mxu0 0
        %1854 = vmatprep.subr.bf16.mxu0 0
        %1855 = vmatpush1.bf16.msra.mxu0 0
        %1856 = vmatprep.subr.bf16.mxu0 0
        %1857 = vmatpush1.bf16.msra.mxu0 0
        %1858 = vmatprep.subr.bf16.mxu0 0
        %1859 = vmatpush1.bf16.msra.mxu0 %v1842
        %1860 = vmatprep.subr.bf16.mxu0 0
        %1861 = vmatpush2.bf16.msra.mxu0 0
        %1862 = vmatprep.subr.bf16.mxu0 0
        %1863 = vmatpush2.bf16.msra.mxu0 0
        %1864 = vmatprep.subr.bf16.mxu0 0
        %1865 = vmatpush2.bf16.msra.mxu0 0
        %1866 = vmatprep.subr.bf16.mxu0 0
        %1867 = vmatpush2.bf16.msra.mxu0 0
        %1868 = vmatprep.subr.bf16.mxu0 0
        %1869 = vmatpush2.bf16.msra.mxu0 0
        %1870 = vmatprep.subr.bf16.mxu0 0
        %1871 = vmatpush2.bf16.msra.mxu0 0
        %1872 = vmatprep.subr.bf16.mxu0 0
        %1873 = vmatpush2.bf16.msra.mxu0 0
        %1874 = vmatprep.subr.bf16.mxu0 0
        %1875 = vmatpush2.bf16.msra.mxu0 0
        %1876 = vmatprep.mubr.bf16.mxu0 0
        %1877 = vmatmul.mubr.bf16.gmra.mxu0 %v1839
        %v1878 = vpop.f32.mrf.mxu0
        %v1879 = vadd.f32 0.0, %v1878
        %v1880 = vpop.f32.mrf.mxu0
        %v1881 = vpop.f32.mrf.mxu0
        %v1882 = vpop.f32.mrf.mxu0
        %1883 = vdwg.mxu0
        %1884 = vrot.lane.b32.xlu0 %v1027, 40
        %v1885 = vpop.permute.xlu0 %1884
        %v1887 = vsel %vm1031, %v1835, 0
        %v1890 = vsel %vm1156, %v1885, 0
        %1892 = vmatprep.subr.bf16.mxu0 0
        %1893 = vmatpush1.bf16.msra.mxu0 0
        %1894 = vmatprep.subr.bf16.mxu0 0
        %1895 = vmatpush1.bf16.msra.mxu0 0
        %1896 = vmatprep.subr.bf16.mxu0 0
        %1897 = vmatpush1.bf16.msra.mxu0 0
        %1898 = vmatprep.subr.bf16.mxu0 0
        %1899 = vmatpush1.bf16.msra.mxu0 0
        %1900 = vmatprep.subr.bf16.mxu0 0
        %1901 = vmatpush1.bf16.msra.mxu0 0
        %1902 = vmatprep.subr.bf16.mxu0 0
        %1903 = vmatpush1.bf16.msra.mxu0 0
        %1904 = vmatprep.subr.bf16.mxu0 0
        %1905 = vmatpush1.bf16.msra.mxu0 0
        %1906 = vmatprep.subr.bf16.mxu0 0
        %1907 = vmatpush1.bf16.msra.mxu0 %v1890
        %1908 = vmatprep.subr.bf16.mxu0 0
        %1909 = vmatpush2.bf16.msra.mxu0 0
        %1910 = vmatprep.subr.bf16.mxu0 0
        %1911 = vmatpush2.bf16.msra.mxu0 0
        %1912 = vmatprep.subr.bf16.mxu0 0
        %1913 = vmatpush2.bf16.msra.mxu0 0
        %1914 = vmatprep.subr.bf16.mxu0 0
        %1915 = vmatpush2.bf16.msra.mxu0 0
        %1916 = vmatprep.subr.bf16.mxu0 0
        %1917 = vmatpush2.bf16.msra.mxu0 0
        %1918 = vmatprep.subr.bf16.mxu0 0
        %1919 = vmatpush2.bf16.msra.mxu0 0
        %1920 = vmatprep.subr.bf16.mxu0 0
        %1921 = vmatpush2.bf16.msra.mxu0 0
        %1922 = vmatprep.subr.bf16.mxu0 0
        %1923 = vmatpush2.bf16.msra.mxu0 0
        %1924 = vmatprep.mubr.bf16.mxu0 0
        %1925 = vmatmul.mubr.bf16.gmra.mxu0 %v1887
        %v1926 = vpop.f32.mrf.mxu0
        %v1927 = vadd.f32 0.0, %v1926
        %v1928 = vpop.f32.mrf.mxu0
        %v1929 = vpop.f32.mrf.mxu0
        %v1930 = vpop.f32.mrf.mxu0
        %1931 = vdwg.mxu0
        %1934 = vrot.lane.b32.xlu0 %v1879, 24
        %v1935 = vpop.permute.xlu0 %1934
        %1936 = vrot.lane.b32.xlu0 %v1927, 24
        %v1937 = vpop.permute.xlu0 %1936
        %vm1940 = vcmask 261312
        %1941 = vst.msk [vmem:[#allocation3] sm:$0xff] %vm1940, %v1935
        %1942 = vst.msk [vmem:[#allocation3 + $0x8] sm:$0xff] %vm1940, %v1937
        %v1943 = vld [vmem:[#allocation3] sm:$0xff]
        %v1944 = vld [vmem:[#allocation3 + $0x8] sm:$0xff]
        %v1945 = vpack.c.bf16 %v1944, %v1943
        %v1946 = vld [vmem:[%s829] sm:$0xf]
        %v1947 = vld [vmem:[%s829 + $0x4] sm:$0xf]
        %v1948 = vld [vmem:[%s829 + $0x8] sm:$0xf]
        %v1949 = vld [vmem:[%s829 + $0xc] sm:$0xf]
        %v1950 = vld [vmem:[%s832] sm:$0x1]
        %v1952 = vlaneseq
        %v1953 = vshrl.u32 %v1952, 7
        %v1954 = vsub.s32 0, %v1953
        %v1955 = vrot.slane %v1950, %v1954
        %v1961 = vunpack.c.l.b16 %v1946
        %v1962 = vunpack.c.l.b16 %v1947
        %v1963 = vunpack.c.l.b16 %v1948
        %v1964 = vunpack.c.l.b16 %v1949
        %v1965 = vpack.c.b16 %v1962, %v1961
        %v1966 = vpack.c.b16 %v1964, %v1963
        %v1970 = vsel %vm914, %v1945, 0
        %1972 = vmatprep.subr.bf16.mxu0 0
        %1973 = vmatpush1.bf16.msra.mxu0 0
        %1974 = vmatprep.subr.bf16.mxu0 0
        %1975 = vmatpush1.bf16.msra.mxu0 0
        %1976 = vmatprep.subr.bf16.mxu0 0
        %1977 = vmatpush1.bf16.msra.mxu0 0
        %1978 = vmatprep.subr.bf16.mxu0 0
        %1979 = vmatpush1.bf16.msra.mxu0 0
        %1980 = vmatprep.subr.bf16.mxu0 0
        %1981 = vmatpush1.bf16.msra.mxu0 0
        %1982 = vmatprep.subr.bf16.mxu0 0
        %1983 = vmatpush1.bf16.msra.mxu0 0
        %1984 = vmatprep.subr.bf16.mxu0 0
        %1985 = vmatpush1.bf16.msra.mxu0 %v1966
        %1986 = vmatprep.subr.bf16.mxu0 0
        %1987 = vmatpush1.bf16.msra.mxu0 %v1965
        %1988 = vmatprep.subr.bf16.mxu0 0
        %1989 = vmatpush2.bf16.msra.mxu0 0
        %1990 = vmatprep.subr.bf16.mxu0 0
        %1991 = vmatpush2.bf16.msra.mxu0 0
        %1992 = vmatprep.subr.bf16.mxu0 0
        %1993 = vmatpush2.bf16.msra.mxu0 0
        %1994 = vmatprep.subr.bf16.mxu0 0
        %1995 = vmatpush2.bf16.msra.mxu0 0
        %1996 = vmatprep.subr.bf16.mxu0 0
        %1997 = vmatpush2.bf16.msra.mxu0 0
        %1998 = vmatprep.subr.bf16.mxu0 0
        %1999 = vmatpush2.bf16.msra.mxu0 0
        %2000 = vmatprep.subr.bf16.mxu0 0
        %2001 = vmatpush2.bf16.msra.mxu0 0
        %2002 = vmatprep.subr.bf16.mxu0 0
        %2003 = vmatpush2.bf16.msra.mxu0 0
        %2004 = vmatprep.mubr.bf16.mxu0 0
        %2005 = vmatmul.mubr.bf16.gmra.mxu0 %v1970
        %v2006 = vpop.f32.mrf.mxu0
        %v2007 = vadd.f32 %v1955, %v2006
        %v2008 = vpop.f32.mrf.mxu0
        %v2009 = vpop.f32.mrf.mxu0
        %v2010 = vadd.f32 %v1955, %v2009
        %v2011 = vpop.f32.mrf.mxu0
        %2012 = vdwg.mxu0
        %v2013 = vadd.f32 %v910, %v2007
        %v2014 = vadd.f32 %v911, %v2010
        %v2015 = vld [vmem:[%s835] sm:$0x1]
        %v2016 = vld [vmem:[%s838] sm:$0x1]
        %v2017 = vsel %vm914, %v2013, 0.0
        %2018 = vadd.xlane.f32.xlu0 %v2017
        %v2019 = vpop.xlane.xlu0 %2018
        %v2020 = vsel %vm914, %v2014, 0.0
        %2021 = vadd.xlane.f32.xlu0 %v2020
        %v2022 = vpop.xlane.xlu0 %2021
        %v2023 = vmul.f32 %v2019, %v921
        %v2024 = vmul.f32 %v2022, %v921
        %v2025 = vsub.f32 %v2013, %v2023
        %v2026 = vsub.f32 %v2014, %v2024
        %v2027 = vmul.f32 %v2025, %v2025
        %v2028 = vmul.f32 %v2026, %v2026
        %v2029 = vsel %vm914, %v2027, 0.0
        %2030 = vadd.xlane.f32.xlu0 %v2029
        %v2031 = vpop.xlane.xlu0 %2030
        %v2032 = vsel %vm914, %v2028, 0.0
        %2033 = vadd.xlane.f32.xlu0 %v2032
        %v2034 = vpop.xlane.xlu0 %2033
        %v2035 = vmul.f32 %v2031, %v921
        %v2036 = vmul.f32 %v2034, %v921
        %v2037 = vadd.f32 %v2035, 1e-06
        %v2038 = vadd.f32 %v2036, 1e-06
        %v2039 = vrsqrt.pop %v2037
        %v2040 = vrsqrt.pop %v2038
        %v2041 = vmul.f32 %v2025, %v2039
        %v2042 = vmul.f32 %v2026, %v2040
        %v2044 = vlaneseq
        %v2045 = vshrl.u32 %v2044, 7
        %v2046 = vsub.s32 0, %v2045
        %v2047 = vrot.slane %v2015, %v2046
        %v2049 = vmul.f32 %v2041, %v2047
        %v2050 = vmul.f32 %v2042, %v2047
        %v2052 = vlaneseq
        %v2053 = vshrl.u32 %v2052, 7
        %v2054 = vsub.s32 0, %v2053
        %v2055 = vrot.slane %v2016, %v2054
        %v2057 = vadd.f32 %v2049, %v2055
        %v2058 = vadd.f32 %v2050, %v2055
        %v2059 = vpack.c.bf16 %v2058, %v2057
        %v2060 = vld [vmem:[%s843] sm:$0xf]
        %v2061 = vld [vmem:[%s843 + $0x4] sm:$0xf]
        %v2062 = vld [vmem:[%s843 + $0x8] sm:$0xf]
        %v2063 = vld [vmem:[%s843 + $0xc] sm:$0xf]
        %v2064 = vld [vmem:[%s846] sm:$0x1]
        %v2066 = vlaneseq
        %v2067 = vshrl.u32 %v2066, 7
        %v2068 = vsub.s32 0, %v2067
        %v2069 = vrot.slane %v2064, %v2068
        %v2075 = vunpack.c.l.b16 %v2060
        %v2076 = vunpack.c.l.b16 %v2061
        %v2077 = vunpack.c.l.b16 %v2062
        %v2078 = vunpack.c.l.b16 %v2063
        %v2079 = vpack.c.b16 %v2076, %v2075
        %v2080 = vpack.c.b16 %v2078, %v2077
        %v2084 = vsel %vm914, %v2059, 0
        %2086 = vmatprep.subr.bf16.mxu0 0
        %2087 = vmatpush1.bf16.msra.mxu0 0
        %2088 = vmatprep.subr.bf16.mxu0 0
        %2089 = vmatpush1.bf16.msra.mxu0 0
        %2090 = vmatprep.subr.bf16.mxu0 0
        %2091 = vmatpush1.bf16.msra.mxu0 0
        %2092 = vmatprep.subr.bf16.mxu0 0
        %2093 = vmatpush1.bf16.msra.mxu0 0
        %2094 = vmatprep.subr.bf16.mxu0 0
        %2095 = vmatpush1.bf16.msra.mxu0 0
        %2096 = vmatprep.subr.bf16.mxu0 0
        %2097 = vmatpush1.bf16.msra.mxu0 0
        %2098 = vmatprep.subr.bf16.mxu0 0
        %2099 = vmatpush1.bf16.msra.mxu0 %v2080
        %2100 = vmatprep.subr.bf16.mxu0 0
        %2101 = vmatpush1.bf16.msra.mxu0 %v2079
        %2102 = vmatprep.subr.bf16.mxu0 0
        %2103 = vmatpush2.bf16.msra.mxu0 0
        %2104 = vmatprep.subr.bf16.mxu0 0
        %2105 = vmatpush2.bf16.msra.mxu0 0
        %2106 = vmatprep.subr.bf16.mxu0 0
        %2107 = vmatpush2.bf16.msra.mxu0 0
        %2108 = vmatprep.subr.bf16.mxu0 0
        %2109 = vmatpush2.bf16.msra.mxu0 0
        %2110 = vmatprep.subr.bf16.mxu0 0
        %2111 = vmatpush2.bf16.msra.mxu0 0
        %2112 = vmatprep.subr.bf16.mxu0 0
        %2113 = vmatpush2.bf16.msra.mxu0 0
        %2114 = vmatprep.subr.bf16.mxu0 0
        %2115 = vmatpush2.bf16.msra.mxu0 0
        %2116 = vmatprep.subr.bf16.mxu0 0
        %2117 = vmatpush2.bf16.msra.mxu0 0
        %2118 = vmatprep.mubr.bf16.mxu0 0
        %2119 = vmatmul.mubr.bf16.gmra.mxu0 %v2084
        %v2120 = vpop.f32.mrf.mxu0
        %v2121 = vadd.f32 %v2069, %v2120
        %v2122 = vpop.f32.mrf.mxu0
        %v2123 = vpop.f32.mrf.mxu0
        %v2124 = vadd.f32 %v2069, %v2123
        %v2125 = vpop.f32.mrf.mxu0
        %2126 = vdwg.mxu0
        %v2127 = vmul.f32 %v2121, 0.5
        %v2128 = vmul.f32 %v2124, 0.5
        %v2129 = vmul.f32 %v2121, 0.044715
        %v2130 = vmul.f32 %v2124, 0.044715
        %v2131 = vmul.f32 %v2129, %v2121
        %v2132 = vmul.f32 %v2130, %v2124
        %v2133 = vmul.f32 %v2131, %v2121
        %v2134 = vmul.f32 %v2132, %v2124
        %v2135 = vadd.f32 %v2121, %v2133
        %v2136 = vadd.f32 %v2124, %v2134
        %v2137 = vmul.f32 %v2135, 0.7978846
        %v2138 = vmul.f32 %v2136, 0.7978846
        %v2139 = vtanh.pop %v2137
        %v2140 = vtanh.pop %v2138
        %v2141 = vadd.f32 %v2139, 1.0
        %v2142 = vadd.f32 %v2140, 1.0
        %v2143 = vmul.f32 %v2127, %v2141
        %v2144 = vmul.f32 %v2128, %v2142
        %v2145 = vpack.c.bf16 %v2144, %v2143
        %v2146 = vld [vmem:[%s851] sm:$0xf]
        %v2147 = vld [vmem:[%s851 + $0x4] sm:$0xf]
        %v2148 = vld [vmem:[%s851 + $0x8] sm:$0xf]
        %v2149 = vld [vmem:[%s851 + $0xc] sm:$0xf]
        %v2150 = vld [vmem:[%s851 + $0x10] sm:$0xf]
        %v2151 = vld [vmem:[%s851 + $0x14] sm:$0xf]
        %v2152 = vld [vmem:[%s851 + $0x18] sm:$0xf]
        %v2153 = vld [vmem:[%s851 + $0x1c] sm:$0xf]
        %v2154 = vld [vmem:[%s851 + $0x20] sm:$0xf]
        %v2155 = vld [vmem:[%s851 + $0x24] sm:$0xf]
        %v2156 = vld [vmem:[%s851 + $0x28] sm:$0xf]
        %v2157 = vld [vmem:[%s851 + $0x2c] sm:$0xf]
        %v2158 = vld [vmem:[%s851 + $0x30] sm:$0xf]
        %v2159 = vld [vmem:[%s851 + $0x34] sm:$0xf]
        %v2160 = vld [vmem:[%s851 + $0x38] sm:$0xf]
        %v2161 = vld [vmem:[%s851 + $0x3c] sm:$0xf]
        %v2162 = vld [vmem:[%s854] sm:$0x1]
        %v2164 = vlaneseq
        %v2165 = vshrl.u32 %v2164, 7
        %v2166 = vsub.s32 0, %v2165
        %v2167 = vrot.slane %v2162, %v2166
        %v2185 = vunpack.c.l.b16 %v2146
        %v2186 = vunpack.c.l.b16 %v2147
        %v2187 = vunpack.c.l.b16 %v2148
        %v2188 = vunpack.c.l.b16 %v2149
        %v2189 = vunpack.c.l.b16 %v2150
        %v2190 = vunpack.c.l.b16 %v2151
        %v2191 = vunpack.c.l.b16 %v2152
        %v2192 = vunpack.c.l.b16 %v2153
        %v2193 = vunpack.c.l.b16 %v2154
        %v2194 = vunpack.c.l.b16 %v2155
        %v2195 = vunpack.c.l.b16 %v2156
        %v2196 = vunpack.c.l.b16 %v2157
        %v2197 = vunpack.c.l.b16 %v2158
        %v2198 = vunpack.c.l.b16 %v2159
        %v2199 = vunpack.c.l.b16 %v2160
        %v2200 = vunpack.c.l.b16 %v2161
        %v2201 = vpack.c.b16 %v2186, %v2185
        %v2202 = vpack.c.b16 %v2188, %v2187
        %v2203 = vpack.c.b16 %v2190, %v2189
        %v2204 = vpack.c.b16 %v2192, %v2191
        %v2205 = vpack.c.b16 %v2194, %v2193
        %v2206 = vpack.c.b16 %v2196, %v2195
        %v2207 = vpack.c.b16 %v2198, %v2197
        %v2208 = vpack.c.b16 %v2200, %v2199
        %2217 = vmatprep.subr.bf16.mxu0 0
        %2218 = vmatpush1.bf16.msra.mxu0 %v2208
        %2219 = vmatprep.subr.bf16.mxu0 0
        %2220 = vmatpush1.bf16.msra.mxu0 %v2207
        %2221 = vmatprep.subr.bf16.mxu0 0
        %2222 = vmatpush1.bf16.msra.mxu0 %v2206
        %2223 = vmatprep.subr.bf16.mxu0 0
        %2224 = vmatpush1.bf16.msra.mxu0 %v2205
        %2225 = vmatprep.subr.bf16.mxu0 0
        %2226 = vmatpush1.bf16.msra.mxu0 %v2204
        %2227 = vmatprep.subr.bf16.mxu0 0
        %2228 = vmatpush1.bf16.msra.mxu0 %v2203
        %2229 = vmatprep.subr.bf16.mxu0 0
        %2230 = vmatpush1.bf16.msra.mxu0 %v2202
        %2231 = vmatprep.subr.bf16.mxu0 0
        %2232 = vmatpush1.bf16.msra.mxu0 %v2201
        %2233 = vmatprep.subr.bf16.mxu0 0
        %2234 = vmatpush2.bf16.msra.mxu0 0
        %2235 = vmatprep.subr.bf16.mxu0 0
        %2236 = vmatpush2.bf16.msra.mxu0 0
        %2237 = vmatprep.subr.bf16.mxu0 0
        %2238 = vmatpush2.bf16.msra.mxu0 0
        %2239 = vmatprep.subr.bf16.mxu0 0
        %2240 = vmatpush2.bf16.msra.mxu0 0
        %2241 = vmatprep.subr.bf16.mxu0 0
        %2242 = vmatpush2.bf16.msra.mxu0 0
        %2243 = vmatprep.subr.bf16.mxu0 0
        %2244 = vmatpush2.bf16.msra.mxu0 0
        %2245 = vmatprep.subr.bf16.mxu0 0
        %2246 = vmatpush2.bf16.msra.mxu0 0
        %2247 = vmatprep.subr.bf16.mxu0 0
        %2248 = vmatpush2.bf16.msra.mxu0 0
        %2249 = vmatprep.mubr.bf16.mxu0 0
        %2250 = vmatmul.mubr.bf16.gmra.mxu0 %v2145
        %v2251 = vpop.f32.mrf.mxu0
        %v2252 = vadd.f32 %v2167, %v2251
        %v2253 = vpop.f32.mrf.mxu0
        %v2254 = vpop.f32.mrf.mxu0
        %v2255 = vadd.f32 %v2167, %v2254
        %v2256 = vpop.f32.mrf.mxu0
        %2257 = vdwg.mxu0
        %v2258 = vadd.f32 %v2013, %v2252
        %v2259 = vadd.f32 %v2014, %v2255
        %2260 = vst.msk [vmem:[#allocation2] sm:$0xff] %vm914, %v2258
        %2261 = vst.msk [vmem:[#allocation2 + $0x8] sm:$0xff] %vm914, %v2259
        %p2262 = scmp.eq.s32.totalorder %s37, 3
        // Predicated region
        $region105: #{tpu_custom_call.1} parent=99 // pred_check
          %p2263 = pneg %p2262
        $region106: #{tpu_custom_call.1} parent=99 // pred_check_branch
          %2265 = sbr.rel (%p2263) target = $region108
        $region107: #{tpu_custom_call.1} parent=99 // pred_region
          %v2266 = vld [vmem:[%s17] sm:$0x1]
          %v2267 = vld [vmem:[%s18] sm:$0x1]
          %v2270 = vrot.slane %v2259, 7
          %vm2271 = vcmask 1041409
          %v2272 = vsel %vm2271, %v2270, %v2258
          %vm2274 = vcmask 254976
          %v2275 = vsel %vm2274, %v2272, 0.0
          %2276 = vadd.xlane.f32.xlu0 %v2275
          %v2277 = vpop.xlane.xlu0 %2276
          %v2278 = vmul.f32 %v2277, %v921
          %v2280 = vrot.slane %v2278, 1
          %v2283 = vsub.f32 %v2258, %v2278
          %v2284 = vsub.f32 %v2259, %v2280
          %v2285 = vmul.f32 %v2283, %v2283
          %v2286 = vmul.f32 %v2284, %v2284
          %v2289 = vrot.slane %v2286, 7
          %v2290 = vsel %vm2271, %v2289, %v2285
          %v2292 = vsel %vm2274, %v2290, 0.0
          %2293 = vadd.xlane.f32.xlu0 %v2292
          %v2294 = vpop.xlane.xlu0 %2293
          %v2295 = vmul.f32 %v2294, %v921
          %v2296 = vadd.f32 %v2295, 1e-06
          %v2297 = vrsqrt.pop %v2296
          %v2299 = vrot.slane %v2297, 1
          %v2302 = vmul.f32 %v2283, %v2297
          %v2303 = vmul.f32 %v2284, %v2299
          %v2305 = vlaneseq
          %v2306 = vshrl.u32 %v2305, 7
          %v2307 = vsub.s32 0, %v2306
          %v2308 = vrot.slane %v2266, %v2307
          %v2310 = vmul.f32 %v2302, %v2308
          %v2311 = vmul.f32 %v2303, %v2308
          %v2313 = vlaneseq
          %v2314 = vshrl.u32 %v2313, 7
          %v2315 = vsub.s32 0, %v2314
          %v2316 = vrot.slane %v2267, %v2315
          %v2318 = vadd.f32 %v2310, %v2316
          %v2319 = vadd.f32 %v2311, %v2316
          %v2320 = vpack.c.bf16 %v2318, %v2318
          %v2321 = vpack.c.bf16 %v2319, %v2319
          %v2322 = vld [vmem:[%s19] sm:$0xf]
          %v2323 = vld [vmem:[%s19 + $0x4] sm:$0xf]
          %v2324 = vld [vmem:[%s19 + $0x8] sm:$0xf]
          %v2325 = vld [vmem:[%s19 + $0xc] sm:$0xf]
          %v2328 = vunpack.c.l.b16 %v2320
          %v2329 = vunpack.c.l.b16 %v2321
          %v2330 = vrot.slane %v2329, 7
          %v2331 = vsel %vm2271, %v2330, %v2328
          %v2332 = vpack.c.b16 %v2331, %v2331
          %v2337 = vunpack.c.l.b16 %v2322
          %v2338 = vunpack.c.l.b16 %v2323
          %v2339 = vunpack.c.l.b16 %v2324
          %v2340 = vunpack.c.l.b16 %v2325
          %v2341 = vpack.c.b16 %v2338, %v2337
          %v2342 = vpack.c.b16 %v2340, %v2339
          %v2346 = vsel %vm914, %v2332, 0
          %2348 = vmatprep.subr.bf16.mxu0 0
          %2349 = vmatpush1.bf16.msra.mxu0 0
          %2350 = vmatprep.subr.bf16.mxu0 0
          %2351 = vmatpush1.bf16.msra.mxu0 0
          %2352 = vmatprep.subr.bf16.mxu0 0
          %2353 = vmatpush1.bf16.msra.mxu0 0
          %2354 = vmatprep.subr.bf16.mxu0 0
          %2355 = vmatpush1.bf16.msra.mxu0 0
          %2356 = vmatprep.subr.bf16.mxu0 0
          %2357 = vmatpush1.bf16.msra.mxu0 0
          %2358 = vmatprep.subr.bf16.mxu0 0
          %2359 = vmatpush1.bf16.msra.mxu0 0
          %2360 = vmatprep.subr.bf16.mxu0 0
          %2361 = vmatpush1.bf16.msra.mxu0 %v2342
          %2362 = vmatprep.subr.bf16.mxu0 0
          %2363 = vmatpush1.bf16.msra.mxu0 %v2341
          %2364 = vmatprep.subr.bf16.mxu0 0
          %2365 = vmatpush2.bf16.msra.mxu0 0
          %2366 = vmatprep.subr.bf16.mxu0 0
          %2367 = vmatpush2.bf16.msra.mxu0 0
          %2368 = vmatprep.subr.bf16.mxu0 0
          %2369 = vmatpush2.bf16.msra.mxu0 0
          %2370 = vmatprep.subr.bf16.mxu0 0
          %2371 = vmatpush2.bf16.msra.mxu0 0
          %2372 = vmatprep.subr.bf16.mxu0 0
          %2373 = vmatpush2.bf16.msra.mxu0 0
          %2374 = vmatprep.subr.bf16.mxu0 0
          %2375 = vmatpush2.bf16.msra.mxu0 0
          %2376 = vmatprep.subr.bf16.mxu0 0
          %2377 = vmatpush2.bf16.msra.mxu0 0
          %2378 = vmatprep.subr.bf16.mxu0 0
          %2379 = vmatpush2.bf16.msra.mxu0 0
          %2380 = vmatprep.mubr.bf16.mxu0 0
          %2381 = vmatmul.mubr.bf16.gmra.mxu0 %v2346
          %v2382 = vpop.f32.mrf.mxu0
          %v2383 = vadd.f32 0.0, %v2382
          %v2384 = vpop.f32.mrf.mxu0
          %v2385 = vpop.f32.mrf.mxu0
          %v2386 = vpop.f32.mrf.mxu0
          %2387 = vdwg.mxu0
          %v2388 = vmul.f32 %v2383, %v2383
          %v2389 = vsel %vm2274, %v2388, 0.0
          %2390 = vadd.xlane.f32.xlu0 %v2389
          %v2391 = vpop.xlane.xlu0 %2390
          %v2392 = vmax.f32 %v2391, 1e-24
          %v2393 = vrsqrt.pop %v2392
          %v2394 = vmul.f32 %v2383, %v2393
          %2395 = vst.msk [vmem:[#allocation6] sm:$0x3] %vm2274, %v2394
        $region108: #{tpu_custom_call.1} parent=99 // pred_fallthru
          _
        // Predicated region
        $region109: #{tpu_custom_call.1} parent=99 // pred_check
          %p2396 = pneg %p557
        $region110: #{tpu_custom_call.1} parent=99 // pred_check_branch
          %2398 = sbr.rel (%p2396) target = $region112
        $region111: #{tpu_custom_call.1} parent=99 // pred_region
          %s2400 = ssub.s32 32, 32
          %2401 = vsyncadd [#allocation7], %s2400
          %s2402 = smul.addr %s36, 32
          %s2403 = scalar_lea.hbm %s20, %s2402
          %s2405 = sshll.u32 [#allocation6], 4
          %s2406 = int_to_ptr.vmem [resolvable:$true] %s2405
          %2408 = dma.vmem_to_hbm [thread:$0]  %s2406, 32, %s2403, [#allocation7]
        $region112: #{tpu_custom_call.1} parent=99 // pred_fallthru
          _
        // Predicated region
        $region113: #{tpu_custom_call.1} parent=99 // pred_check
          %p2409 = pneg %p557
        $region114: #{tpu_custom_call.1} parent=99 // pred_check_branch
          %2411 = sbr.rel (%p2409) target = $region116
        $region115: #{tpu_custom_call.1} parent=99 // pred_region
          %2412 = dma.done [#allocation7], 32
        $region116: #{tpu_custom_call.1} parent=99 // pred_fallthru
          _
      $region100: #{tpu_custom_call.1} parent=5 // pred_fallthru
        _
      %p2413 = scmp.le.s32.totalorder 2, %s27
      // Predicated region
      $region117: #{tpu_custom_call.1} parent=5 // pred_check
        %p2414 = pneg %p2413
      $region118: #{tpu_custom_call.1} parent=5 // pred_check_branch
        %2416 = sbr.rel (%p2414) target = $region120
      $region119: #{tpu_custom_call.1} parent=5 // pred_region
        %s2417 = ssub.s32 %s27, 2
      $region120: #{tpu_custom_call.1} parent=5 // pred_fallthru
        _
    $region6: #{tpu_custom_call.1} parent=1 // loop_footer
      %s31 = sadd.s32 1, %s27
    $region7: #{tpu_custom_call.1} parent=1 // loop_footer_branch
      %26 = sbr.rel target = $region3
    $region8: #{tpu_custom_call.1} parent=1 // loop_exit
      _
    %2418 = vsyncpa [#allocation7], 1
    %s2419 = scalar_lea.sflag [#allocation7], 1
    %2420 = vsyncpa %s2419, 1

</llo_original>
